<compile_context>
chip_gen: v7x
topology: tpu7x:2x2x1
jax: 0.10.0
libtpu: 0.0.40
codegen_flags: <defaults>
</compile_context>

<pallas_src>
import functools
import math

import jax
import jax.numpy as jnp
from jax.experimental import pallas as pl
from jax.experimental.pallas import tpu as pltpu

LEAKY_SLOPE = 0.2
IN_EPS = 1e-5      # nn.InstanceNorm2d default eps
_PAD_W = 16        # interior column offset in the padded scratch (bf16 sublane aligned)


# --------------------------------------------------------------------------
# Fused Pallas kernel: one sample per grid step, whole image resident in VMEM
# --------------------------------------------------------------------------
def _res_block_kernel(x_ref, w1_ref, cb1_ref, g1_ref, b1_ref,
                      w2_ref, cb2_ref, g2_ref, b2_ref,
                      o_ref, pad_ref, patch_ref, *, H, W, C):
    # x_ref    : (1, H, W, C)          f32  input image (NHWC)
    # w*_ref   : (9*C, C)              bf16 main conv weights, row = (kh*3+kw)*C + cin
    # cb*_ref  : (H*W, C)              f32  precomputed coord-channel conv + bias
    # g*/b*    : (1, C)                f32  InstanceNorm affine params
    # o_ref    : (1, H, W, C)          f32  output
    # pad_ref  : (H+2, W+2*_PAD_W, C)  bf16 padded image scratch (interior @ rows 1.., cols _PAD_W..)
    # patch_ref: (H, W, 9*C)           bf16 im2col patch scratch
    M = H * W
    inv_m = 1.0 / M

    # Zero only the border strips the 3x3 taps read (rows 0 / H+1 over cols
    # [_PAD_W-1, _PAD_W+W+1), plus the two single columns _PAD_W-1 and _PAD_W+W).
    # The interior is fully rewritten before every conv, so this is all that is needed.
    zrow = jnp.zeros((1, W + 2, C), jnp.bfloat16)
    zcol = jnp.zeros((H, 1, C), jnp.bfloat16)
    pad_ref[pl.ds(0, 1), pl.ds(_PAD_W - 1, W + 2), :] = zrow
    pad_ref[pl.ds(H + 1, 1), pl.ds(_PAD_W - 1, W + 2), :] = zrow
    pad_ref[pl.ds(1, H), pl.ds(_PAD_W - 1, 1), :] = zcol
    pad_ref[pl.ds(1, H), pl.ds(_PAD_W + W, 1), :] = zcol

    def conv3x3(w_ref, cb_ref):
        # im2col: 9 shifted copies of the padded image -> (H, W, 9*C) bf16 patch,
        # then ONE K = 9*C GEMM on the MXU (f32 accumulation), starting from the
        # precomputed coord-channel bias.
        for kh in range(3):
            for kw in range(3):
                tap = kh * 3 + kw
                patch_ref[:, :, tap * C:(tap + 1) * C] = (
                    pad_ref[pl.ds(kh, H), pl.ds(_PAD_W - 1 + kw, W), :])
        patch = patch_ref[...].reshape(M, 9 * C)
        return cb_ref[...] + jnp.dot(patch, w_ref[...],
                                     preferred_element_type=jnp.float32)

    def instance_norm(y, g_ref, b_ref):
        # Single pass over y: sum and sum-of-squares (biased variance, torch behaviour).
        s1 = jnp.sum(y, axis=0, keepdims=True)                 # (1, C)
        s2 = jnp.sum(y * y, axis=0, keepdims=True)             # (1, C)
        mean = s1 * inv_m
        var = s2 * inv_m - mean * mean
        return (y - mean) * jax.lax.rsqrt(var + IN_EPS) * g_ref[...] + b_ref[...]

    x = x_ref[0]                                               # (H, W, C) f32

    # ---- conv1 -> IN1 -> LeakyReLU ----
    pad_ref[pl.ds(1, H), pl.ds(_PAD_W, W), :] = x.astype(jnp.bfloat16)
    y = conv3x3(w1_ref, cb1_ref)                               # (H*W, C) f32
    y = instance_norm(y, g1_ref, b1_ref)
    y = jnp.maximum(y, LEAKY_SLOPE * y)

    # ---- conv2 -> IN2 -> +identity ----
    pad_ref[pl.ds(1, H), pl.ds(_PAD_W, W), :] = y.reshape(H, W, C).astype(jnp.bfloat16)
    y = conv3x3(w2_ref, cb2_ref)
    y = instance_norm(y, g2_ref, b2_ref)
    o_ref[0] = (y.reshape(H, W, C) + x).astype(o_ref.dtype)


def residual_block_pallas(x_nhwc, params):
    N, H, W, C = x_nhwc.shape
    w1 = params["conv1"]["w"].reshape(9 * C, C)        # bf16 (3,3,Cin,Cout) -> (9*Cin, Cout)
    w2 = params["conv2"]["w"].reshape(9 * C, C)
    cb1 = _coord_bias(params["conv1"], H, W)            # (H*W, C) f32
    cb2 = _coord_bias(params["conv2"], H, W)
    kernel = functools.partial(_res_block_kernel, H=H, W=W, C=C)

    img_spec = pl.BlockSpec((1, H, W, C), lambda n: (n, 0, 0, 0))
    w_spec = pl.BlockSpec((9 * C, C), lambda n: (0, 0))
    cb_spec = pl.BlockSpec((H * W, C), lambda n: (0, 0))
    vec_spec = pl.BlockSpec((1, C), lambda n: (0, 0))

    # TODO(synk): before scaling H/W (v7x has only 64 MiB VMEM): single-buffer the
    # constant operands (pipeline_mode=pl.Buffered(1)), set vmem_limit_bytes explicitly,
    # and add a spatially tiled grid axis with a 1-row halo through the padded scratch.
    return pl.pallas_call(
        kernel,
        out_shape=jax.ShapeDtypeStruct((N, H, W, C), jnp.float32),
        grid_spec=pltpu.PrefetchScalarGridSpec(
            num_scalar_prefetch=0,
            grid=(N,),
            in_specs=[img_spec, w_spec, cb_spec, vec_spec, vec_spec,
                      w_spec, cb_spec, vec_spec, vec_spec],
            out_specs=img_spec,
            scratch_shapes=[
                pltpu.VMEM((H + 2, W + 2 * _PAD_W, C), jnp.bfloat16),   # padded image
                pltpu.VMEM((H, W, 9 * C), jnp.bfloat16),                # im2col patch
            ]),
        compiler_params=pltpu.CompilerParams(
            dimension_semantics=("parallel",)),
    )(x_nhwc,
      w1, cb1, params["in1"]["g"], params["in1"]["b"],
      w2, cb2, params["in2"]["g"], params["in2"]["b"])


# --------------------------------------------------------------------------
# Plain-JAX glue: constant coordinate channels folded into a per-pixel bias
# --------------------------------------------------------------------------
def _add_coords_hw(H, W, dtype=jnp.float32):
    hh = (jnp.arange(H, dtype=dtype) / (H - 1)) * 2.0 - 1.0
    ww = (jnp.arange(W, dtype=dtype) / (W - 1)) * 2.0 - 1.0
    xx = jnp.broadcast_to(hh[:, None], (H, W))      # varies along H
    yy = jnp.broadcast_to(ww[None, :], (H, W))      # varies along W
    rr = jnp.sqrt((xx - 0.5) ** 2 + (yy - 0.5) ** 2)
    return jnp.stack([xx, yy, rr], axis=-1)         # (H, W, 3)


def _coord_bias(conv_p, H, W):
    """Data-independent part of the CoordConv: conv(coords) + bias, shape (H*W, Cout) f32."""
    coords = _add_coords_hw(H, W)[None]                               # (1, H, W, 3)
    cb = jax.lax.conv_general_dilated(
        coords, conv_p["w_coord"], (1, 1), ((1, 1), (1, 1)),
        dimension_numbers=("NHWC", "HWIO", "NHWC"))                   # (1, H, W, Cout)
    cb = cb + conv_p["b"][None, None, None, :]
    return cb.reshape(H * W, -1).astype(jnp.float32)


def residual_block_forward(x_nchw, params):
    x = jnp.transpose(x_nchw, (0, 2, 3, 1))          # NCHW -> NHWC
    y = residual_block_pallas(x, params)
    return jnp.transpose(y, (0, 3, 1, 2))            # NHWC -> NCHW


# --------------------------------------------------------------------------
# Pure-JAX reference with bf16-matched conv operands (for in-script validation)
# --------------------------------------------------------------------------
def residual_block_reference(x_nchw, params):
    x = jnp.transpose(x_nchw, (0, 2, 3, 1))
    N, H, W, C = x.shape

    def conv(v, p):
        cb = _coord_bias(p, H, W).reshape(1, H, W, C)
        y = jax.lax.conv_general_dilated(
            v.astype(jnp.bfloat16), p["w"], (1, 1), ((1, 1), (1, 1)),
            dimension_numbers=("NHWC", "HWIO", "NHWC"),
            preferred_element_type=jnp.float32)
        return y + cb

    def inorm(v, p):
        m = jnp.mean(v, axis=(1, 2), keepdims=True)
        var = jnp.mean((v - m) ** 2, axis=(1, 2), keepdims=True)
        return ((v - m) * jax.lax.rsqrt(var + IN_EPS)
                * p["g"].reshape(1, 1, 1, C) + p["b"].reshape(1, 1, 1, C))

    y = conv(x, params["conv1"])
    y = inorm(y, params["in1"])
    y = jnp.maximum(y, LEAKY_SLOPE * y)
    y = conv(y, params["conv2"])
    y = inorm(y, params["in2"])
    y = y + x
    return jnp.transpose(y, (0, 3, 1, 2))


# --------------------------------------------------------------------------
# Parameters (deterministic; InstanceNorm2d(affine=True) init -> gamma=1, beta=0)
# --------------------------------------------------------------------------
def init_params(key, c=64):
    ks = jax.random.split(key, 6)
    bound = 1.0 / math.sqrt(3 * 3 * (c + 3))   # PyTorch Conv2d default (fan_in = 9*(C+3))

    def conv_p(kw_main, kw_coord, kb):
        w_main = jax.random.uniform(kw_main, (3, 3, c, c), jnp.float32, -bound, bound)
        w_coord = jax.random.uniform(kw_coord, (3, 3, 3, c), jnp.float32, -bound, bound)
        b = jax.random.uniform(kb, (c,), jnp.float32, -bound, bound)
        return {"w": w_main.astype(jnp.bfloat16),   # main-input slice (HWIO), MXU operand
                "w_coord": w_coord,                  # coord-channel slice (HWIO), f32 precompute
                "b": b}

    def in_p():
        return {"g": jnp.ones((1, c), jnp.float32),
                "b": jnp.zeros((1, c), jnp.float32)}

    return {"conv1": conv_p(ks[0], ks[1], ks[2]), "in1": in_p(),
            "conv2": conv_p(ks[3], ks[4], ks[5]), "in2": in_p()}


if __name__ == "__main__":
    key = jax.random.PRNGKey(0)
    pkey, xkey = jax.random.split(key)
    params = init_params(pkey, c=64)
    x = jax.random.normal(xkey, (2, 64, 16, 16), jnp.float32)   # NCHW, like PyTorch

    fwd = jax.jit(residual_block_forward)
    out = fwd(x, params)
    jax.block_until_ready(out)

    assert out.shape == x.shape, out.shape
    assert bool(jnp.all(jnp.isfinite(out))), "non-finite values in kernel output"

    ref = jax.jit(residual_block_reference)(x, params)
    jax.block_until_ready(ref)
    err = float(jnp.max(jnp.abs(out - ref)))
    assert err < 2e-2, f"max abs error vs bf16-matched reference: {err}"
    print("KERNEL_OK")
</pallas_src>

<mosaic_0001>
module attributes {stable_mosaic.version = 11 : i64} {
  func.func @_res_block_kernel(%arg0: i32, %arg1: memref<1x16x16x64xf32, #tpu.memory_space<vmem>>, %arg2: memref<576x64xbf16, #tpu.memory_space<vmem>>, %arg3: memref<256x64xf32, #tpu.memory_space<vmem>>, %arg4: memref<1x64xf32, #tpu.memory_space<vmem>>, %arg5: memref<1x64xf32, #tpu.memory_space<vmem>>, %arg6: memref<576x64xbf16, #tpu.memory_space<vmem>>, %arg7: memref<256x64xf32, #tpu.memory_space<vmem>>, %arg8: memref<1x64xf32, #tpu.memory_space<vmem>>, %arg9: memref<1x64xf32, #tpu.memory_space<vmem>>, %arg10: memref<1x16x16x64xf32, #tpu.memory_space<vmem>>, %arg11: memref<18x48x64xbf16, #tpu.memory_space<vmem>>, %arg12: memref<16x16x576xbf16, #tpu.memory_space<vmem>>) attributes {dimension_semantics = [#tpu.dimension_semantics<parallel>], iteration_bounds = array<i64: 2>, scalar_prefetch = 0 : i64, scratch_operands = 2 : i64, tpu.core_type = #tpu.core_type<tc>, window_params = [{transform_indices = @transform_0, window_bounds = array<i64: 1, 16, 16, 64>}, {pipeline_mode = #tpu.pipeline_mode<synchronous>, transform_indices = @transform_1, window_bounds = array<i64: 576, 64>}, {pipeline_mode = #tpu.pipeline_mode<synchronous>, transform_indices = @transform_2, window_bounds = array<i64: 256, 64>}, {pipeline_mode = #tpu.pipeline_mode<synchronous>, transform_indices = @transform_3, window_bounds = array<i64: 1, 64>}, {pipeline_mode = #tpu.pipeline_mode<synchronous>, transform_indices = @transform_4, window_bounds = array<i64: 1, 64>}, {pipeline_mode = #tpu.pipeline_mode<synchronous>, transform_indices = @transform_5, window_bounds = array<i64: 576, 64>}, {pipeline_mode = #tpu.pipeline_mode<synchronous>, transform_indices = @transform_6, window_bounds = array<i64: 256, 64>}, {pipeline_mode = #tpu.pipeline_mode<synchronous>, transform_indices = @transform_7, window_bounds = array<i64: 1, 64>}, {pipeline_mode = #tpu.pipeline_mode<synchronous>, transform_indices = @transform_8, window_bounds = array<i64: 1, 64>}, {transform_indices = @transform_9, window_bounds = array<i64: 1, 16, 16, 64>}]} {
    %cst = arith.constant 0.000000e+00 : bf16
    %0 = vector.broadcast %cst : bf16 to vector<1x18x64xbf16>
    %cst_0 = arith.constant 0.000000e+00 : bf16
    %1 = vector.broadcast %cst_0 : bf16 to vector<16x1x64xbf16>
    %c0 = arith.constant 0 : index
    %c15 = arith.constant 15 : index
    %c0_1 = arith.constant 0 : index
    %2 = vector.load %arg11[%c0, %c15, %c0_1] : memref<18x48x64xbf16, #tpu.memory_space<vmem>>, vector<1x18x64xbf16>
    tpu.vector_store %arg11[%c0, %c15, %c0_1], %0 {strides = array<i32>} : memref<18x48x64xbf16, #tpu.memory_space<vmem>>, vector<1x18x64xbf16>,
    %c17 = arith.constant 17 : index
    %c15_2 = arith.constant 15 : index
    %c0_3 = arith.constant 0 : index
    %3 = vector.load %arg11[%c17, %c15_2, %c0_3] : memref<18x48x64xbf16, #tpu.memory_space<vmem>>, vector<1x18x64xbf16>
    tpu.vector_store %arg11[%c17, %c15_2, %c0_3], %0 {strides = array<i32>} : memref<18x48x64xbf16, #tpu.memory_space<vmem>>, vector<1x18x64xbf16>,
    %c1 = arith.constant 1 : index
    %c15_4 = arith.constant 15 : index
    %c0_5 = arith.constant 0 : index
    %4 = vector.load %arg11[%c1, %c15_4, %c0_5] : memref<18x48x64xbf16, #tpu.memory_space<vmem>>, vector<16x1x64xbf16>
    tpu.vector_store %arg11[%c1, %c15_4, %c0_5], %1 {strides = array<i32>} : memref<18x48x64xbf16, #tpu.memory_space<vmem>>, vector<16x1x64xbf16>,
    %c1_6 = arith.constant 1 : index
    %c32 = arith.constant 32 : index
    %c0_7 = arith.constant 0 : index
    %5 = vector.load %arg11[%c1_6, %c32, %c0_7] : memref<18x48x64xbf16, #tpu.memory_space<vmem>>, vector<16x1x64xbf16>
    tpu.vector_store %arg11[%c1_6, %c32, %c0_7], %1 {strides = array<i32>} : memref<18x48x64xbf16, #tpu.memory_space<vmem>>, vector<16x1x64xbf16>,
    %c0_8 = arith.constant 0 : index
    %c0_9 = arith.constant 0 : index
    %c0_10 = arith.constant 0 : index
    %c0_11 = arith.constant 0 : index
    %6 = vector.load %arg1[%c0_8, %c0_9, %c0_10, %c0_11] : memref<1x16x16x64xf32, #tpu.memory_space<vmem>>, vector<1x16x16x64xf32>
    %7 = vector.shape_cast %6 : vector<1x16x16x64xf32> to vector<16x16x64xf32>
    %8 = arith.truncf %7 : vector<16x16x64xf32> to vector<16x16x64xbf16>
    %c1_12 = arith.constant 1 : index
    %c16 = arith.constant 16 : index
    %c0_13 = arith.constant 0 : index
    %9 = vector.load %arg11[%c1_12, %c16, %c0_13] : memref<18x48x64xbf16, #tpu.memory_space<vmem>>, vector<16x16x64xbf16>
    tpu.vector_store %arg11[%c1_12, %c16, %c0_13], %8 {strides = array<i32>} : memref<18x48x64xbf16, #tpu.memory_space<vmem>>, vector<16x16x64xbf16>,
    %c0_14 = arith.constant 0 : index
    %c15_15 = arith.constant 15 : index
    %c0_16 = arith.constant 0 : index
    %10 = vector.load %arg11[%c0_14, %c15_15, %c0_16] : memref<18x48x64xbf16, #tpu.memory_space<vmem>>, vector<16x16x64xbf16>
    %c0_17 = arith.constant 0 : index
    %c0_18 = arith.constant 0 : index
    %c0_19 = arith.constant 0 : index
    %11 = vector.load %arg12[%c0_17, %c0_18, %c0_19] : memref<16x16x576xbf16, #tpu.memory_space<vmem>>, vector<16x16x64xbf16>
    tpu.vector_store %arg12[%c0_17, %c0_18, %c0_19], %10 {strides = array<i32>} : memref<16x16x576xbf16, #tpu.memory_space<vmem>>, vector<16x16x64xbf16>,
    %c0_20 = arith.constant 0 : index
    %c16_21 = arith.constant 16 : index
    %c0_22 = arith.constant 0 : index
    %12 = vector.load %arg11[%c0_20, %c16_21, %c0_22] : memref<18x48x64xbf16, #tpu.memory_space<vmem>>, vector<16x16x64xbf16>
    %c0_23 = arith.constant 0 : index
    %c0_24 = arith.constant 0 : index
    %c64 = arith.constant 64 : index
    %13 = vector.load %arg12[%c0_23, %c0_24, %c64] : memref<16x16x576xbf16, #tpu.memory_space<vmem>>, vector<16x16x64xbf16>
    tpu.vector_store %arg12[%c0_23, %c0_24, %c64], %12 {strides = array<i32>} : memref<16x16x576xbf16, #tpu.memory_space<vmem>>, vector<16x16x64xbf16>,
    %c0_25 = arith.constant 0 : index
    %c17_26 = arith.constant 17 : index
    %c0_27 = arith.constant 0 : index
    %14 = vector.load %arg11[%c0_25, %c17_26, %c0_27] : memref<18x48x64xbf16, #tpu.memory_space<vmem>>, vector<16x16x64xbf16>
    %c0_28 = arith.constant 0 : index
    %c0_29 = arith.constant 0 : index
    %c128 = arith.constant 128 : index
    %15 = vector.load %arg12[%c0_28, %c0_29, %c128] : memref<16x16x576xbf16, #tpu.memory_space<vmem>>, vector<16x16x64xbf16>
    tpu.vector_store %arg12[%c0_28, %c0_29, %c128], %14 {strides = array<i32>} : memref<16x16x576xbf16, #tpu.memory_space<vmem>>, vector<16x16x64xbf16>,
    %c1_30 = arith.constant 1 : index
    %c15_31 = arith.constant 15 : index
    %c0_32 = arith.constant 0 : index
    %16 = vector.load %arg11[%c1_30, %c15_31, %c0_32] : memref<18x48x64xbf16, #tpu.memory_space<vmem>>, vector<16x16x64xbf16>
    %c0_33 = arith.constant 0 : index
    %c0_34 = arith.constant 0 : index
    %c192 = arith.constant 192 : index
    %17 = vector.load %arg12[%c0_33, %c0_34, %c192] : memref<16x16x576xbf16, #tpu.memory_space<vmem>>, vector<16x16x64xbf16>
    tpu.vector_store %arg12[%c0_33, %c0_34, %c192], %16 {strides = array<i32>} : memref<16x16x576xbf16, #tpu.memory_space<vmem>>, vector<16x16x64xbf16>,
    %c1_35 = arith.constant 1 : index
    %c16_36 = arith.constant 16 : index
    %c0_37 = arith.constant 0 : index
    %18 = vector.load %arg11[%c1_35, %c16_36, %c0_37] : memref<18x48x64xbf16, #tpu.memory_space<vmem>>, vector<16x16x64xbf16>
    %c0_38 = arith.constant 0 : index
    %c0_39 = arith.constant 0 : index
    %c256 = arith.constant 256 : index
    %19 = vector.load %arg12[%c0_38, %c0_39, %c256] : memref<16x16x576xbf16, #tpu.memory_space<vmem>>, vector<16x16x64xbf16>
    tpu.vector_store %arg12[%c0_38, %c0_39, %c256], %18 {strides = array<i32>} : memref<16x16x576xbf16, #tpu.memory_space<vmem>>, vector<16x16x64xbf16>,
    %c1_40 = arith.constant 1 : index
    %c17_41 = arith.constant 17 : index
    %c0_42 = arith.constant 0 : index
    %20 = vector.load %arg11[%c1_40, %c17_41, %c0_42] : memref<18x48x64xbf16, #tpu.memory_space<vmem>>, vector<16x16x64xbf16>
    %c0_43 = arith.constant 0 : index
    %c0_44 = arith.constant 0 : index
    %c320 = arith.constant 320 : index
    %21 = vector.load %arg12[%c0_43, %c0_44, %c320] : memref<16x16x576xbf16, #tpu.memory_space<vmem>>, vector<16x16x64xbf16>
    tpu.vector_store %arg12[%c0_43, %c0_44, %c320], %20 {strides = array<i32>} : memref<16x16x576xbf16, #tpu.memory_space<vmem>>, vector<16x16x64xbf16>,
    %c2 = arith.constant 2 : index
    %c15_45 = arith.constant 15 : index
    %c0_46 = arith.constant 0 : index
    %22 = vector.load %arg11[%c2, %c15_45, %c0_46] : memref<18x48x64xbf16, #tpu.memory_space<vmem>>, vector<16x16x64xbf16>
    %c0_47 = arith.constant 0 : index
    %c0_48 = arith.constant 0 : index
    %c384 = arith.constant 384 : index
    %23 = vector.load %arg12[%c0_47, %c0_48, %c384] : memref<16x16x576xbf16, #tpu.memory_space<vmem>>, vector<16x16x64xbf16>
    tpu.vector_store %arg12[%c0_47, %c0_48, %c384], %22 {strides = array<i32>} : memref<16x16x576xbf16, #tpu.memory_space<vmem>>, vector<16x16x64xbf16>,
    %c2_49 = arith.constant 2 : index
    %c16_50 = arith.constant 16 : index
    %c0_51 = arith.constant 0 : index
    %24 = vector.load %arg11[%c2_49, %c16_50, %c0_51] : memref<18x48x64xbf16, #tpu.memory_space<vmem>>, vector<16x16x64xbf16>
    %c0_52 = arith.constant 0 : index
    %c0_53 = arith.constant 0 : index
    %c448 = arith.constant 448 : index
    %25 = vector.load %arg12[%c0_52, %c0_53, %c448] : memref<16x16x576xbf16, #tpu.memory_space<vmem>>, vector<16x16x64xbf16>
    tpu.vector_store %arg12[%c0_52, %c0_53, %c448], %24 {strides = array<i32>} : memref<16x16x576xbf16, #tpu.memory_space<vmem>>, vector<16x16x64xbf16>,
    %c2_54 = arith.constant 2 : index
    %c17_55 = arith.constant 17 : index
    %c0_56 = arith.constant 0 : index
    %26 = vector.load %arg11[%c2_54, %c17_55, %c0_56] : memref<18x48x64xbf16, #tpu.memory_space<vmem>>, vector<16x16x64xbf16>
    %c0_57 = arith.constant 0 : index
    %c0_58 = arith.constant 0 : index
    %c512 = arith.constant 512 : index
    %27 = vector.load %arg12[%c0_57, %c0_58, %c512] : memref<16x16x576xbf16, #tpu.memory_space<vmem>>, vector<16x16x64xbf16>
    tpu.vector_store %arg12[%c0_57, %c0_58, %c512], %26 {strides = array<i32>} : memref<16x16x576xbf16, #tpu.memory_space<vmem>>, vector<16x16x64xbf16>,
    %c0_59 = arith.constant 0 : index
    %c0_60 = arith.constant 0 : index
    %c0_61 = arith.constant 0 : index
    %28 = vector.load %arg12[%c0_59, %c0_60, %c0_61] : memref<16x16x576xbf16, #tpu.memory_space<vmem>>, vector<16x16x576xbf16>
    %29 = vector.shape_cast %28 : vector<16x16x576xbf16> to vector<256x576xbf16>
    %c0_62 = arith.constant 0 : index
    %c0_63 = arith.constant 0 : index
    %30 = vector.load %arg3[%c0_62, %c0_63] : memref<256x64xf32, #tpu.memory_space<vmem>>, vector<256x64xf32>
    %c0_64 = arith.constant 0 : index
    %c0_65 = arith.constant 0 : index
    %31 = vector.load %arg2[%c0_64, %c0_65] : memref<576x64xbf16, #tpu.memory_space<vmem>>, vector<576x64xbf16>
    %cst_66 = arith.constant dense<0.000000e+00> : vector<256x64xf32>
    %32 = tpu.matmul %29, %31, %cst_66 {dimension_numbers = #tpu.dot_dimension_numbers<[1], [0], [0], [1], [0, 0, 1, 1], [], []>} : vector<256x576xbf16>, vector<576x64xbf16>, vector<256x64xf32> -> vector<256x64xf32>
    %33 = arith.addf %30, %32 : vector<256x64xf32>
    %cst_67 = arith.constant dense<0.000000e+00> : vector<64xf32>
    %34 = vector.multi_reduction <add>, %33, %cst_67 [0] : vector<256x64xf32> to vector<64xf32>
    %35 = vector.shape_cast %34 : vector<64xf32> to vector<1x64xf32>
    %36 = arith.mulf %33, %33 : vector<256x64xf32>
    %cst_68 = arith.constant dense<0.000000e+00> : vector<64xf32>
    %37 = vector.multi_reduction <add>, %36, %cst_68 [0] : vector<256x64xf32> to vector<64xf32>
    %38 = vector.shape_cast %37 : vector<64xf32> to vector<1x64xf32>
    %cst_69 = arith.constant 3.906250e-03 : f32
    %39 = vector.broadcast %cst_69 : f32 to vector<1x64xf32>
    %40 = arith.mulf %35, %39 : vector<1x64xf32>
    %cst_70 = arith.constant 3.906250e-03 : f32
    %41 = vector.broadcast %cst_70 : f32 to vector<1x64xf32>
    %42 = arith.mulf %38, %41 : vector<1x64xf32>
    %43 = arith.mulf %40, %40 : vector<1x64xf32>
    %44 = arith.subf %42, %43 : vector<1x64xf32>
    %45 = vector.broadcast %40 : vector<1x64xf32> to vector<256x64xf32>
    %46 = arith.subf %33, %45 : vector<256x64xf32>
    %cst_71 = arith.constant 9.99999974E-6 : f32
    %47 = vector.broadcast %cst_71 : f32 to vector<1x64xf32>
    %48 = arith.addf %44, %47 : vector<1x64xf32>
    %49 = math.rsqrt %48 : vector<1x64xf32>
    %50 = vector.broadcast %49 : vector<1x64xf32> to vector<256x64xf32>
    %51 = arith.mulf %46, %50 : vector<256x64xf32>
    %c0_72 = arith.constant 0 : index
    %c0_73 = arith.constant 0 : index
    %52 = vector.load %arg4[%c0_72, %c0_73] : memref<1x64xf32, #tpu.memory_space<vmem>>, vector<1x64xf32>
    %53 = vector.broadcast %52 : vector<1x64xf32> to vector<256x64xf32>
    %54 = arith.mulf %51, %53 : vector<256x64xf32>
    %c0_74 = arith.constant 0 : index
    %c0_75 = arith.constant 0 : index
    %55 = vector.load %arg5[%c0_74, %c0_75] : memref<1x64xf32, #tpu.memory_space<vmem>>, vector<1x64xf32>
    %56 = vector.broadcast %55 : vector<1x64xf32> to vector<256x64xf32>
    %57 = arith.addf %54, %56 : vector<256x64xf32>
    %cst_76 = arith.constant 2.000000e-01 : f32
    %58 = vector.broadcast %cst_76 : f32 to vector<256x64xf32>
    %59 = arith.mulf %58, %57 : vector<256x64xf32>
    %60 = arith.maximumf %57, %59 : vector<256x64xf32>
    %61 = vector.shape_cast %60 : vector<256x64xf32> to vector<16x16x64xf32>
    %62 = arith.truncf %61 : vector<16x16x64xf32> to vector<16x16x64xbf16>
    %c1_77 = arith.constant 1 : index
    %c16_78 = arith.constant 16 : index
    %c0_79 = arith.constant 0 : index
    %63 = vector.load %arg11[%c1_77, %c16_78, %c0_79] : memref<18x48x64xbf16, #tpu.memory_space<vmem>>, vector<16x16x64xbf16>
    tpu.vector_store %arg11[%c1_77, %c16_78, %c0_79], %62 {strides = array<i32>} : memref<18x48x64xbf16, #tpu.memory_space<vmem>>, vector<16x16x64xbf16>,
    %c0_80 = arith.constant 0 : index
    %c15_81 = arith.constant 15 : index
    %c0_82 = arith.constant 0 : index
    %64 = vector.load %arg11[%c0_80, %c15_81, %c0_82] : memref<18x48x64xbf16, #tpu.memory_space<vmem>>, vector<16x16x64xbf16>
    %c0_83 = arith.constant 0 : index
    %c0_84 = arith.constant 0 : index
    %c0_85 = arith.constant 0 : index
    %65 = vector.load %arg12[%c0_83, %c0_84, %c0_85] : memref<16x16x576xbf16, #tpu.memory_space<vmem>>, vector<16x16x64xbf16>
    tpu.vector_store %arg12[%c0_83, %c0_84, %c0_85], %64 {strides = array<i32>} : memref<16x16x576xbf16, #tpu.memory_space<vmem>>, vector<16x16x64xbf16>,
    %c0_86 = arith.constant 0 : index
    %c16_87 = arith.constant 16 : index
    %c0_88 = arith.constant 0 : index
    %66 = vector.load %arg11[%c0_86, %c16_87, %c0_88] : memref<18x48x64xbf16, #tpu.memory_space<vmem>>, vector<16x16x64xbf16>
    %c0_89 = arith.constant 0 : index
    %c0_90 = arith.constant 0 : index
    %c64_91 = arith.constant 64 : index
    %67 = vector.load %arg12[%c0_89, %c0_90, %c64_91] : memref<16x16x576xbf16, #tpu.memory_space<vmem>>, vector<16x16x64xbf16>
    tpu.vector_store %arg12[%c0_89, %c0_90, %c64_91], %66 {strides = array<i32>} : memref<16x16x576xbf16, #tpu.memory_space<vmem>>, vector<16x16x64xbf16>,
    %c0_92 = arith.constant 0 : index
    %c17_93 = arith.constant 17 : index
    %c0_94 = arith.constant 0 : index
    %68 = vector.load %arg11[%c0_92, %c17_93, %c0_94] : memref<18x48x64xbf16, #tpu.memory_space<vmem>>, vector<16x16x64xbf16>
    %c0_95 = arith.constant 0 : index
    %c0_96 = arith.constant 0 : index
    %c128_97 = arith.constant 128 : index
    %69 = vector.load %arg12[%c0_95, %c0_96, %c128_97] : memref<16x16x576xbf16, #tpu.memory_space<vmem>>, vector<16x16x64xbf16>
    tpu.vector_store %arg12[%c0_95, %c0_96, %c128_97], %68 {strides = array<i32>} : memref<16x16x576xbf16, #tpu.memory_space<vmem>>, vector<16x16x64xbf16>,
    %c1_98 = arith.constant 1 : index
    %c15_99 = arith.constant 15 : index
    %c0_100 = arith.constant 0 : index
    %70 = vector.load %arg11[%c1_98, %c15_99, %c0_100] : memref<18x48x64xbf16, #tpu.memory_space<vmem>>, vector<16x16x64xbf16>
    %c0_101 = arith.constant 0 : index
    %c0_102 = arith.constant 0 : index
    %c192_103 = arith.constant 192 : index
    %71 = vector.load %arg12[%c0_101, %c0_102, %c192_103] : memref<16x16x576xbf16, #tpu.memory_space<vmem>>, vector<16x16x64xbf16>
    tpu.vector_store %arg12[%c0_101, %c0_102, %c192_103], %70 {strides = array<i32>} : memref<16x16x576xbf16, #tpu.memory_space<vmem>>, vector<16x16x64xbf16>,
    %c1_104 = arith.constant 1 : index
    %c16_105 = arith.constant 16 : index
    %c0_106 = arith.constant 0 : index
    %72 = vector.load %arg11[%c1_104, %c16_105, %c0_106] : memref<18x48x64xbf16, #tpu.memory_space<vmem>>, vector<16x16x64xbf16>
    %c0_107 = arith.constant 0 : index
    %c0_108 = arith.constant 0 : index
    %c256_109 = arith.constant 256 : index
    %73 = vector.load %arg12[%c0_107, %c0_108, %c256_109] : memref<16x16x576xbf16, #tpu.memory_space<vmem>>, vector<16x16x64xbf16>
    tpu.vector_store %arg12[%c0_107, %c0_108, %c256_109], %72 {strides = array<i32>} : memref<16x16x576xbf16, #tpu.memory_space<vmem>>, vector<16x16x64xbf16>,
    %c1_110 = arith.constant 1 : index
    %c17_111 = arith.constant 17 : index
    %c0_112 = arith.constant 0 : index
    %74 = vector.load %arg11[%c1_110, %c17_111, %c0_112] : memref<18x48x64xbf16, #tpu.memory_space<vmem>>, vector<16x16x64xbf16>
    %c0_113 = arith.constant 0 : index
    %c0_114 = arith.constant 0 : index
    %c320_115 = arith.constant 320 : index
    %75 = vector.load %arg12[%c0_113, %c0_114, %c320_115] : memref<16x16x576xbf16, #tpu.memory_space<vmem>>, vector<16x16x64xbf16>
    tpu.vector_store %arg12[%c0_113, %c0_114, %c320_115], %74 {strides = array<i32>} : memref<16x16x576xbf16, #tpu.memory_space<vmem>>, vector<16x16x64xbf16>,
    %c2_116 = arith.constant 2 : index
    %c15_117 = arith.constant 15 : index
    %c0_118 = arith.constant 0 : index
    %76 = vector.load %arg11[%c2_116, %c15_117, %c0_118] : memref<18x48x64xbf16, #tpu.memory_space<vmem>>, vector<16x16x64xbf16>
    %c0_119 = arith.constant 0 : index
    %c0_120 = arith.constant 0 : index
    %c384_121 = arith.constant 384 : index
    %77 = vector.load %arg12[%c0_119, %c0_120, %c384_121] : memref<16x16x576xbf16, #tpu.memory_space<vmem>>, vector<16x16x64xbf16>
    tpu.vector_store %arg12[%c0_119, %c0_120, %c384_121], %76 {strides = array<i32>} : memref<16x16x576xbf16, #tpu.memory_space<vmem>>, vector<16x16x64xbf16>,
    %c2_122 = arith.constant 2 : index
    %c16_123 = arith.constant 16 : index
    %c0_124 = arith.constant 0 : index
    %78 = vector.load %arg11[%c2_122, %c16_123, %c0_124] : memref<18x48x64xbf16, #tpu.memory_space<vmem>>, vector<16x16x64xbf16>
    %c0_125 = arith.constant 0 : index
    %c0_126 = arith.constant 0 : index
    %c448_127 = arith.constant 448 : index
    %79 = vector.load %arg12[%c0_125, %c0_126, %c448_127] : memref<16x16x576xbf16, #tpu.memory_space<vmem>>, vector<16x16x64xbf16>
    tpu.vector_store %arg12[%c0_125, %c0_126, %c448_127], %78 {strides = array<i32>} : memref<16x16x576xbf16, #tpu.memory_space<vmem>>, vector<16x16x64xbf16>,
    %c2_128 = arith.constant 2 : index
    %c17_129 = arith.constant 17 : index
    %c0_130 = arith.constant 0 : index
    %80 = vector.load %arg11[%c2_128, %c17_129, %c0_130] : memref<18x48x64xbf16, #tpu.memory_space<vmem>>, vector<16x16x64xbf16>
    %c0_131 = arith.constant 0 : index
    %c0_132 = arith.constant 0 : index
    %c512_133 = arith.constant 512 : index
    %81 = vector.load %arg12[%c0_131, %c0_132, %c512_133] : memref<16x16x576xbf16, #tpu.memory_space<vmem>>, vector<16x16x64xbf16>
    tpu.vector_store %arg12[%c0_131, %c0_132, %c512_133], %80 {strides = array<i32>} : memref<16x16x576xbf16, #tpu.memory_space<vmem>>, vector<16x16x64xbf16>,
    %c0_134 = arith.constant 0 : index
    %c0_135 = arith.constant 0 : index
    %c0_136 = arith.constant 0 : index
    %82 = vector.load %arg12[%c0_134, %c0_135, %c0_136] : memref<16x16x576xbf16, #tpu.memory_space<vmem>>, vector<16x16x576xbf16>
    %83 = vector.shape_cast %82 : vector<16x16x576xbf16> to vector<256x576xbf16>
    %c0_137 = arith.constant 0 : index
    %c0_138 = arith.constant 0 : index
    %84 = vector.load %arg7[%c0_137, %c0_138] : memref<256x64xf32, #tpu.memory_space<vmem>>, vector<256x64xf32>
    %c0_139 = arith.constant 0 : index
    %c0_140 = arith.constant 0 : index
    %85 = vector.load %arg6[%c0_139, %c0_140] : memref<576x64xbf16, #tpu.memory_space<vmem>>, vector<576x64xbf16>
    %cst_141 = arith.constant dense<0.000000e+00> : vector<256x64xf32>
    %86 = tpu.matmul %83, %85, %cst_141 {dimension_numbers = #tpu.dot_dimension_numbers<[1], [0], [0], [1], [0, 0, 1, 1], [], []>} : vector<256x576xbf16>, vector<576x64xbf16>, vector<256x64xf32> -> vector<256x64xf32>
    %87 = arith.addf %84, %86 : vector<256x64xf32>
    %cst_142 = arith.constant dense<0.000000e+00> : vector<64xf32>
    %88 = vector.multi_reduction <add>, %87, %cst_142 [0] : vector<256x64xf32> to vector<64xf32>
    %89 = vector.shape_cast %88 : vector<64xf32> to vector<1x64xf32>
    %90 = arith.mulf %87, %87 : vector<256x64xf32>
    %cst_143 = arith.constant dense<0.000000e+00> : vector<64xf32>
    %91 = vector.multi_reduction <add>, %90, %cst_143 [0] : vector<256x64xf32> to vector<64xf32>
    %92 = vector.shape_cast %91 : vector<64xf32> to vector<1x64xf32>
    %cst_144 = arith.constant 3.906250e-03 : f32
    %93 = vector.broadcast %cst_144 : f32 to vector<1x64xf32>
    %94 = arith.mulf %89, %93 : vector<1x64xf32>
    %cst_145 = arith.constant 3.906250e-03 : f32
    %95 = vector.broadcast %cst_145 : f32 to vector<1x64xf32>
    %96 = arith.mulf %92, %95 : vector<1x64xf32>
    %97 = arith.mulf %94, %94 : vector<1x64xf32>
    %98 = arith.subf %96, %97 : vector<1x64xf32>
    %99 = vector.broadcast %94 : vector<1x64xf32> to vector<256x64xf32>
    %100 = arith.subf %87, %99 : vector<256x64xf32>
    %cst_146 = arith.constant 9.99999974E-6 : f32
    %101 = vector.broadcast %cst_146 : f32 to vector<1x64xf32>
    %102 = arith.addf %98, %101 : vector<1x64xf32>
    %103 = math.rsqrt %102 : vector<1x64xf32>
    %104 = vector.broadcast %103 : vector<1x64xf32> to vector<256x64xf32>
    %105 = arith.mulf %100, %104 : vector<256x64xf32>
    %c0_147 = arith.constant 0 : index
    %c0_148 = arith.constant 0 : index
    %106 = vector.load %arg8[%c0_147, %c0_148] : memref<1x64xf32, #tpu.memory_space<vmem>>, vector<1x64xf32>
    %107 = vector.broadcast %106 : vector<1x64xf32> to vector<256x64xf32>
    %108 = arith.mulf %105, %107 : vector<256x64xf32>
    %c0_149 = arith.constant 0 : index
    %c0_150 = arith.constant 0 : index
    %109 = vector.load %arg9[%c0_149, %c0_150] : memref<1x64xf32, #tpu.memory_space<vmem>>, vector<1x64xf32>
    %110 = vector.broadcast %109 : vector<1x64xf32> to vector<256x64xf32>
    %111 = arith.addf %108, %110 : vector<256x64xf32>
    %112 = vector.shape_cast %111 : vector<256x64xf32> to vector<16x16x64xf32>
    %113 = arith.addf %112, %7 : vector<16x16x64xf32>
    %c0_151 = arith.constant 0 : index
    %c0_152 = arith.constant 0 : index
    %c0_153 = arith.constant 0 : index
    %c0_154 = arith.constant 0 : index
    %114 = vector.load %arg10[%c0_151, %c0_152, %c0_153, %c0_154] : memref<1x16x16x64xf32, #tpu.memory_space<vmem>>, vector<1x16x16x64xf32>
    %115 = vector.shape_cast %114 : vector<1x16x16x64xf32> to vector<16x16x64xf32>
    %116 = vector.shape_cast %113 : vector<16x16x64xf32> to vector<1x16x16x64xf32>
    tpu.vector_store %arg10[%c0_151, %c0_152, %c0_153, %c0_154], %116 {strides = array<i32>} : memref<1x16x16x64xf32, #tpu.memory_space<vmem>>, vector<1x16x16x64xf32>,
    return
  }
  func.func @transform_0(%arg0: i32) -> (i32, i32, i32, i32) {
    %c0_i32 = arith.constant 0 : i32
    %c0_i32_0 = arith.constant 0 : i32
    %c0_i32_1 = arith.constant 0 : i32
    %c0_i32_2 = arith.constant 0 : i32
    return %arg0, %c0_i32, %c0_i32_0, %c0_i32_1 : i32, i32, i32, i32
  }
  func.func @transform_1(%arg0: i32) -> (i32, i32) {
    %c0_i32 = arith.constant 0 : i32
    %c0_i32_0 = arith.constant 0 : i32
    %c0_i32_1 = arith.constant 0 : i32
    return %c0_i32, %c0_i32_0 : i32, i32
  }
  func.func @transform_2(%arg0: i32) -> (i32, i32) {
    %c0_i32 = arith.constant 0 : i32
    %c0_i32_0 = arith.constant 0 : i32
    %c0_i32_1 = arith.constant 0 : i32
    return %c0_i32, %c0_i32_0 : i32, i32
  }
  func.func @transform_3(%arg0: i32) -> (i32, i32) {
    %c0_i32 = arith.constant 0 : i32
    %c0_i32_0 = arith.constant 0 : i32
    %c0_i32_1 = arith.constant 0 : i32
    return %c0_i32, %c0_i32_0 : i32, i32
  }
  func.func @transform_4(%arg0: i32) -> (i32, i32) {
    %c0_i32 = arith.constant 0 : i32
    %c0_i32_0 = arith.constant 0 : i32
    %c0_i32_1 = arith.constant 0 : i32
    return %c0_i32, %c0_i32_0 : i32, i32
  }
  func.func @transform_5(%arg0: i32) -> (i32, i32) {
    %c0_i32 = arith.constant 0 : i32
    %c0_i32_0 = arith.constant 0 : i32
    %c0_i32_1 = arith.constant 0 : i32
    return %c0_i32, %c0_i32_0 : i32, i32
  }
  func.func @transform_6(%arg0: i32) -> (i32, i32) {
    %c0_i32 = arith.constant 0 : i32
    %c0_i32_0 = arith.constant 0 : i32
    %c0_i32_1 = arith.constant 0 : i32
    return %c0_i32, %c0_i32_0 : i32, i32
  }
  func.func @transform_7(%arg0: i32) -> (i32, i32) {
    %c0_i32 = arith.constant 0 : i32
    %c0_i32_0 = arith.constant 0 : i32
    %c0_i32_1 = arith.constant 0 : i32
    return %c0_i32, %c0_i32_0 : i32, i32
  }
  func.func @transform_8(%arg0: i32) -> (i32, i32) {
    %c0_i32 = arith.constant 0 : i32
    %c0_i32_0 = arith.constant 0 : i32
    %c0_i32_1 = arith.constant 0 : i32
    return %c0_i32, %c0_i32_0 : i32, i32
  }
  func.func @transform_9(%arg0: i32) -> (i32, i32, i32, i32) {
    %c0_i32 = arith.constant 0 : i32
    %c0_i32_0 = arith.constant 0 : i32
    %c0_i32_1 = arith.constant 0 : i32
    %c0_i32_2 = arith.constant 0 : i32
    return %arg0, %c0_i32, %c0_i32_0, %c0_i32_1 : i32, i32, i32, i32
  }
}

</mosaic_0001>

<llo_original>
// kernel: residual_block_forward.1
$region0: #{residual_block_forward.1}
  #allocation0 [shape = 'u32[]', space=smem, size = 0x4, offset = 0x4, fixed_abs, tag = 'smem constant byte address 0x4 - core index']
  #allocation1 [shape = 'u32[144,128]{1,0:T(1,128)}', space=vmem, size = 0x12000, scoped, tag = 'internal scratch']
  #allocation2 [shape = 'bf16[18,48,64]{2,1,0:T(16,128)(2,1)}', space=vmem, size = 0x36000, scoped, tag = 'scratch operand']
  #allocation3 [shape = 'bf16[16,16,576]{2,1,0:T(16,128)(2,1)}', space=vmem, size = 0x50000, scoped, tag = 'scratch operand']
  %s0 = inlined_call_operand.vmem [shape: f32[2,16,16,64], index: 0, kind: input, shape index: {}]
  %s1 = inlined_call_operand.vmem [shape: bf16[576,64], index: 1, kind: input, shape index: {}]
  %s2 = inlined_call_operand.vmem [shape: f32[256,64], index: 2, kind: input, shape index: {}]
  %s3 = inlined_call_operand.vmem [shape: f32[1,64], index: 3, kind: input, shape index: {}]
  %s4 = inlined_call_operand.vmem [shape: f32[1,64], index: 4, kind: input, shape index: {}]
  %s5 = inlined_call_operand.vmem [shape: bf16[576,64], index: 5, kind: input, shape index: {}]
  %s6 = inlined_call_operand.vmem [shape: f32[256,64], index: 6, kind: input, shape index: {}]
  %s7 = inlined_call_operand.vmem [shape: f32[1,64], index: 7, kind: input, shape index: {}]
  %s8 = inlined_call_operand.vmem [shape: f32[1,64], index: 8, kind: input, shape index: {}]
  %s9 = inlined_call_operand.hbm [shape: f32[2,16,16,64], index: 9, kind: output, shape index: {}]
  %s10 = sld [smem:[#allocation0]]
  $region69: #{residual_block_forward.1} parent=0
    _
  %s12 = ssub.s32 1, %s10
  %s13 = scalar_select 0, %s12, %s10
  $region1: #{residual_block_forward.1} parent=0
    #allocation4 [shape = 'u8[262144]{0}', space=vmem, size = 0x40000, scoped, tag = 'output window, operand 0']
    #allocation5 [shape = 's32[2]{0}', space=sflag, size = 0x8, scoped, tag = 'scoped memory for residual_block_forward.1']
    %14 = vsyncpa [#allocation5], 0
    %s15 = scalar_lea.sflag [#allocation5], 1
    %16 = vsyncpa %s15, 0
    loop: start=0, step=1, limit=4
    $region2: #{residual_block_forward.1} parent=1 // loop_pre_header
      _
    $region3: #{residual_block_forward.1} parent=1 // loop_header
      %s18 = sphi 0, %s22
      %p19 = scmp.ge.s32.totalorder %s18, 4
      %s28 = sphi 0, %s30
      %s31 = sphi 0, %s28
      %s32 = sphi 0, %s31
      %s48 = sphi 0, %s32
      %s52 = sphi 0, %s52
      %s54 = sphi 0, %s52
      %s55 = sphi 0, %s54
      %s69 = sphi 0, %s55
      %s73 = sphi 0, %s73
      %s75 = sphi 0, %s73
      %s76 = sphi 0, %s75
      %s90 = sphi 0, %s76
      %s94 = sphi 0, %s94
      %s96 = sphi 0, %s94
      %s97 = sphi 0, %s96
      %s111 = sphi 0, %s97
      %s115 = sphi 0, %s115
      %s117 = sphi 0, %s115
      %s118 = sphi 0, %s117
      %s132 = sphi 0, %s118
      %s136 = sphi 0, %s136
      %s138 = sphi 0, %s136
      %s139 = sphi 0, %s138
      %s153 = sphi 0, %s139
      %s157 = sphi 0, %s157
      %s159 = sphi 0, %s157
      %s160 = sphi 0, %s159
      %s174 = sphi 0, %s160
      %s178 = sphi 0, %s178
      %s180 = sphi 0, %s178
      %s181 = sphi 0, %s180
      %s195 = sphi 0, %s181
      %s199 = sphi 0, %s199
      %s201 = sphi 0, %s199
      %s202 = sphi 0, %s201
      %s216 = sphi 0, %s202
      %s222 = sphi 0, %s224
      %s225 = sphi 0, %s222
      %s226 = sphi 0, %s225
      %s242 = sphi 0, %s226
    $region4: #{residual_block_forward.1} parent=1 // loop_header_branch
      %21 = sbr.rel (%p19) target = $region8
    $region5: #{residual_block_forward.1} parent=1 // loop_body
      %s23 = ssub.s32 %s18, 1
      %s24 = ssub.s32 %s18, 2
      %s25 = sadd.s32 %s18, 1
      %s26 = ssub.s32 %s18, %s25
      %p27 = scmp.eq.s32.totalorder %s26, 0
      %s29 = sadd.s32 %s28, 1
      %s30 = scalar_select %p27, %s28, %s29
      %p33 = pneg %p27
      %p34 = scmp.eq.s32.totalorder %s18, 1
      %p35 = por %p33, %p34
      %p36 = scmp.ne.s32.totalorder %s28, %s31
      %p37 = scmp.eq.s32.totalorder %s18, 0
      %p38 = por %p36, %p37
      %p39 = scmp.ne.s32.totalorder %s28, %s31
      %p40 = scmp.eq.s32.totalorder %s23, 1
      %p41 = por %p39, %p40
      %p42 = scmp.ne.s32.totalorder %s31, %s32
      %p43 = scmp.eq.s32.totalorder %s23, 0
      %p44 = por %p42, %p43
      %p45 = scmp.ne.s32.totalorder %s31, %s32
      %p46 = scmp.eq.s32.totalorder %s24, 1
      %p47 = por %p45, %p46
      %p49 = scmp.ne.s32.totalorder %s32, %s48
      %p50 = scmp.eq.s32.totalorder %s24, 0
      %p51 = por %p49, %p50
      %s53 = sadd.s32 %s52, 1
      %p56 = scmp.eq.s32.totalorder %s18, 1
      %p57 = scmp.ne.s32.totalorder %s52, %s54
      %p58 = scmp.eq.s32.totalorder %s18, 0
      %p59 = por %p57, %p58
      %p60 = scmp.ne.s32.totalorder %s52, %s54
      %p61 = scmp.eq.s32.totalorder %s23, 1
      %p62 = por %p60, %p61
      %p63 = scmp.ne.s32.totalorder %s54, %s55
      %p64 = scmp.eq.s32.totalorder %s23, 0
      %p65 = por %p63, %p64
      %p66 = scmp.ne.s32.totalorder %s54, %s55
      %p67 = scmp.eq.s32.totalorder %s24, 1
      %p68 = por %p66, %p67
      %p70 = scmp.ne.s32.totalorder %s55, %s69
      %p71 = scmp.eq.s32.totalorder %s24, 0
      %p72 = por %p70, %p71
      %s74 = sadd.s32 %s73, 1
      %p77 = scmp.eq.s32.totalorder %s18, 1
      %p78 = scmp.ne.s32.totalorder %s73, %s75
      %p79 = scmp.eq.s32.totalorder %s18, 0
      %p80 = por %p78, %p79
      %p81 = scmp.ne.s32.totalorder %s73, %s75
      %p82 = scmp.eq.s32.totalorder %s23, 1
      %p83 = por %p81, %p82
      %p84 = scmp.ne.s32.totalorder %s75, %s76
      %p85 = scmp.eq.s32.totalorder %s23, 0
      %p86 = por %p84, %p85
      %p87 = scmp.ne.s32.totalorder %s75, %s76
      %p88 = scmp.eq.s32.totalorder %s24, 1
      %p89 = por %p87, %p88
      %p91 = scmp.ne.s32.totalorder %s76, %s90
      %p92 = scmp.eq.s32.totalorder %s24, 0
      %p93 = por %p91, %p92
      %s95 = sadd.s32 %s94, 1
      %p98 = scmp.eq.s32.totalorder %s18, 1
      %p99 = scmp.ne.s32.totalorder %s94, %s96
      %p100 = scmp.eq.s32.totalorder %s18, 0
      %p101 = por %p99, %p100
      %p102 = scmp.ne.s32.totalorder %s94, %s96
      %p103 = scmp.eq.s32.totalorder %s23, 1
      %p104 = por %p102, %p103
      %p105 = scmp.ne.s32.totalorder %s96, %s97
      %p106 = scmp.eq.s32.totalorder %s23, 0
      %p107 = por %p105, %p106
      %p108 = scmp.ne.s32.totalorder %s96, %s97
      %p109 = scmp.eq.s32.totalorder %s24, 1
      %p110 = por %p108, %p109
      %p112 = scmp.ne.s32.totalorder %s97, %s111
      %p113 = scmp.eq.s32.totalorder %s24, 0
      %p114 = por %p112, %p113
      %s116 = sadd.s32 %s115, 1
      %p119 = scmp.eq.s32.totalorder %s18, 1
      %p120 = scmp.ne.s32.totalorder %s115, %s117
      %p121 = scmp.eq.s32.totalorder %s18, 0
      %p122 = por %p120, %p121
      %p123 = scmp.ne.s32.totalorder %s115, %s117
      %p124 = scmp.eq.s32.totalorder %s23, 1
      %p125 = por %p123, %p124
      %p126 = scmp.ne.s32.totalorder %s117, %s118
      %p127 = scmp.eq.s32.totalorder %s23, 0
      %p128 = por %p126, %p127
      %p129 = scmp.ne.s32.totalorder %s117, %s118
      %p130 = scmp.eq.s32.totalorder %s24, 1
      %p131 = por %p129, %p130
      %p133 = scmp.ne.s32.totalorder %s118, %s132
      %p134 = scmp.eq.s32.totalorder %s24, 0
      %p135 = por %p133, %p134
      %s137 = sadd.s32 %s136, 1
      %p140 = scmp.eq.s32.totalorder %s18, 1
      %p141 = scmp.ne.s32.totalorder %s136, %s138
      %p142 = scmp.eq.s32.totalorder %s18, 0
      %p143 = por %p141, %p142
      %p144 = scmp.ne.s32.totalorder %s136, %s138
      %p145 = scmp.eq.s32.totalorder %s23, 1
      %p146 = por %p144, %p145
      %p147 = scmp.ne.s32.totalorder %s138, %s139
      %p148 = scmp.eq.s32.totalorder %s23, 0
      %p149 = por %p147, %p148
      %p150 = scmp.ne.s32.totalorder %s138, %s139
      %p151 = scmp.eq.s32.totalorder %s24, 1
      %p152 = por %p150, %p151
      %p154 = scmp.ne.s32.totalorder %s139, %s153
      %p155 = scmp.eq.s32.totalorder %s24, 0
      %p156 = por %p154, %p155
      %s158 = sadd.s32 %s157, 1
      %p161 = scmp.eq.s32.totalorder %s18, 1
      %p162 = scmp.ne.s32.totalorder %s157, %s159
      %p163 = scmp.eq.s32.totalorder %s18, 0
      %p164 = por %p162, %p163
      %p165 = scmp.ne.s32.totalorder %s157, %s159
      %p166 = scmp.eq.s32.totalorder %s23, 1
      %p167 = por %p165, %p166
      %p168 = scmp.ne.s32.totalorder %s159, %s160
      %p169 = scmp.eq.s32.totalorder %s23, 0
      %p170 = por %p168, %p169
      %p171 = scmp.ne.s32.totalorder %s159, %s160
      %p172 = scmp.eq.s32.totalorder %s24, 1
      %p173 = por %p171, %p172
      %p175 = scmp.ne.s32.totalorder %s160, %s174
      %p176 = scmp.eq.s32.totalorder %s24, 0
      %p177 = por %p175, %p176
      %s179 = sadd.s32 %s178, 1
      %p182 = scmp.eq.s32.totalorder %s18, 1
      %p183 = scmp.ne.s32.totalorder %s178, %s180
      %p184 = scmp.eq.s32.totalorder %s18, 0
      %p185 = por %p183, %p184
      %p186 = scmp.ne.s32.totalorder %s178, %s180
      %p187 = scmp.eq.s32.totalorder %s23, 1
      %p188 = por %p186, %p187
      %p189 = scmp.ne.s32.totalorder %s180, %s181
      %p190 = scmp.eq.s32.totalorder %s23, 0
      %p191 = por %p189, %p190
      %p192 = scmp.ne.s32.totalorder %s180, %s181
      %p193 = scmp.eq.s32.totalorder %s24, 1
      %p194 = por %p192, %p193
      %p196 = scmp.ne.s32.totalorder %s181, %s195
      %p197 = scmp.eq.s32.totalorder %s24, 0
      %p198 = por %p196, %p197
      %s200 = sadd.s32 %s199, 1
      %p203 = scmp.eq.s32.totalorder %s18, 1
      %p204 = scmp.ne.s32.totalorder %s199, %s201
      %p205 = scmp.eq.s32.totalorder %s18, 0
      %p206 = por %p204, %p205
      %p207 = scmp.ne.s32.totalorder %s199, %s201
      %p208 = scmp.eq.s32.totalorder %s23, 1
      %p209 = por %p207, %p208
      %p210 = scmp.ne.s32.totalorder %s201, %s202
      %p211 = scmp.eq.s32.totalorder %s23, 0
      %p212 = por %p210, %p211
      %p213 = scmp.ne.s32.totalorder %s201, %s202
      %p214 = scmp.eq.s32.totalorder %s24, 1
      %p215 = por %p213, %p214
      %p217 = scmp.ne.s32.totalorder %s202, %s216
      %p218 = scmp.eq.s32.totalorder %s24, 0
      %p219 = por %p217, %p218
      %s220 = ssub.s32 %s18, %s25
      %p221 = scmp.eq.s32.totalorder %s220, 0
      %s223 = sadd.s32 %s222, 1
      %s224 = scalar_select %p221, %s222, %s223
      %p227 = pneg %p221
      %p228 = scmp.eq.s32.totalorder %s18, 1
      %p229 = por %p227, %p228
      %p230 = scmp.ne.s32.totalorder %s222, %s225
      %p231 = scmp.eq.s32.totalorder %s18, 0
      %p232 = por %p230, %p231
      %p233 = scmp.ne.s32.totalorder %s222, %s225
      %p234 = scmp.eq.s32.totalorder %s23, 1
      %p235 = por %p233, %p234
      %p236 = scmp.ne.s32.totalorder %s225, %s226
      %p237 = scmp.eq.s32.totalorder %s23, 0
      %p238 = por %p236, %p237
      %p239 = scmp.ne.s32.totalorder %s225, %s226
      %p240 = scmp.eq.s32.totalorder %s24, 1
      %p241 = por %p239, %p240
      %p243 = scmp.ne.s32.totalorder %s226, %s242
      %p244 = scmp.eq.s32.totalorder %s24, 0
      %p245 = por %p243, %p244
      %p246 = scmp.le.s32.totalorder 1, %s18
      %p247 = scmp.lt.s32.totalorder %s18, 3
      %p248 = pnand %p246, %p247
      %p249 = pneg %p248
      // Predicated region
      $region9: #{residual_block_forward.1} parent=5 // pred_check
        _
      $region10: #{residual_block_forward.1} parent=5 // pred_check_branch
        %251 = sbr.rel (%p248) target = $region12
      $region11: #{residual_block_forward.1} parent=5 // pred_region
        %s252 = ssub.s32 %s18, 1
        // Predicated region
        $region13: #{residual_block_forward.1} parent=11 // pred_check
          %p253 = pneg %p65
        $region14: #{residual_block_forward.1} parent=11 // pred_check_branch
          %255 = sbr.rel (%p253) target = $region16
        $region15: #{residual_block_forward.1} parent=11 // pred_region
          _
        $region16: #{residual_block_forward.1} parent=11 // pred_fallthru
          _
        // Predicated region
        $region17: #{residual_block_forward.1} parent=11 // pred_check
          %p256 = pneg %p86
        $region18: #{residual_block_forward.1} parent=11 // pred_check_branch
          %258 = sbr.rel (%p256) target = $region20
        $region19: #{residual_block_forward.1} parent=11 // pred_region
          _
        $region20: #{residual_block_forward.1} parent=11 // pred_fallthru
          _
        // Predicated region
        $region21: #{residual_block_forward.1} parent=11 // pred_check
          %p259 = pneg %p107
        $region22: #{residual_block_forward.1} parent=11 // pred_check_branch
          %261 = sbr.rel (%p259) target = $region24
        $region23: #{residual_block_forward.1} parent=11 // pred_region
          _
        $region24: #{residual_block_forward.1} parent=11 // pred_fallthru
          _
        // Predicated region
        $region25: #{residual_block_forward.1} parent=11 // pred_check
          %p262 = pneg %p128
        $region26: #{residual_block_forward.1} parent=11 // pred_check_branch
          %264 = sbr.rel (%p262) target = $region28
        $region27: #{residual_block_forward.1} parent=11 // pred_region
          _
        $region28: #{residual_block_forward.1} parent=11 // pred_fallthru
          _
        // Predicated region
        $region29: #{residual_block_forward.1} parent=11 // pred_check
          %p265 = pneg %p149
        $region30: #{residual_block_forward.1} parent=11 // pred_check_branch
          %267 = sbr.rel (%p265) target = $region32
        $region31: #{residual_block_forward.1} parent=11 // pred_region
          _
        $region32: #{residual_block_forward.1} parent=11 // pred_fallthru
          _
        // Predicated region
        $region33: #{residual_block_forward.1} parent=11 // pred_check
          %p268 = pneg %p170
        $region34: #{residual_block_forward.1} parent=11 // pred_check_branch
          %270 = sbr.rel (%p268) target = $region36
        $region35: #{residual_block_forward.1} parent=11 // pred_region
          _
        $region36: #{residual_block_forward.1} parent=11 // pred_fallthru
          _
        // Predicated region
        $region37: #{residual_block_forward.1} parent=11 // pred_check
          %p271 = pneg %p191
        $region38: #{residual_block_forward.1} parent=11 // pred_check_branch
          %273 = sbr.rel (%p271) target = $region40
        $region39: #{residual_block_forward.1} parent=11 // pred_region
          _
        $region40: #{residual_block_forward.1} parent=11 // pred_fallthru
          _
        // Predicated region
        $region41: #{residual_block_forward.1} parent=11 // pred_check
          %p274 = pneg %p212
        $region42: #{residual_block_forward.1} parent=11 // pred_check_branch
          %276 = sbr.rel (%p274) target = $region44
        $region43: #{residual_block_forward.1} parent=11 // pred_region
          _
        $region44: #{residual_block_forward.1} parent=11 // pred_fallthru
          _
      $region12: #{residual_block_forward.1} parent=5 // pred_fallthru
        _
      %p277 = scmp.lt.s32.totalorder %s18, 2
      // Predicated region
      $region45: #{residual_block_forward.1} parent=5 // pred_check
        %p278 = pneg %p277
      $region46: #{residual_block_forward.1} parent=5 // pred_check_branch
        %280 = sbr.rel (%p278) target = $region48
      $region47: #{residual_block_forward.1} parent=5 // pred_region
        // Predicated region
        $region49: #{residual_block_forward.1} parent=47 // pred_check
          %p281 = pneg %p38
        $region50: #{residual_block_forward.1} parent=47 // pred_check_branch
          %283 = sbr.rel (%p281) target = $region52
        $region51: #{residual_block_forward.1} parent=47 // pred_region
          %p284 = scmp.lt.s32.totalorder %s18, 1
          %s285 = scalar_select %p284, %s18, 1
          %s286 = smul.addr %s285, 32
          %s287 = smul.addr %s286, 8
          %s288 = scalar_lea.vmem %s0, %s287
        $region52: #{residual_block_forward.1} parent=47 // pred_fallthru
          _
      $region48: #{residual_block_forward.1} parent=5 // pred_fallthru
        _
      %p289 = scmp.le.s32.totalorder 1, %s18
      %p290 = scmp.lt.s32.totalorder %s18, 3
      %p291 = pnand %p289, %p290
      %p292 = pneg %p291
      // Predicated region
      $region53: #{residual_block_forward.1} parent=5 // pred_check
        _
      $region54: #{residual_block_forward.1} parent=5 // pred_check_branch
        %294 = sbr.rel (%p291) target = $region56
      $region55: #{residual_block_forward.1} parent=5 // pred_region
        %s295 = ssub.s32 %s18, 1
        %p296 = scmp.lt.s32.totalorder %s23, 1
        %s297 = scalar_select %p296, %s23, 1
        %s298 = smul.addr %s297, 32
        %s299 = smul.addr %s298, 8
        %s300 = scalar_lea.vmem %s0, %s299
        %p301 = pneg %p44
        %p302 = pneg %p41
        %p303 = pneg %p65
        %p304 = pneg %p62
        %p305 = pneg %p86
        %p306 = pneg %p83
        %p307 = pneg %p107
        %p308 = pneg %p104
        %p309 = pneg %p128
        %p310 = pneg %p125
        %p311 = pneg %p149
        %p312 = pneg %p146
        %p313 = pneg %p170
        %p314 = pneg %p167
        %p315 = pneg %p191
        %p316 = pneg %p188
        %p317 = pneg %p212
        %p318 = pneg %p209
        %p319 = pneg %p238
        %p320 = pneg %p235
        %s321 = sand.u32 %s225, 1
        %s322 = scalar_lea.sflag [#allocation5], %s321
        %s323 = sand.u32 %s225, 1
        %s324 = smul.addr %s323, 256
        %s325 = scalar_lea.vmem [#allocation4], %s324
        %p326 = scmp.lt.s32.totalorder %s23, 1
        %s327 = scalar_select %p326, %s23, 1
        %s328 = smul.addr %s327, 32
        %s329 = smul.addr %s328, 8
        %s330 = scalar_lea.vmem %s0, %s329
        %vm332 = vcmask 523271
        %vm333 = vsmask.f32 7966
        %vm334 = vmand %vm332, %vm333
        %v335 = vld [vmem:[#allocation2] sm:$0x80]
        %v336 = vsel %vm334, 0, %v335
        %337 = vst [vmem:[#allocation2] sm:$0x80] %v336
        %vm338 = vcmask 523264
        %339 = vst.msk [vmem:[#allocation2 + $0x8] sm:$0xff] %vm338, 0
        %vm340 = vcmask 516096
        %vm341 = vsmask.f32 256
        %vm342 = vmand %vm340, %vm341
        %v343 = vld [vmem:[#allocation2 + $0x10] sm:$0x1]
        %v344 = vsel %vm342, 0, %v343
        %345 = vst [vmem:[#allocation2 + $0x10] sm:$0x1] %v344
        %s346 = scalar_lea.vmem [#allocation2], 408
        %v347 = vld [vmem:[%s346] sm:$0x80]
        %v348 = vsel %vm334, 0, %v347
        %349 = vst [vmem:[%s346] sm:$0x80] %v348
        %350 = vst.msk [vmem:[%s346 + $0x8] sm:$0xff] %vm338, 0
        %v351 = vld [vmem:[%s346 + $0x10] sm:$0x1]
        %v352 = vsel %vm342, 0, %v351
        %353 = vst [vmem:[%s346 + $0x10] sm:$0x1] %v352
        %s354 = scalar_lea.vmem [#allocation2], 24
        %v355 = vld [vmem:[%s354] sm:$0x80]
        %v356 = vsel %vm334, 0, %v355
        %357 = vst [vmem:[%s354] sm:$0x80] %v356
        %v358 = vld [vmem:[%s354 + $0x18] sm:$0x80]
        %v359 = vsel %vm334, 0, %v358
        %360 = vst [vmem:[%s354 + $0x18] sm:$0x80] %v359
        %v361 = vld [vmem:[%s354 + $0x30] sm:$0x80]
        %v362 = vsel %vm334, 0, %v361
        %363 = vst [vmem:[%s354 + $0x30] sm:$0x80] %v362
        %v364 = vld [vmem:[%s354 + $0x48] sm:$0x80]
        %v365 = vsel %vm334, 0, %v364
        %366 = vst [vmem:[%s354 + $0x48] sm:$0x80] %v365
        %v367 = vld [vmem:[%s354 + $0x60] sm:$0x80]
        %v368 = vsel %vm334, 0, %v367
        %369 = vst [vmem:[%s354 + $0x60] sm:$0x80] %v368
        %v370 = vld [vmem:[%s354 + $0x78] sm:$0x80]
        %v371 = vsel %vm334, 0, %v370
        %372 = vst [vmem:[%s354 + $0x78] sm:$0x80] %v371
        %v373 = vld [vmem:[%s354 + $0x90] sm:$0x80]
        %v374 = vsel %vm334, 0, %v373
        %375 = vst [vmem:[%s354 + $0x90] sm:$0x80] %v374
        %v376 = vld [vmem:[%s354 + $0xa8] sm:$0x80]
        %v377 = vsel %vm334, 0, %v376
        %378 = vst [vmem:[%s354 + $0xa8] sm:$0x80] %v377
        %v379 = vld [vmem:[%s354 + $0xc0] sm:$0x80]
        %v380 = vsel %vm334, 0, %v379
        %381 = vst [vmem:[%s354 + $0xc0] sm:$0x80] %v380
        %v382 = vld [vmem:[%s354 + $0xd8] sm:$0x80]
        %v383 = vsel %vm334, 0, %v382
        %384 = vst [vmem:[%s354 + $0xd8] sm:$0x80] %v383
        %v385 = vld [vmem:[%s354 + $0xf0] sm:$0x80]
        %v386 = vsel %vm334, 0, %v385
        %387 = vst [vmem:[%s354 + $0xf0] sm:$0x80] %v386
        %v388 = vld [vmem:[%s354 + $0x108] sm:$0x80]
        %v389 = vsel %vm334, 0, %v388
        %390 = vst [vmem:[%s354 + $0x108] sm:$0x80] %v389
        %v391 = vld [vmem:[%s354 + $0x120] sm:$0x80]
        %v392 = vsel %vm334, 0, %v391
        %393 = vst [vmem:[%s354 + $0x120] sm:$0x80] %v392
        %v394 = vld [vmem:[%s354 + $0x138] sm:$0x80]
        %v395 = vsel %vm334, 0, %v394
        %396 = vst [vmem:[%s354 + $0x138] sm:$0x80] %v395
        %v397 = vld [vmem:[%s354 + $0x150] sm:$0x80]
        %v398 = vsel %vm334, 0, %v397
        %399 = vst [vmem:[%s354 + $0x150] sm:$0x80] %v398
        %v400 = vld [vmem:[%s354 + $0x168] sm:$0x80]
        %v401 = vsel %vm334, 0, %v400
        %402 = vst [vmem:[%s354 + $0x168] sm:$0x80] %v401
        %v403 = vld [vmem:[%s354 + $0x10] sm:$0x1]
        %v404 = vsel %vm342, 0, %v403
        %405 = vst [vmem:[%s354 + $0x10] sm:$0x1] %v404
        %v406 = vld [vmem:[%s354 + $0x28] sm:$0x1]
        %v407 = vsel %vm342, 0, %v406
        %408 = vst [vmem:[%s354 + $0x28] sm:$0x1] %v407
        %v409 = vld [vmem:[%s354 + $0x40] sm:$0x1]
        %v410 = vsel %vm342, 0, %v409
        %411 = vst [vmem:[%s354 + $0x40] sm:$0x1] %v410
        %v412 = vld [vmem:[%s354 + $0x58] sm:$0x1]
        %v413 = vsel %vm342, 0, %v412
        %414 = vst [vmem:[%s354 + $0x58] sm:$0x1] %v413
        %v415 = vld [vmem:[%s354 + $0x70] sm:$0x1]
        %v416 = vsel %vm342, 0, %v415
        %417 = vst [vmem:[%s354 + $0x70] sm:$0x1] %v416
        %v418 = vld [vmem:[%s354 + $0x88] sm:$0x1]
        %v419 = vsel %vm342, 0, %v418
        %420 = vst [vmem:[%s354 + $0x88] sm:$0x1] %v419
        %v421 = vld [vmem:[%s354 + $0xa0] sm:$0x1]
        %v422 = vsel %vm342, 0, %v421
        %423 = vst [vmem:[%s354 + $0xa0] sm:$0x1] %v422
        %v424 = vld [vmem:[%s354 + $0xb8] sm:$0x1]
        %v425 = vsel %vm342, 0, %v424
        %426 = vst [vmem:[%s354 + $0xb8] sm:$0x1] %v425
        %v427 = vld [vmem:[%s354 + $0xd0] sm:$0x1]
        %v428 = vsel %vm342, 0, %v427
        %429 = vst [vmem:[%s354 + $0xd0] sm:$0x1] %v428
        %v430 = vld [vmem:[%s354 + $0xe8] sm:$0x1]
        %v431 = vsel %vm342, 0, %v430
        %432 = vst [vmem:[%s354 + $0xe8] sm:$0x1] %v431
        %v433 = vld [vmem:[%s354 + $0x100] sm:$0x1]
        %v434 = vsel %vm342, 0, %v433
        %435 = vst [vmem:[%s354 + $0x100] sm:$0x1] %v434
        %v436 = vld [vmem:[%s354 + $0x118] sm:$0x1]
        %v437 = vsel %vm342, 0, %v436
        %438 = vst [vmem:[%s354 + $0x118] sm:$0x1] %v437
        %v439 = vld [vmem:[%s354 + $0x130] sm:$0x1]
        %v440 = vsel %vm342, 0, %v439
        %441 = vst [vmem:[%s354 + $0x130] sm:$0x1] %v440
        %v442 = vld [vmem:[%s354 + $0x148] sm:$0x1]
        %v443 = vsel %vm342, 0, %v442
        %444 = vst [vmem:[%s354 + $0x148] sm:$0x1] %v443
        %v445 = vld [vmem:[%s354 + $0x160] sm:$0x1]
        %v446 = vsel %vm342, 0, %v445
        %447 = vst [vmem:[%s354 + $0x160] sm:$0x1] %v446
        %v448 = vld [vmem:[%s354 + $0x178] sm:$0x1]
        %v449 = vsel %vm342, 0, %v448
        %450 = vst [vmem:[%s354 + $0x178] sm:$0x1] %v449
        %v451 = vld [vmem:[%s330] sm:$0xff]
        %v452 = vld [vmem:[%s330 + $0x8] sm:$0xff]
        %v453 = vld [vmem:[%s330 + $0x10] sm:$0xff]
        %v454 = vld [vmem:[%s330 + $0x18] sm:$0xff]
        %v455 = vld [vmem:[%s330 + $0x20] sm:$0xff]
        %v456 = vld [vmem:[%s330 + $0x28] sm:$0xff]
        %v457 = vld [vmem:[%s330 + $0x30] sm:$0xff]
        %v458 = vld [vmem:[%s330 + $0x38] sm:$0xff]
        %v459 = vld [vmem:[%s330 + $0x40] sm:$0xff]
        %v460 = vld [vmem:[%s330 + $0x48] sm:$0xff]
        %v461 = vld [vmem:[%s330 + $0x50] sm:$0xff]
        %v462 = vld [vmem:[%s330 + $0x58] sm:$0xff]
        %v463 = vld [vmem:[%s330 + $0x60] sm:$0xff]
        %v464 = vld [vmem:[%s330 + $0x68] sm:$0xff]
        %v465 = vld [vmem:[%s330 + $0x70] sm:$0xff]
        %v466 = vld [vmem:[%s330 + $0x78] sm:$0xff]
        %v467 = vld [vmem:[%s330 + $0x80] sm:$0xff]
        %v468 = vld [vmem:[%s330 + $0x88] sm:$0xff]
        %v469 = vld [vmem:[%s330 + $0x90] sm:$0xff]
        %v470 = vld [vmem:[%s330 + $0x98] sm:$0xff]
        %v471 = vld [vmem:[%s330 + $0xa0] sm:$0xff]
        %v472 = vld [vmem:[%s330 + $0xa8] sm:$0xff]
        %v473 = vld [vmem:[%s330 + $0xb0] sm:$0xff]
        %v474 = vld [vmem:[%s330 + $0xb8] sm:$0xff]
        %v475 = vld [vmem:[%s330 + $0xc0] sm:$0xff]
        %v476 = vld [vmem:[%s330 + $0xc8] sm:$0xff]
        %v477 = vld [vmem:[%s330 + $0xd0] sm:$0xff]
        %v478 = vld [vmem:[%s330 + $0xd8] sm:$0xff]
        %v479 = vld [vmem:[%s330 + $0xe0] sm:$0xff]
        %v480 = vld [vmem:[%s330 + $0xe8] sm:$0xff]
        %v481 = vld [vmem:[%s330 + $0xf0] sm:$0xff]
        %v482 = vld [vmem:[%s330 + $0xf8] sm:$0xff]
        %v483 = vpack.c.bf16 %v452, %v451
        %v484 = vpack.c.bf16 %v454, %v453
        %v485 = vpack.c.bf16 %v456, %v455
        %v486 = vpack.c.bf16 %v458, %v457
        %v487 = vpack.c.bf16 %v460, %v459
        %v488 = vpack.c.bf16 %v462, %v461
        %v489 = vpack.c.bf16 %v464, %v463
        %v490 = vpack.c.bf16 %v466, %v465
        %v491 = vpack.c.bf16 %v468, %v467
        %v492 = vpack.c.bf16 %v470, %v469
        %v493 = vpack.c.bf16 %v472, %v471
        %v494 = vpack.c.bf16 %v474, %v473
        %v495 = vpack.c.bf16 %v476, %v475
        %v496 = vpack.c.bf16 %v478, %v477
        %v497 = vpack.c.bf16 %v480, %v479
        %v498 = vpack.c.bf16 %v482, %v481
        %499 = vst.msk [vmem:[%s354 + $0x8] sm:$0xff] %vm338, %v483
        %500 = vst.msk [vmem:[%s354 + $0x20] sm:$0xff] %vm338, %v484
        %501 = vst.msk [vmem:[%s354 + $0x38] sm:$0xff] %vm338, %v485
        %502 = vst.msk [vmem:[%s354 + $0x50] sm:$0xff] %vm338, %v486
        %503 = vst.msk [vmem:[%s354 + $0x68] sm:$0xff] %vm338, %v487
        %504 = vst.msk [vmem:[%s354 + $0x80] sm:$0xff] %vm338, %v488
        %505 = vst.msk [vmem:[%s354 + $0x98] sm:$0xff] %vm338, %v489
        %506 = vst.msk [vmem:[%s354 + $0xb0] sm:$0xff] %vm338, %v490
        %507 = vst.msk [vmem:[%s354 + $0xc8] sm:$0xff] %vm338, %v491
        %508 = vst.msk [vmem:[%s354 + $0xe0] sm:$0xff] %vm338, %v492
        %509 = vst.msk [vmem:[%s354 + $0xf8] sm:$0xff] %vm338, %v493
        %510 = vst.msk [vmem:[%s354 + $0x110] sm:$0xff] %vm338, %v494
        %511 = vst.msk [vmem:[%s354 + $0x128] sm:$0xff] %vm338, %v495
        %512 = vst.msk [vmem:[%s354 + $0x140] sm:$0xff] %vm338, %v496
        %513 = vst.msk [vmem:[%s354 + $0x158] sm:$0xff] %vm338, %v497
        %514 = vst.msk [vmem:[%s354 + $0x170] sm:$0xff] %vm338, %v498
        %v515 = vld [vmem:[#allocation2] sm:$0x80]
        %v516 = vld [vmem:[#allocation2 + $0x8] sm:$0xff]
        %v517 = vld [vmem:[#allocation2 + $0x18] sm:$0x80]
        %v518 = vld [vmem:[#allocation2 + $0x20] sm:$0xff]
        %v519 = vld [vmem:[#allocation2 + $0x30] sm:$0x80]
        %v520 = vld [vmem:[#allocation2 + $0x38] sm:$0xff]
        %v521 = vld [vmem:[#allocation2 + $0x48] sm:$0x80]
        %v522 = vld [vmem:[#allocation2 + $0x50] sm:$0xff]
        %v523 = vld [vmem:[#allocation2 + $0x60] sm:$0x80]
        %v524 = vld [vmem:[#allocation2 + $0x68] sm:$0xff]
        %v525 = vld [vmem:[#allocation2 + $0x78] sm:$0x80]
        %v526 = vld [vmem:[#allocation2 + $0x80] sm:$0xff]
        %v527 = vld [vmem:[#allocation2 + $0x90] sm:$0x80]
        %v528 = vld [vmem:[#allocation2 + $0x98] sm:$0xff]
        %v529 = vld [vmem:[#allocation2 + $0xa8] sm:$0x80]
        %v530 = vld [vmem:[#allocation2 + $0xb0] sm:$0xff]
        %v531 = vld [vmem:[#allocation2 + $0xc0] sm:$0x80]
        %v532 = vld [vmem:[#allocation2 + $0xc8] sm:$0xff]
        %v533 = vld [vmem:[#allocation2 + $0xd8] sm:$0x80]
        %v534 = vld [vmem:[#allocation2 + $0xe0] sm:$0xff]
        %v535 = vld [vmem:[#allocation2 + $0xf0] sm:$0x80]
        %v536 = vld [vmem:[#allocation2 + $0xf8] sm:$0xff]
        %v537 = vld [vmem:[#allocation2 + $0x108] sm:$0x80]
        %v538 = vld [vmem:[#allocation2 + $0x110] sm:$0xff]
        %v539 = vld [vmem:[#allocation2 + $0x120] sm:$0x80]
        %v540 = vld [vmem:[#allocation2 + $0x128] sm:$0xff]
        %v541 = vld [vmem:[#allocation2 + $0x138] sm:$0x80]
        %v542 = vld [vmem:[#allocation2 + $0x140] sm:$0xff]
        %v543 = vld [vmem:[#allocation2 + $0x150] sm:$0x80]
        %v544 = vld [vmem:[#allocation2 + $0x158] sm:$0xff]
        %v545 = vld [vmem:[#allocation2 + $0x168] sm:$0x80]
        %v546 = vld [vmem:[#allocation2 + $0x170] sm:$0xff]
        %v548 = vshrl.u32 %v515, 16
        %v550 = vrot.slane %v548, 7
        %v552 = vshrl.u32 %v516, 16
        %v554 = vrot.slane %v552, 7
        %v555 = vshll.u32 %v516, 16
        %v557 = vor.u32 %v554, %v555
        %v558 = vsel %vm341, %v550, %v557
        %v560 = vshrl.u32 %v517, 16
        %v562 = vrot.slane %v560, 7
        %v564 = vshrl.u32 %v518, 16
        %v566 = vrot.slane %v564, 7
        %v567 = vshll.u32 %v518, 16
        %v569 = vor.u32 %v566, %v567
        %v570 = vsel %vm341, %v562, %v569
        %v572 = vshrl.u32 %v519, 16
        %v574 = vrot.slane %v572, 7
        %v576 = vshrl.u32 %v520, 16
        %v578 = vrot.slane %v576, 7
        %v579 = vshll.u32 %v520, 16
        %v581 = vor.u32 %v578, %v579
        %v582 = vsel %vm341, %v574, %v581
        %v584 = vshrl.u32 %v521, 16
        %v586 = vrot.slane %v584, 7
        %v588 = vshrl.u32 %v522, 16
        %v590 = vrot.slane %v588, 7
        %v591 = vshll.u32 %v522, 16
        %v593 = vor.u32 %v590, %v591
        %v594 = vsel %vm341, %v586, %v593
        %v596 = vshrl.u32 %v523, 16
        %v598 = vrot.slane %v596, 7
        %v600 = vshrl.u32 %v524, 16
        %v602 = vrot.slane %v600, 7
        %v603 = vshll.u32 %v524, 16
        %v605 = vor.u32 %v602, %v603
        %v606 = vsel %vm341, %v598, %v605
        %v608 = vshrl.u32 %v525, 16
        %v610 = vrot.slane %v608, 7
        %v612 = vshrl.u32 %v526, 16
        %v614 = vrot.slane %v612, 7
        %v615 = vshll.u32 %v526, 16
        %v617 = vor.u32 %v614, %v615
        %v618 = vsel %vm341, %v610, %v617
        %v620 = vshrl.u32 %v527, 16
        %v622 = vrot.slane %v620, 7
        %v624 = vshrl.u32 %v528, 16
        %v626 = vrot.slane %v624, 7
        %v627 = vshll.u32 %v528, 16
        %v629 = vor.u32 %v626, %v627
        %v630 = vsel %vm341, %v622, %v629
        %v632 = vshrl.u32 %v529, 16
        %v634 = vrot.slane %v632, 7
        %v636 = vshrl.u32 %v530, 16
        %v638 = vrot.slane %v636, 7
        %v639 = vshll.u32 %v530, 16
        %v641 = vor.u32 %v638, %v639
        %v642 = vsel %vm341, %v634, %v641
        %v644 = vshrl.u32 %v531, 16
        %v646 = vrot.slane %v644, 7
        %v648 = vshrl.u32 %v532, 16
        %v650 = vrot.slane %v648, 7
        %v651 = vshll.u32 %v532, 16
        %v653 = vor.u32 %v650, %v651
        %v654 = vsel %vm341, %v646, %v653
        %v656 = vshrl.u32 %v533, 16
        %v658 = vrot.slane %v656, 7
        %v660 = vshrl.u32 %v534, 16
        %v662 = vrot.slane %v660, 7
        %v663 = vshll.u32 %v534, 16
        %v665 = vor.u32 %v662, %v663
        %v666 = vsel %vm341, %v658, %v665
        %v668 = vshrl.u32 %v535, 16
        %v670 = vrot.slane %v668, 7
        %v672 = vshrl.u32 %v536, 16
        %v674 = vrot.slane %v672, 7
        %v675 = vshll.u32 %v536, 16
        %v677 = vor.u32 %v674, %v675
        %v678 = vsel %vm341, %v670, %v677
        %v680 = vshrl.u32 %v537, 16
        %v682 = vrot.slane %v680, 7
        %v684 = vshrl.u32 %v538, 16
        %v686 = vrot.slane %v684, 7
        %v687 = vshll.u32 %v538, 16
        %v689 = vor.u32 %v686, %v687
        %v690 = vsel %vm341, %v682, %v689
        %v692 = vshrl.u32 %v539, 16
        %v694 = vrot.slane %v692, 7
        %v696 = vshrl.u32 %v540, 16
        %v698 = vrot.slane %v696, 7
        %v699 = vshll.u32 %v540, 16
        %v701 = vor.u32 %v698, %v699
        %v702 = vsel %vm341, %v694, %v701
        %v704 = vshrl.u32 %v541, 16
        %v706 = vrot.slane %v704, 7
        %v708 = vshrl.u32 %v542, 16
        %v710 = vrot.slane %v708, 7
        %v711 = vshll.u32 %v542, 16
        %v713 = vor.u32 %v710, %v711
        %v714 = vsel %vm341, %v706, %v713
        %v716 = vshrl.u32 %v543, 16
        %v718 = vrot.slane %v716, 7
        %v720 = vshrl.u32 %v544, 16
        %v722 = vrot.slane %v720, 7
        %v723 = vshll.u32 %v544, 16
        %v725 = vor.u32 %v722, %v723
        %v726 = vsel %vm341, %v718, %v725
        %v728 = vshrl.u32 %v545, 16
        %v730 = vrot.slane %v728, 7
        %v732 = vshrl.u32 %v546, 16
        %v734 = vrot.slane %v732, 7
        %v735 = vshll.u32 %v546, 16
        %v737 = vor.u32 %v734, %v735
        %v738 = vsel %vm341, %v730, %v737
        %755 = vst.msk [vmem:[#allocation3] sm:$0xff] %vm338, %v558
        %756 = vst.msk [vmem:[#allocation3 + $0x28] sm:$0xff] %vm338, %v570
        %757 = vst.msk [vmem:[#allocation3 + $0x50] sm:$0xff] %vm338, %v582
        %758 = vst.msk [vmem:[#allocation3 + $0x78] sm:$0xff] %vm338, %v594
        %759 = vst.msk [vmem:[#allocation3 + $0xa0] sm:$0xff] %vm338, %v606
        %760 = vst.msk [vmem:[#allocation3 + $0xc8] sm:$0xff] %vm338, %v618
        %761 = vst.msk [vmem:[#allocation3 + $0xf0] sm:$0xff] %vm338, %v630
        %762 = vst.msk [vmem:[#allocation3 + $0x118] sm:$0xff] %vm338, %v642
        %763 = vst.msk [vmem:[#allocation3 + $0x140] sm:$0xff] %vm338, %v654
        %764 = vst.msk [vmem:[#allocation3 + $0x168] sm:$0xff] %vm338, %v666
        %765 = vst.msk [vmem:[#allocation3 + $0x190] sm:$0xff] %vm338, %v678
        %766 = vst.msk [vmem:[#allocation3 + $0x1b8] sm:$0xff] %vm338, %v690
        %767 = vst.msk [vmem:[#allocation3 + $0x1e0] sm:$0xff] %vm338, %v702
        %768 = vst.msk [vmem:[#allocation3 + $0x208] sm:$0xff] %vm338, %v714
        %769 = vst.msk [vmem:[#allocation3 + $0x230] sm:$0xff] %vm338, %v726
        %770 = vst.msk [vmem:[#allocation3 + $0x258] sm:$0xff] %vm338, %v738
        %v771 = vld [vmem:[#allocation2 + $0x8] sm:$0xff]
        %v772 = vld [vmem:[#allocation2 + $0x20] sm:$0xff]
        %v773 = vld [vmem:[#allocation2 + $0x38] sm:$0xff]
        %v774 = vld [vmem:[#allocation2 + $0x50] sm:$0xff]
        %v775 = vld [vmem:[#allocation2 + $0x68] sm:$0xff]
        %v776 = vld [vmem:[#allocation2 + $0x80] sm:$0xff]
        %v777 = vld [vmem:[#allocation2 + $0x98] sm:$0xff]
        %v778 = vld [vmem:[#allocation2 + $0xb0] sm:$0xff]
        %v779 = vld [vmem:[#allocation2 + $0xc8] sm:$0xff]
        %v780 = vld [vmem:[#allocation2 + $0xe0] sm:$0xff]
        %v781 = vld [vmem:[#allocation2 + $0xf8] sm:$0xff]
        %v782 = vld [vmem:[#allocation2 + $0x110] sm:$0xff]
        %v783 = vld [vmem:[#allocation2 + $0x128] sm:$0xff]
        %v784 = vld [vmem:[#allocation2 + $0x140] sm:$0xff]
        %v785 = vld [vmem:[#allocation2 + $0x158] sm:$0xff]
        %v786 = vld [vmem:[#allocation2 + $0x170] sm:$0xff]
        %803 = vrot.lane.b32.xlu0 %v771, 64
        %v804 = vpop.permute.xlu0 %803
        %805 = vrot.lane.b32.xlu0 %v772, 64
        %v806 = vpop.permute.xlu0 %805
        %807 = vrot.lane.b32.xlu0 %v773, 64
        %v808 = vpop.permute.xlu0 %807
        %809 = vrot.lane.b32.xlu0 %v774, 64
        %v810 = vpop.permute.xlu0 %809
        %811 = vrot.lane.b32.xlu0 %v775, 64
        %v812 = vpop.permute.xlu0 %811
        %813 = vrot.lane.b32.xlu0 %v776, 64
        %v814 = vpop.permute.xlu0 %813
        %815 = vrot.lane.b32.xlu0 %v777, 64
        %v816 = vpop.permute.xlu0 %815
        %817 = vrot.lane.b32.xlu0 %v778, 64
        %v818 = vpop.permute.xlu0 %817
        %819 = vrot.lane.b32.xlu0 %v779, 64
        %v820 = vpop.permute.xlu0 %819
        %821 = vrot.lane.b32.xlu0 %v780, 64
        %v822 = vpop.permute.xlu0 %821
        %823 = vrot.lane.b32.xlu0 %v781, 64
        %v824 = vpop.permute.xlu0 %823
        %825 = vrot.lane.b32.xlu0 %v782, 64
        %v826 = vpop.permute.xlu0 %825
        %827 = vrot.lane.b32.xlu0 %v783, 64
        %v828 = vpop.permute.xlu0 %827
        %829 = vrot.lane.b32.xlu0 %v784, 64
        %v830 = vpop.permute.xlu0 %829
        %831 = vrot.lane.b32.xlu0 %v785, 64
        %v832 = vpop.permute.xlu0 %831
        %833 = vrot.lane.b32.xlu0 %v786, 64
        %v834 = vpop.permute.xlu0 %833
        %vm851 = vcmask 1048064
        %852 = vst.msk [vmem:[#allocation3] sm:$0xff] %vm851, %v804
        %853 = vst.msk [vmem:[#allocation3 + $0x28] sm:$0xff] %vm851, %v806
        %854 = vst.msk [vmem:[#allocation3 + $0x50] sm:$0xff] %vm851, %v808
        %855 = vst.msk [vmem:[#allocation3 + $0x78] sm:$0xff] %vm851, %v810
        %856 = vst.msk [vmem:[#allocation3 + $0xa0] sm:$0xff] %vm851, %v812
        %857 = vst.msk [vmem:[#allocation3 + $0xc8] sm:$0xff] %vm851, %v814
        %858 = vst.msk [vmem:[#allocation3 + $0xf0] sm:$0xff] %vm851, %v816
        %859 = vst.msk [vmem:[#allocation3 + $0x118] sm:$0xff] %vm851, %v818
        %860 = vst.msk [vmem:[#allocation3 + $0x140] sm:$0xff] %vm851, %v820
        %861 = vst.msk [vmem:[#allocation3 + $0x168] sm:$0xff] %vm851, %v822
        %862 = vst.msk [vmem:[#allocation3 + $0x190] sm:$0xff] %vm851, %v824
        %863 = vst.msk [vmem:[#allocation3 + $0x1b8] sm:$0xff] %vm851, %v826
        %864 = vst.msk [vmem:[#allocation3 + $0x1e0] sm:$0xff] %vm851, %v828
        %865 = vst.msk [vmem:[#allocation3 + $0x208] sm:$0xff] %vm851, %v830
        %866 = vst.msk [vmem:[#allocation3 + $0x230] sm:$0xff] %vm851, %v832
        %867 = vst.msk [vmem:[#allocation3 + $0x258] sm:$0xff] %vm851, %v834
        %v868 = vld [vmem:[#allocation2 + $0x8] sm:$0xff]
        %v869 = vld [vmem:[#allocation2 + $0x10] sm:$0x1]
        %v870 = vld [vmem:[#allocation2 + $0x20] sm:$0xff]
        %v871 = vld [vmem:[#allocation2 + $0x28] sm:$0x1]
        %v872 = vld [vmem:[#allocation2 + $0x38] sm:$0xff]
        %v873 = vld [vmem:[#allocation2 + $0x40] sm:$0x1]
        %v874 = vld [vmem:[#allocation2 + $0x50] sm:$0xff]
        %v875 = vld [vmem:[#allocation2 + $0x58] sm:$0x1]
        %v876 = vld [vmem:[#allocation2 + $0x68] sm:$0xff]
        %v877 = vld [vmem:[#allocation2 + $0x70] sm:$0x1]
        %v878 = vld [vmem:[#allocation2 + $0x80] sm:$0xff]
        %v879 = vld [vmem:[#allocation2 + $0x88] sm:$0x1]
        %v880 = vld [vmem:[#allocation2 + $0x98] sm:$0xff]
        %v881 = vld [vmem:[#allocation2 + $0xa0] sm:$0x1]
        %v882 = vld [vmem:[#allocation2 + $0xb0] sm:$0xff]
        %v883 = vld [vmem:[#allocation2 + $0xb8] sm:$0x1]
        %v884 = vld [vmem:[#allocation2 + $0xc8] sm:$0xff]
        %v885 = vld [vmem:[#allocation2 + $0xd0] sm:$0x1]
        %v886 = vld [vmem:[#allocation2 + $0xe0] sm:$0xff]
        %v887 = vld [vmem:[#allocation2 + $0xe8] sm:$0x1]
        %v888 = vld [vmem:[#allocation2 + $0xf8] sm:$0xff]
        %v889 = vld [vmem:[#allocation2 + $0x100] sm:$0x1]
        %v890 = vld [vmem:[#allocation2 + $0x110] sm:$0xff]
        %v891 = vld [vmem:[#allocation2 + $0x118] sm:$0x1]
        %v892 = vld [vmem:[#allocation2 + $0x128] sm:$0xff]
        %v893 = vld [vmem:[#allocation2 + $0x130] sm:$0x1]
        %v894 = vld [vmem:[#allocation2 + $0x140] sm:$0xff]
        %v895 = vld [vmem:[#allocation2 + $0x148] sm:$0x1]
        %v896 = vld [vmem:[#allocation2 + $0x158] sm:$0xff]
        %v897 = vld [vmem:[#allocation2 + $0x160] sm:$0x1]
        %v898 = vld [vmem:[#allocation2 + $0x170] sm:$0xff]
        %v899 = vld [vmem:[#allocation2 + $0x178] sm:$0x1]
        %vm900 = vsmask.f32 7424
        %v902 = vshrl.u32 %v868, 16
        %v904 = vshll.u32 %v868, 16
        %v906 = vrot.slane %v904, 1
        %v907 = vor.u32 %v902, %v906
        %v909 = vshll.u32 %v869, 16
        %v911 = vrot.slane %v909, 1
        %v912 = vsel %vm900, %v907, %v911
        %v914 = vshrl.u32 %v870, 16
        %v916 = vshll.u32 %v870, 16
        %v918 = vrot.slane %v916, 1
        %v919 = vor.u32 %v914, %v918
        %v921 = vshll.u32 %v871, 16
        %v923 = vrot.slane %v921, 1
        %v924 = vsel %vm900, %v919, %v923
        %v926 = vshrl.u32 %v872, 16
        %v928 = vshll.u32 %v872, 16
        %v930 = vrot.slane %v928, 1
        %v931 = vor.u32 %v926, %v930
        %v933 = vshll.u32 %v873, 16
        %v935 = vrot.slane %v933, 1
        %v936 = vsel %vm900, %v931, %v935
        %v938 = vshrl.u32 %v874, 16
        %v940 = vshll.u32 %v874, 16
        %v942 = vrot.slane %v940, 1
        %v943 = vor.u32 %v938, %v942
        %v945 = vshll.u32 %v875, 16
        %v947 = vrot.slane %v945, 1
        %v948 = vsel %vm900, %v943, %v947
        %v950 = vshrl.u32 %v876, 16
        %v952 = vshll.u32 %v876, 16
        %v954 = vrot.slane %v952, 1
        %v955 = vor.u32 %v950, %v954
        %v957 = vshll.u32 %v877, 16
        %v959 = vrot.slane %v957, 1
        %v960 = vsel %vm900, %v955, %v959
        %v962 = vshrl.u32 %v878, 16
        %v964 = vshll.u32 %v878, 16
        %v966 = vrot.slane %v964, 1
        %v967 = vor.u32 %v962, %v966
        %v969 = vshll.u32 %v879, 16
        %v971 = vrot.slane %v969, 1
        %v972 = vsel %vm900, %v967, %v971
        %v974 = vshrl.u32 %v880, 16
        %v976 = vshll.u32 %v880, 16
        %v978 = vrot.slane %v976, 1
        %v979 = vor.u32 %v974, %v978
        %v981 = vshll.u32 %v881, 16
        %v983 = vrot.slane %v981, 1
        %v984 = vsel %vm900, %v979, %v983
        %v986 = vshrl.u32 %v882, 16
        %v988 = vshll.u32 %v882, 16
        %v990 = vrot.slane %v988, 1
        %v991 = vor.u32 %v986, %v990
        %v993 = vshll.u32 %v883, 16
        %v995 = vrot.slane %v993, 1
        %v996 = vsel %vm900, %v991, %v995
        %v998 = vshrl.u32 %v884, 16
        %v1000 = vshll.u32 %v884, 16
        %v1002 = vrot.slane %v1000, 1
        %v1003 = vor.u32 %v998, %v1002
        %v1005 = vshll.u32 %v885, 16
        %v1007 = vrot.slane %v1005, 1
        %v1008 = vsel %vm900, %v1003, %v1007
        %v1010 = vshrl.u32 %v886, 16
        %v1012 = vshll.u32 %v886, 16
        %v1014 = vrot.slane %v1012, 1
        %v1015 = vor.u32 %v1010, %v1014
        %v1017 = vshll.u32 %v887, 16
        %v1019 = vrot.slane %v1017, 1
        %v1020 = vsel %vm900, %v1015, %v1019
        %v1022 = vshrl.u32 %v888, 16
        %v1024 = vshll.u32 %v888, 16
        %v1026 = vrot.slane %v1024, 1
        %v1027 = vor.u32 %v1022, %v1026
        %v1029 = vshll.u32 %v889, 16
        %v1031 = vrot.slane %v1029, 1
        %v1032 = vsel %vm900, %v1027, %v1031
        %v1034 = vshrl.u32 %v890, 16
        %v1036 = vshll.u32 %v890, 16
        %v1038 = vrot.slane %v1036, 1
        %v1039 = vor.u32 %v1034, %v1038
        %v1041 = vshll.u32 %v891, 16
        %v1043 = vrot.slane %v1041, 1
        %v1044 = vsel %vm900, %v1039, %v1043
        %v1046 = vshrl.u32 %v892, 16
        %v1048 = vshll.u32 %v892, 16
        %v1050 = vrot.slane %v1048, 1
        %v1051 = vor.u32 %v1046, %v1050
        %v1053 = vshll.u32 %v893, 16
        %v1055 = vrot.slane %v1053, 1
        %v1056 = vsel %vm900, %v1051, %v1055
        %v1058 = vshrl.u32 %v894, 16
        %v1060 = vshll.u32 %v894, 16
        %v1062 = vrot.slane %v1060, 1
        %v1063 = vor.u32 %v1058, %v1062
        %v1065 = vshll.u32 %v895, 16
        %v1067 = vrot.slane %v1065, 1
        %v1068 = vsel %vm900, %v1063, %v1067
        %v1070 = vshrl.u32 %v896, 16
        %v1072 = vshll.u32 %v896, 16
        %v1074 = vrot.slane %v1072, 1
        %v1075 = vor.u32 %v1070, %v1074
        %v1077 = vshll.u32 %v897, 16
        %v1079 = vrot.slane %v1077, 1
        %v1080 = vsel %vm900, %v1075, %v1079
        %v1082 = vshrl.u32 %v898, 16
        %v1084 = vshll.u32 %v898, 16
        %v1086 = vrot.slane %v1084, 1
        %v1087 = vor.u32 %v1082, %v1086
        %v1089 = vshll.u32 %v899, 16
        %v1091 = vrot.slane %v1089, 1
        %v1092 = vsel %vm900, %v1087, %v1091
        %1109 = vst.msk [vmem:[#allocation3 + $0x8] sm:$0xff] %vm338, %v912
        %1110 = vst.msk [vmem:[#allocation3 + $0x30] sm:$0xff] %vm338, %v924
        %1111 = vst.msk [vmem:[#allocation3 + $0x58] sm:$0xff] %vm338, %v936
        %1112 = vst.msk [vmem:[#allocation3 + $0x80] sm:$0xff] %vm338, %v948
        %1113 = vst.msk [vmem:[#allocation3 + $0xa8] sm:$0xff] %vm338, %v960
        %1114 = vst.msk [vmem:[#allocation3 + $0xd0] sm:$0xff] %vm338, %v972
        %1115 = vst.msk [vmem:[#allocation3 + $0xf8] sm:$0xff] %vm338, %v984
        %1116 = vst.msk [vmem:[#allocation3 + $0x120] sm:$0xff] %vm338, %v996
        %1117 = vst.msk [vmem:[#allocation3 + $0x148] sm:$0xff] %vm338, %v1008
        %1118 = vst.msk [vmem:[#allocation3 + $0x170] sm:$0xff] %vm338, %v1020
        %1119 = vst.msk [vmem:[#allocation3 + $0x198] sm:$0xff] %vm338, %v1032
        %1120 = vst.msk [vmem:[#allocation3 + $0x1c0] sm:$0xff] %vm338, %v1044
        %1121 = vst.msk [vmem:[#allocation3 + $0x1e8] sm:$0xff] %vm338, %v1056
        %1122 = vst.msk [vmem:[#allocation3 + $0x210] sm:$0xff] %vm338, %v1068
        %1123 = vst.msk [vmem:[#allocation3 + $0x238] sm:$0xff] %vm338, %v1080
        %1124 = vst.msk [vmem:[#allocation3 + $0x260] sm:$0xff] %vm338, %v1092
        %v1125 = vld [vmem:[%s354] sm:$0x80]
        %v1126 = vld [vmem:[%s354 + $0x8] sm:$0xff]
        %v1127 = vld [vmem:[%s354 + $0x18] sm:$0x80]
        %v1128 = vld [vmem:[%s354 + $0x20] sm:$0xff]
        %v1129 = vld [vmem:[%s354 + $0x30] sm:$0x80]
        %v1130 = vld [vmem:[%s354 + $0x38] sm:$0xff]
        %v1131 = vld [vmem:[%s354 + $0x48] sm:$0x80]
        %v1132 = vld [vmem:[%s354 + $0x50] sm:$0xff]
        %v1133 = vld [vmem:[%s354 + $0x60] sm:$0x80]
        %v1134 = vld [vmem:[%s354 + $0x68] sm:$0xff]
        %v1135 = vld [vmem:[%s354 + $0x78] sm:$0x80]
        %v1136 = vld [vmem:[%s354 + $0x80] sm:$0xff]
        %v1137 = vld [vmem:[%s354 + $0x90] sm:$0x80]
        %v1138 = vld [vmem:[%s354 + $0x98] sm:$0xff]
        %v1139 = vld [vmem:[%s354 + $0xa8] sm:$0x80]
        %v1140 = vld [vmem:[%s354 + $0xb0] sm:$0xff]
        %v1141 = vld [vmem:[%s354 + $0xc0] sm:$0x80]
        %v1142 = vld [vmem:[%s354 + $0xc8] sm:$0xff]
        %v1143 = vld [vmem:[%s354 + $0xd8] sm:$0x80]
        %v1144 = vld [vmem:[%s354 + $0xe0] sm:$0xff]
        %v1145 = vld [vmem:[%s354 + $0xf0] sm:$0x80]
        %v1146 = vld [vmem:[%s354 + $0xf8] sm:$0xff]
        %v1147 = vld [vmem:[%s354 + $0x108] sm:$0x80]
        %v1148 = vld [vmem:[%s354 + $0x110] sm:$0xff]
        %v1149 = vld [vmem:[%s354 + $0x120] sm:$0x80]
        %v1150 = vld [vmem:[%s354 + $0x128] sm:$0xff]
        %v1151 = vld [vmem:[%s354 + $0x138] sm:$0x80]
        %v1152 = vld [vmem:[%s354 + $0x140] sm:$0xff]
        %v1153 = vld [vmem:[%s354 + $0x150] sm:$0x80]
        %v1154 = vld [vmem:[%s354 + $0x158] sm:$0xff]
        %v1155 = vld [vmem:[%s354 + $0x168] sm:$0x80]
        %v1156 = vld [vmem:[%s354 + $0x170] sm:$0xff]
        %v1158 = vshrl.u32 %v1125, 16
        %v1160 = vrot.slane %v1158, 7
        %v1162 = vshrl.u32 %v1126, 16
        %v1164 = vrot.slane %v1162, 7
        %v1165 = vshll.u32 %v1126, 16
        %v1167 = vor.u32 %v1164, %v1165
        %v1168 = vsel %vm341, %v1160, %v1167
        %v1170 = vshrl.u32 %v1127, 16
        %v1172 = vrot.slane %v1170, 7
        %v1174 = vshrl.u32 %v1128, 16
        %v1176 = vrot.slane %v1174, 7
        %v1177 = vshll.u32 %v1128, 16
        %v1179 = vor.u32 %v1176, %v1177
        %v1180 = vsel %vm341, %v1172, %v1179
        %v1182 = vshrl.u32 %v1129, 16
        %v1184 = vrot.slane %v1182, 7
        %v1186 = vshrl.u32 %v1130, 16
        %v1188 = vrot.slane %v1186, 7
        %v1189 = vshll.u32 %v1130, 16
        %v1191 = vor.u32 %v1188, %v1189
        %v1192 = vsel %vm341, %v1184, %v1191
        %v1194 = vshrl.u32 %v1131, 16
        %v1196 = vrot.slane %v1194, 7
        %v1198 = vshrl.u32 %v1132, 16
        %v1200 = vrot.slane %v1198, 7
        %v1201 = vshll.u32 %v1132, 16
        %v1203 = vor.u32 %v1200, %v1201
        %v1204 = vsel %vm341, %v1196, %v1203
        %v1206 = vshrl.u32 %v1133, 16
        %v1208 = vrot.slane %v1206, 7
        %v1210 = vshrl.u32 %v1134, 16
        %v1212 = vrot.slane %v1210, 7
        %v1213 = vshll.u32 %v1134, 16
        %v1215 = vor.u32 %v1212, %v1213
        %v1216 = vsel %vm341, %v1208, %v1215
        %v1218 = vshrl.u32 %v1135, 16
        %v1220 = vrot.slane %v1218, 7
        %v1222 = vshrl.u32 %v1136, 16
        %v1224 = vrot.slane %v1222, 7
        %v1225 = vshll.u32 %v1136, 16
        %v1227 = vor.u32 %v1224, %v1225
        %v1228 = vsel %vm341, %v1220, %v1227
        %v1230 = vshrl.u32 %v1137, 16
        %v1232 = vrot.slane %v1230, 7
        %v1234 = vshrl.u32 %v1138, 16
        %v1236 = vrot.slane %v1234, 7
        %v1237 = vshll.u32 %v1138, 16
        %v1239 = vor.u32 %v1236, %v1237
        %v1240 = vsel %vm341, %v1232, %v1239
        %v1242 = vshrl.u32 %v1139, 16
        %v1244 = vrot.slane %v1242, 7
        %v1246 = vshrl.u32 %v1140, 16
        %v1248 = vrot.slane %v1246, 7
        %v1249 = vshll.u32 %v1140, 16
        %v1251 = vor.u32 %v1248, %v1249
        %v1252 = vsel %vm341, %v1244, %v1251
        %v1254 = vshrl.u32 %v1141, 16
        %v1256 = vrot.slane %v1254, 7
        %v1258 = vshrl.u32 %v1142, 16
        %v1260 = vrot.slane %v1258, 7
        %v1261 = vshll.u32 %v1142, 16
        %v1263 = vor.u32 %v1260, %v1261
        %v1264 = vsel %vm341, %v1256, %v1263
        %v1266 = vshrl.u32 %v1143, 16
        %v1268 = vrot.slane %v1266, 7
        %v1270 = vshrl.u32 %v1144, 16
        %v1272 = vrot.slane %v1270, 7
        %v1273 = vshll.u32 %v1144, 16
        %v1275 = vor.u32 %v1272, %v1273
        %v1276 = vsel %vm341, %v1268, %v1275
        %v1278 = vshrl.u32 %v1145, 16
        %v1280 = vrot.slane %v1278, 7
        %v1282 = vshrl.u32 %v1146, 16
        %v1284 = vrot.slane %v1282, 7
        %v1285 = vshll.u32 %v1146, 16
        %v1287 = vor.u32 %v1284, %v1285
        %v1288 = vsel %vm341, %v1280, %v1287
        %v1290 = vshrl.u32 %v1147, 16
        %v1292 = vrot.slane %v1290, 7
        %v1294 = vshrl.u32 %v1148, 16
        %v1296 = vrot.slane %v1294, 7
        %v1297 = vshll.u32 %v1148, 16
        %v1299 = vor.u32 %v1296, %v1297
        %v1300 = vsel %vm341, %v1292, %v1299
        %v1302 = vshrl.u32 %v1149, 16
        %v1304 = vrot.slane %v1302, 7
        %v1306 = vshrl.u32 %v1150, 16
        %v1308 = vrot.slane %v1306, 7
        %v1309 = vshll.u32 %v1150, 16
        %v1311 = vor.u32 %v1308, %v1309
        %v1312 = vsel %vm341, %v1304, %v1311
        %v1314 = vshrl.u32 %v1151, 16
        %v1316 = vrot.slane %v1314, 7
        %v1318 = vshrl.u32 %v1152, 16
        %v1320 = vrot.slane %v1318, 7
        %v1321 = vshll.u32 %v1152, 16
        %v1323 = vor.u32 %v1320, %v1321
        %v1324 = vsel %vm341, %v1316, %v1323
        %v1326 = vshrl.u32 %v1153, 16
        %v1328 = vrot.slane %v1326, 7
        %v1330 = vshrl.u32 %v1154, 16
        %v1332 = vrot.slane %v1330, 7
        %v1333 = vshll.u32 %v1154, 16
        %v1335 = vor.u32 %v1332, %v1333
        %v1336 = vsel %vm341, %v1328, %v1335
        %v1338 = vshrl.u32 %v1155, 16
        %v1340 = vrot.slane %v1338, 7
        %v1342 = vshrl.u32 %v1156, 16
        %v1344 = vrot.slane %v1342, 7
        %v1345 = vshll.u32 %v1156, 16
        %v1347 = vor.u32 %v1344, %v1345
        %v1348 = vsel %vm341, %v1340, %v1347
        %1349 = vrot.lane.b32.xlu0 %v1168, 64
        %v1350 = vpop.permute.xlu0 %1349
        %1351 = vrot.lane.b32.xlu0 %v1180, 64
        %v1352 = vpop.permute.xlu0 %1351
        %1353 = vrot.lane.b32.xlu0 %v1192, 64
        %v1354 = vpop.permute.xlu0 %1353
        %1355 = vrot.lane.b32.xlu0 %v1204, 64
        %v1356 = vpop.permute.xlu0 %1355
        %1357 = vrot.lane.b32.xlu0 %v1216, 64
        %v1358 = vpop.permute.xlu0 %1357
        %1359 = vrot.lane.b32.xlu0 %v1228, 64
        %v1360 = vpop.permute.xlu0 %1359
        %1361 = vrot.lane.b32.xlu0 %v1240, 64
        %v1362 = vpop.permute.xlu0 %1361
        %1363 = vrot.lane.b32.xlu0 %v1252, 64
        %v1364 = vpop.permute.xlu0 %1363
        %1365 = vrot.lane.b32.xlu0 %v1264, 64
        %v1366 = vpop.permute.xlu0 %1365
        %1367 = vrot.lane.b32.xlu0 %v1276, 64
        %v1368 = vpop.permute.xlu0 %1367
        %1369 = vrot.lane.b32.xlu0 %v1288, 64
        %v1370 = vpop.permute.xlu0 %1369
        %1371 = vrot.lane.b32.xlu0 %v1300, 64
        %v1372 = vpop.permute.xlu0 %1371
        %1373 = vrot.lane.b32.xlu0 %v1312, 64
        %v1374 = vpop.permute.xlu0 %1373
        %1375 = vrot.lane.b32.xlu0 %v1324, 64
        %v1376 = vpop.permute.xlu0 %1375
        %1377 = vrot.lane.b32.xlu0 %v1336, 64
        %v1378 = vpop.permute.xlu0 %1377
        %1379 = vrot.lane.b32.xlu0 %v1348, 64
        %v1380 = vpop.permute.xlu0 %1379
        %1397 = vst.msk [vmem:[#allocation3 + $0x8] sm:$0xff] %vm851, %v1350
        %1398 = vst.msk [vmem:[#allocation3 + $0x30] sm:$0xff] %vm851, %v1352
        %1399 = vst.msk [vmem:[#allocation3 + $0x58] sm:$0xff] %vm851, %v1354
        %1400 = vst.msk [vmem:[#allocation3 + $0x80] sm:$0xff] %vm851, %v1356
        %1401 = vst.msk [vmem:[#allocation3 + $0xa8] sm:$0xff] %vm851, %v1358
        %1402 = vst.msk [vmem:[#allocation3 + $0xd0] sm:$0xff] %vm851, %v1360
        %1403 = vst.msk [vmem:[#allocation3 + $0xf8] sm:$0xff] %vm851, %v1362
        %1404 = vst.msk [vmem:[#allocation3 + $0x120] sm:$0xff] %vm851, %v1364
        %1405 = vst.msk [vmem:[#allocation3 + $0x148] sm:$0xff] %vm851, %v1366
        %1406 = vst.msk [vmem:[#allocation3 + $0x170] sm:$0xff] %vm851, %v1368
        %1407 = vst.msk [vmem:[#allocation3 + $0x198] sm:$0xff] %vm851, %v1370
        %1408 = vst.msk [vmem:[#allocation3 + $0x1c0] sm:$0xff] %vm851, %v1372
        %1409 = vst.msk [vmem:[#allocation3 + $0x1e8] sm:$0xff] %vm851, %v1374
        %1410 = vst.msk [vmem:[#allocation3 + $0x210] sm:$0xff] %vm851, %v1376
        %1411 = vst.msk [vmem:[#allocation3 + $0x238] sm:$0xff] %vm851, %v1378
        %1412 = vst.msk [vmem:[#allocation3 + $0x260] sm:$0xff] %vm851, %v1380
        %v1413 = vld [vmem:[%s354 + $0x8] sm:$0xff]
        %v1414 = vld [vmem:[%s354 + $0x20] sm:$0xff]
        %v1415 = vld [vmem:[%s354 + $0x38] sm:$0xff]
        %v1416 = vld [vmem:[%s354 + $0x50] sm:$0xff]
        %v1417 = vld [vmem:[%s354 + $0x68] sm:$0xff]
        %v1418 = vld [vmem:[%s354 + $0x80] sm:$0xff]
        %v1419 = vld [vmem:[%s354 + $0x98] sm:$0xff]
        %v1420 = vld [vmem:[%s354 + $0xb0] sm:$0xff]
        %v1421 = vld [vmem:[%s354 + $0xc8] sm:$0xff]
        %v1422 = vld [vmem:[%s354 + $0xe0] sm:$0xff]
        %v1423 = vld [vmem:[%s354 + $0xf8] sm:$0xff]
        %v1424 = vld [vmem:[%s354 + $0x110] sm:$0xff]
        %v1425 = vld [vmem:[%s354 + $0x128] sm:$0xff]
        %v1426 = vld [vmem:[%s354 + $0x140] sm:$0xff]
        %v1427 = vld [vmem:[%s354 + $0x158] sm:$0xff]
        %v1428 = vld [vmem:[%s354 + $0x170] sm:$0xff]
        %1429 = vst.msk [vmem:[#allocation3 + $0x10] sm:$0xff] %vm338, %v1413
        %1430 = vst.msk [vmem:[#allocation3 + $0x38] sm:$0xff] %vm338, %v1414
        %1431 = vst.msk [vmem:[#allocation3 + $0x60] sm:$0xff] %vm338, %v1415
        %1432 = vst.msk [vmem:[#allocation3 + $0x88] sm:$0xff] %vm338, %v1416
        %1433 = vst.msk [vmem:[#allocation3 + $0xb0] sm:$0xff] %vm338, %v1417
        %1434 = vst.msk [vmem:[#allocation3 + $0xd8] sm:$0xff] %vm338, %v1418
        %1435 = vst.msk [vmem:[#allocation3 + $0x100] sm:$0xff] %vm338, %v1419
        %1436 = vst.msk [vmem:[#allocation3 + $0x128] sm:$0xff] %vm338, %v1420
        %1437 = vst.msk [vmem:[#allocation3 + $0x150] sm:$0xff] %vm338, %v1421
        %1438 = vst.msk [vmem:[#allocation3 + $0x178] sm:$0xff] %vm338, %v1422
        %1439 = vst.msk [vmem:[#allocation3 + $0x1a0] sm:$0xff] %vm338, %v1423
        %1440 = vst.msk [vmem:[#allocation3 + $0x1c8] sm:$0xff] %vm338, %v1424
        %1441 = vst.msk [vmem:[#allocation3 + $0x1f0] sm:$0xff] %vm338, %v1425
        %1442 = vst.msk [vmem:[#allocation3 + $0x218] sm:$0xff] %vm338, %v1426
        %1443 = vst.msk [vmem:[#allocation3 + $0x240] sm:$0xff] %vm338, %v1427
        %1444 = vst.msk [vmem:[#allocation3 + $0x268] sm:$0xff] %vm338, %v1428
        %v1445 = vld [vmem:[%s354 + $0x8] sm:$0xff]
        %v1446 = vld [vmem:[%s354 + $0x10] sm:$0x1]
        %v1447 = vld [vmem:[%s354 + $0x20] sm:$0xff]
        %v1448 = vld [vmem:[%s354 + $0x28] sm:$0x1]
        %v1449 = vld [vmem:[%s354 + $0x38] sm:$0xff]
        %v1450 = vld [vmem:[%s354 + $0x40] sm:$0x1]
        %v1451 = vld [vmem:[%s354 + $0x50] sm:$0xff]
        %v1452 = vld [vmem:[%s354 + $0x58] sm:$0x1]
        %v1453 = vld [vmem:[%s354 + $0x68] sm:$0xff]
        %v1454 = vld [vmem:[%s354 + $0x70] sm:$0x1]
        %v1455 = vld [vmem:[%s354 + $0x80] sm:$0xff]
        %v1456 = vld [vmem:[%s354 + $0x88] sm:$0x1]
        %v1457 = vld [vmem:[%s354 + $0x98] sm:$0xff]
        %v1458 = vld [vmem:[%s354 + $0xa0] sm:$0x1]
        %v1459 = vld [vmem:[%s354 + $0xb0] sm:$0xff]
        %v1460 = vld [vmem:[%s354 + $0xb8] sm:$0x1]
        %v1461 = vld [vmem:[%s354 + $0xc8] sm:$0xff]
        %v1462 = vld [vmem:[%s354 + $0xd0] sm:$0x1]
        %v1463 = vld [vmem:[%s354 + $0xe0] sm:$0xff]
        %v1464 = vld [vmem:[%s354 + $0xe8] sm:$0x1]
        %v1465 = vld [vmem:[%s354 + $0xf8] sm:$0xff]
        %v1466 = vld [vmem:[%s354 + $0x100] sm:$0x1]
        %v1467 = vld [vmem:[%s354 + $0x110] sm:$0xff]
        %v1468 = vld [vmem:[%s354 + $0x118] sm:$0x1]
        %v1469 = vld [vmem:[%s354 + $0x128] sm:$0xff]
        %v1470 = vld [vmem:[%s354 + $0x130] sm:$0x1]
        %v1471 = vld [vmem:[%s354 + $0x140] sm:$0xff]
        %v1472 = vld [vmem:[%s354 + $0x148] sm:$0x1]
        %v1473 = vld [vmem:[%s354 + $0x158] sm:$0xff]
        %v1474 = vld [vmem:[%s354 + $0x160] sm:$0x1]
        %v1475 = vld [vmem:[%s354 + $0x170] sm:$0xff]
        %v1476 = vld [vmem:[%s354 + $0x178] sm:$0x1]
        %v1478 = vshrl.u32 %v1445, 16
        %v1480 = vshll.u32 %v1445, 16
        %v1482 = vrot.slane %v1480, 1
        %v1483 = vor.u32 %v1478, %v1482
        %v1485 = vshll.u32 %v1446, 16
        %v1487 = vrot.slane %v1485, 1
        %v1488 = vsel %vm900, %v1483, %v1487
        %v1490 = vshrl.u32 %v1447, 16
        %v1492 = vshll.u32 %v1447, 16
        %v1494 = vrot.slane %v1492, 1
        %v1495 = vor.u32 %v1490, %v1494
        %v1497 = vshll.u32 %v1448, 16
        %v1499 = vrot.slane %v1497, 1
        %v1500 = vsel %vm900, %v1495, %v1499
        %v1502 = vshrl.u32 %v1449, 16
        %v1504 = vshll.u32 %v1449, 16
        %v1506 = vrot.slane %v1504, 1
        %v1507 = vor.u32 %v1502, %v1506
        %v1509 = vshll.u32 %v1450, 16
        %v1511 = vrot.slane %v1509, 1
        %v1512 = vsel %vm900, %v1507, %v1511
        %v1514 = vshrl.u32 %v1451, 16
        %v1516 = vshll.u32 %v1451, 16
        %v1518 = vrot.slane %v1516, 1
        %v1519 = vor.u32 %v1514, %v1518
        %v1521 = vshll.u32 %v1452, 16
        %v1523 = vrot.slane %v1521, 1
        %v1524 = vsel %vm900, %v1519, %v1523
        %v1526 = vshrl.u32 %v1453, 16
        %v1528 = vshll.u32 %v1453, 16
        %v1530 = vrot.slane %v1528, 1
        %v1531 = vor.u32 %v1526, %v1530
        %v1533 = vshll.u32 %v1454, 16
        %v1535 = vrot.slane %v1533, 1
        %v1536 = vsel %vm900, %v1531, %v1535
        %v1538 = vshrl.u32 %v1455, 16
        %v1540 = vshll.u32 %v1455, 16
        %v1542 = vrot.slane %v1540, 1
        %v1543 = vor.u32 %v1538, %v1542
        %v1545 = vshll.u32 %v1456, 16
        %v1547 = vrot.slane %v1545, 1
        %v1548 = vsel %vm900, %v1543, %v1547
        %v1550 = vshrl.u32 %v1457, 16
        %v1552 = vshll.u32 %v1457, 16
        %v1554 = vrot.slane %v1552, 1
        %v1555 = vor.u32 %v1550, %v1554
        %v1557 = vshll.u32 %v1458, 16
        %v1559 = vrot.slane %v1557, 1
        %v1560 = vsel %vm900, %v1555, %v1559
        %v1562 = vshrl.u32 %v1459, 16
        %v1564 = vshll.u32 %v1459, 16
        %v1566 = vrot.slane %v1564, 1
        %v1567 = vor.u32 %v1562, %v1566
        %v1569 = vshll.u32 %v1460, 16
        %v1571 = vrot.slane %v1569, 1
        %v1572 = vsel %vm900, %v1567, %v1571
        %v1574 = vshrl.u32 %v1461, 16
        %v1576 = vshll.u32 %v1461, 16
        %v1578 = vrot.slane %v1576, 1
        %v1579 = vor.u32 %v1574, %v1578
        %v1581 = vshll.u32 %v1462, 16
        %v1583 = vrot.slane %v1581, 1
        %v1584 = vsel %vm900, %v1579, %v1583
        %v1586 = vshrl.u32 %v1463, 16
        %v1588 = vshll.u32 %v1463, 16
        %v1590 = vrot.slane %v1588, 1
        %v1591 = vor.u32 %v1586, %v1590
        %v1593 = vshll.u32 %v1464, 16
        %v1595 = vrot.slane %v1593, 1
        %v1596 = vsel %vm900, %v1591, %v1595
        %v1598 = vshrl.u32 %v1465, 16
        %v1600 = vshll.u32 %v1465, 16
        %v1602 = vrot.slane %v1600, 1
        %v1603 = vor.u32 %v1598, %v1602
        %v1605 = vshll.u32 %v1466, 16
        %v1607 = vrot.slane %v1605, 1
        %v1608 = vsel %vm900, %v1603, %v1607
        %v1610 = vshrl.u32 %v1467, 16
        %v1612 = vshll.u32 %v1467, 16
        %v1614 = vrot.slane %v1612, 1
        %v1615 = vor.u32 %v1610, %v1614
        %v1617 = vshll.u32 %v1468, 16
        %v1619 = vrot.slane %v1617, 1
        %v1620 = vsel %vm900, %v1615, %v1619
        %v1622 = vshrl.u32 %v1469, 16
        %v1624 = vshll.u32 %v1469, 16
        %v1626 = vrot.slane %v1624, 1
        %v1627 = vor.u32 %v1622, %v1626
        %v1629 = vshll.u32 %v1470, 16
        %v1631 = vrot.slane %v1629, 1
        %v1632 = vsel %vm900, %v1627, %v1631
        %v1634 = vshrl.u32 %v1471, 16
        %v1636 = vshll.u32 %v1471, 16
        %v1638 = vrot.slane %v1636, 1
        %v1639 = vor.u32 %v1634, %v1638
        %v1641 = vshll.u32 %v1472, 16
        %v1643 = vrot.slane %v1641, 1
        %v1644 = vsel %vm900, %v1639, %v1643
        %v1646 = vshrl.u32 %v1473, 16
        %v1648 = vshll.u32 %v1473, 16
        %v1650 = vrot.slane %v1648, 1
        %v1651 = vor.u32 %v1646, %v1650
        %v1653 = vshll.u32 %v1474, 16
        %v1655 = vrot.slane %v1653, 1
        %v1656 = vsel %vm900, %v1651, %v1655
        %v1658 = vshrl.u32 %v1475, 16
        %v1660 = vshll.u32 %v1475, 16
        %v1662 = vrot.slane %v1660, 1
        %v1663 = vor.u32 %v1658, %v1662
        %v1665 = vshll.u32 %v1476, 16
        %v1667 = vrot.slane %v1665, 1
        %v1668 = vsel %vm900, %v1663, %v1667
        %1669 = vrot.lane.b32.xlu0 %v1488, 64
        %v1670 = vpop.permute.xlu0 %1669
        %1671 = vrot.lane.b32.xlu0 %v1500, 64
        %v1672 = vpop.permute.xlu0 %1671
        %1673 = vrot.lane.b32.xlu0 %v1512, 64
        %v1674 = vpop.permute.xlu0 %1673
        %1675 = vrot.lane.b32.xlu0 %v1524, 64
        %v1676 = vpop.permute.xlu0 %1675
        %1677 = vrot.lane.b32.xlu0 %v1536, 64
        %v1678 = vpop.permute.xlu0 %1677
        %1679 = vrot.lane.b32.xlu0 %v1548, 64
        %v1680 = vpop.permute.xlu0 %1679
        %1681 = vrot.lane.b32.xlu0 %v1560, 64
        %v1682 = vpop.permute.xlu0 %1681
        %1683 = vrot.lane.b32.xlu0 %v1572, 64
        %v1684 = vpop.permute.xlu0 %1683
        %1685 = vrot.lane.b32.xlu0 %v1584, 64
        %v1686 = vpop.permute.xlu0 %1685
        %1687 = vrot.lane.b32.xlu0 %v1596, 64
        %v1688 = vpop.permute.xlu0 %1687
        %1689 = vrot.lane.b32.xlu0 %v1608, 64
        %v1690 = vpop.permute.xlu0 %1689
        %1691 = vrot.lane.b32.xlu0 %v1620, 64
        %v1692 = vpop.permute.xlu0 %1691
        %1693 = vrot.lane.b32.xlu0 %v1632, 64
        %v1694 = vpop.permute.xlu0 %1693
        %1695 = vrot.lane.b32.xlu0 %v1644, 64
        %v1696 = vpop.permute.xlu0 %1695
        %1697 = vrot.lane.b32.xlu0 %v1656, 64
        %v1698 = vpop.permute.xlu0 %1697
        %1699 = vrot.lane.b32.xlu0 %v1668, 64
        %v1700 = vpop.permute.xlu0 %1699
        %1717 = vst.msk [vmem:[#allocation3 + $0x10] sm:$0xff] %vm851, %v1670
        %1718 = vst.msk [vmem:[#allocation3 + $0x38] sm:$0xff] %vm851, %v1672
        %1719 = vst.msk [vmem:[#allocation3 + $0x60] sm:$0xff] %vm851, %v1674
        %1720 = vst.msk [vmem:[#allocation3 + $0x88] sm:$0xff] %vm851, %v1676
        %1721 = vst.msk [vmem:[#allocation3 + $0xb0] sm:$0xff] %vm851, %v1678
        %1722 = vst.msk [vmem:[#allocation3 + $0xd8] sm:$0xff] %vm851, %v1680
        %1723 = vst.msk [vmem:[#allocation3 + $0x100] sm:$0xff] %vm851, %v1682
        %1724 = vst.msk [vmem:[#allocation3 + $0x128] sm:$0xff] %vm851, %v1684
        %1725 = vst.msk [vmem:[#allocation3 + $0x150] sm:$0xff] %vm851, %v1686
        %1726 = vst.msk [vmem:[#allocation3 + $0x178] sm:$0xff] %vm851, %v1688
        %1727 = vst.msk [vmem:[#allocation3 + $0x1a0] sm:$0xff] %vm851, %v1690
        %1728 = vst.msk [vmem:[#allocation3 + $0x1c8] sm:$0xff] %vm851, %v1692
        %1729 = vst.msk [vmem:[#allocation3 + $0x1f0] sm:$0xff] %vm851, %v1694
        %1730 = vst.msk [vmem:[#allocation3 + $0x218] sm:$0xff] %vm851, %v1696
        %1731 = vst.msk [vmem:[#allocation3 + $0x240] sm:$0xff] %vm851, %v1698
        %1732 = vst.msk [vmem:[#allocation3 + $0x268] sm:$0xff] %vm851, %v1700
        %s1733 = scalar_lea.vmem [#allocation2], 48
        %v1734 = vld [vmem:[%s1733] sm:$0x80]
        %v1735 = vld [vmem:[%s1733 + $0x8] sm:$0xff]
        %v1736 = vld [vmem:[%s1733 + $0x18] sm:$0x80]
        %v1737 = vld [vmem:[%s1733 + $0x20] sm:$0xff]
        %v1738 = vld [vmem:[%s1733 + $0x30] sm:$0x80]
        %v1739 = vld [vmem:[%s1733 + $0x38] sm:$0xff]
        %v1740 = vld [vmem:[%s1733 + $0x48] sm:$0x80]
        %v1741 = vld [vmem:[%s1733 + $0x50] sm:$0xff]
        %v1742 = vld [vmem:[%s1733 + $0x60] sm:$0x80]
        %v1743 = vld [vmem:[%s1733 + $0x68] sm:$0xff]
        %v1744 = vld [vmem:[%s1733 + $0x78] sm:$0x80]
        %v1745 = vld [vmem:[%s1733 + $0x80] sm:$0xff]
        %v1746 = vld [vmem:[%s1733 + $0x90] sm:$0x80]
        %v1747 = vld [vmem:[%s1733 + $0x98] sm:$0xff]
        %v1748 = vld [vmem:[%s1733 + $0xa8] sm:$0x80]
        %v1749 = vld [vmem:[%s1733 + $0xb0] sm:$0xff]
        %v1750 = vld [vmem:[%s1733 + $0xc0] sm:$0x80]
        %v1751 = vld [vmem:[%s1733 + $0xc8] sm:$0xff]
        %v1752 = vld [vmem:[%s1733 + $0xd8] sm:$0x80]
        %v1753 = vld [vmem:[%s1733 + $0xe0] sm:$0xff]
        %v1754 = vld [vmem:[%s1733 + $0xf0] sm:$0x80]
        %v1755 = vld [vmem:[%s1733 + $0xf8] sm:$0xff]
        %v1756 = vld [vmem:[%s1733 + $0x108] sm:$0x80]
        %v1757 = vld [vmem:[%s1733 + $0x110] sm:$0xff]
        %v1758 = vld [vmem:[%s1733 + $0x120] sm:$0x80]
        %v1759 = vld [vmem:[%s1733 + $0x128] sm:$0xff]
        %v1760 = vld [vmem:[%s1733 + $0x138] sm:$0x80]
        %v1761 = vld [vmem:[%s1733 + $0x140] sm:$0xff]
        %v1762 = vld [vmem:[%s1733 + $0x150] sm:$0x80]
        %v1763 = vld [vmem:[%s1733 + $0x158] sm:$0xff]
        %v1764 = vld [vmem:[%s1733 + $0x168] sm:$0x80]
        %v1765 = vld [vmem:[%s1733 + $0x170] sm:$0xff]
        %v1767 = vshrl.u32 %v1734, 16
        %v1769 = vrot.slane %v1767, 7
        %v1771 = vshrl.u32 %v1735, 16
        %v1773 = vrot.slane %v1771, 7
        %v1774 = vshll.u32 %v1735, 16
        %v1776 = vor.u32 %v1773, %v1774
        %v1777 = vsel %vm341, %v1769, %v1776
        %v1779 = vshrl.u32 %v1736, 16
        %v1781 = vrot.slane %v1779, 7
        %v1783 = vshrl.u32 %v1737, 16
        %v1785 = vrot.slane %v1783, 7
        %v1786 = vshll.u32 %v1737, 16
        %v1788 = vor.u32 %v1785, %v1786
        %v1789 = vsel %vm341, %v1781, %v1788
        %v1791 = vshrl.u32 %v1738, 16
        %v1793 = vrot.slane %v1791, 7
        %v1795 = vshrl.u32 %v1739, 16
        %v1797 = vrot.slane %v1795, 7
        %v1798 = vshll.u32 %v1739, 16
        %v1800 = vor.u32 %v1797, %v1798
        %v1801 = vsel %vm341, %v1793, %v1800
        %v1803 = vshrl.u32 %v1740, 16
        %v1805 = vrot.slane %v1803, 7
        %v1807 = vshrl.u32 %v1741, 16
        %v1809 = vrot.slane %v1807, 7
        %v1810 = vshll.u32 %v1741, 16
        %v1812 = vor.u32 %v1809, %v1810
        %v1813 = vsel %vm341, %v1805, %v1812
        %v1815 = vshrl.u32 %v1742, 16
        %v1817 = vrot.slane %v1815, 7
        %v1819 = vshrl.u32 %v1743, 16
        %v1821 = vrot.slane %v1819, 7
        %v1822 = vshll.u32 %v1743, 16
        %v1824 = vor.u32 %v1821, %v1822
        %v1825 = vsel %vm341, %v1817, %v1824
        %v1827 = vshrl.u32 %v1744, 16
        %v1829 = vrot.slane %v1827, 7
        %v1831 = vshrl.u32 %v1745, 16
        %v1833 = vrot.slane %v1831, 7
        %v1834 = vshll.u32 %v1745, 16
        %v1836 = vor.u32 %v1833, %v1834
        %v1837 = vsel %vm341, %v1829, %v1836
        %v1839 = vshrl.u32 %v1746, 16
        %v1841 = vrot.slane %v1839, 7
        %v1843 = vshrl.u32 %v1747, 16
        %v1845 = vrot.slane %v1843, 7
        %v1846 = vshll.u32 %v1747, 16
        %v1848 = vor.u32 %v1845, %v1846
        %v1849 = vsel %vm341, %v1841, %v1848
        %v1851 = vshrl.u32 %v1748, 16
        %v1853 = vrot.slane %v1851, 7
        %v1855 = vshrl.u32 %v1749, 16
        %v1857 = vrot.slane %v1855, 7
        %v1858 = vshll.u32 %v1749, 16
        %v1860 = vor.u32 %v1857, %v1858
        %v1861 = vsel %vm341, %v1853, %v1860
        %v1863 = vshrl.u32 %v1750, 16
        %v1865 = vrot.slane %v1863, 7
        %v1867 = vshrl.u32 %v1751, 16
        %v1869 = vrot.slane %v1867, 7
        %v1870 = vshll.u32 %v1751, 16
        %v1872 = vor.u32 %v1869, %v1870
        %v1873 = vsel %vm341, %v1865, %v1872
        %v1875 = vshrl.u32 %v1752, 16
        %v1877 = vrot.slane %v1875, 7
        %v1879 = vshrl.u32 %v1753, 16
        %v1881 = vrot.slane %v1879, 7
        %v1882 = vshll.u32 %v1753, 16
        %v1884 = vor.u32 %v1881, %v1882
        %v1885 = vsel %vm341, %v1877, %v1884
        %v1887 = vshrl.u32 %v1754, 16
        %v1889 = vrot.slane %v1887, 7
        %v1891 = vshrl.u32 %v1755, 16
        %v1893 = vrot.slane %v1891, 7
        %v1894 = vshll.u32 %v1755, 16
        %v1896 = vor.u32 %v1893, %v1894
        %v1897 = vsel %vm341, %v1889, %v1896
        %v1899 = vshrl.u32 %v1756, 16
        %v1901 = vrot.slane %v1899, 7
        %v1903 = vshrl.u32 %v1757, 16
        %v1905 = vrot.slane %v1903, 7
        %v1906 = vshll.u32 %v1757, 16
        %v1908 = vor.u32 %v1905, %v1906
        %v1909 = vsel %vm341, %v1901, %v1908
        %v1911 = vshrl.u32 %v1758, 16
        %v1913 = vrot.slane %v1911, 7
        %v1915 = vshrl.u32 %v1759, 16
        %v1917 = vrot.slane %v1915, 7
        %v1918 = vshll.u32 %v1759, 16
        %v1920 = vor.u32 %v1917, %v1918
        %v1921 = vsel %vm341, %v1913, %v1920
        %v1923 = vshrl.u32 %v1760, 16
        %v1925 = vrot.slane %v1923, 7
        %v1927 = vshrl.u32 %v1761, 16
        %v1929 = vrot.slane %v1927, 7
        %v1930 = vshll.u32 %v1761, 16
        %v1932 = vor.u32 %v1929, %v1930
        %v1933 = vsel %vm341, %v1925, %v1932
        %v1935 = vshrl.u32 %v1762, 16
        %v1937 = vrot.slane %v1935, 7
        %v1939 = vshrl.u32 %v1763, 16
        %v1941 = vrot.slane %v1939, 7
        %v1942 = vshll.u32 %v1763, 16
        %v1944 = vor.u32 %v1941, %v1942
        %v1945 = vsel %vm341, %v1937, %v1944
        %v1947 = vshrl.u32 %v1764, 16
        %v1949 = vrot.slane %v1947, 7
        %v1951 = vshrl.u32 %v1765, 16
        %v1953 = vrot.slane %v1951, 7
        %v1954 = vshll.u32 %v1765, 16
        %v1956 = vor.u32 %v1953, %v1954
        %v1957 = vsel %vm341, %v1949, %v1956
        %1974 = vst.msk [vmem:[#allocation3 + $0x18] sm:$0xff] %vm338, %v1777
        %1975 = vst.msk [vmem:[#allocation3 + $0x40] sm:$0xff] %vm338, %v1789
        %1976 = vst.msk [vmem:[#allocation3 + $0x68] sm:$0xff] %vm338, %v1801
        %1977 = vst.msk [vmem:[#allocation3 + $0x90] sm:$0xff] %vm338, %v1813
        %1978 = vst.msk [vmem:[#allocation3 + $0xb8] sm:$0xff] %vm338, %v1825
        %1979 = vst.msk [vmem:[#allocation3 + $0xe0] sm:$0xff] %vm338, %v1837
        %1980 = vst.msk [vmem:[#allocation3 + $0x108] sm:$0xff] %vm338, %v1849
        %1981 = vst.msk [vmem:[#allocation3 + $0x130] sm:$0xff] %vm338, %v1861
        %1982 = vst.msk [vmem:[#allocation3 + $0x158] sm:$0xff] %vm338, %v1873
        %1983 = vst.msk [vmem:[#allocation3 + $0x180] sm:$0xff] %vm338, %v1885
        %1984 = vst.msk [vmem:[#allocation3 + $0x1a8] sm:$0xff] %vm338, %v1897
        %1985 = vst.msk [vmem:[#allocation3 + $0x1d0] sm:$0xff] %vm338, %v1909
        %1986 = vst.msk [vmem:[#allocation3 + $0x1f8] sm:$0xff] %vm338, %v1921
        %1987 = vst.msk [vmem:[#allocation3 + $0x220] sm:$0xff] %vm338, %v1933
        %1988 = vst.msk [vmem:[#allocation3 + $0x248] sm:$0xff] %vm338, %v1945
        %1989 = vst.msk [vmem:[#allocation3 + $0x270] sm:$0xff] %vm338, %v1957
        %v1990 = vld [vmem:[%s1733 + $0x8] sm:$0xff]
        %v1991 = vld [vmem:[%s1733 + $0x20] sm:$0xff]
        %v1992 = vld [vmem:[%s1733 + $0x38] sm:$0xff]
        %v1993 = vld [vmem:[%s1733 + $0x50] sm:$0xff]
        %v1994 = vld [vmem:[%s1733 + $0x68] sm:$0xff]
        %v1995 = vld [vmem:[%s1733 + $0x80] sm:$0xff]
        %v1996 = vld [vmem:[%s1733 + $0x98] sm:$0xff]
        %v1997 = vld [vmem:[%s1733 + $0xb0] sm:$0xff]
        %v1998 = vld [vmem:[%s1733 + $0xc8] sm:$0xff]
        %v1999 = vld [vmem:[%s1733 + $0xe0] sm:$0xff]
        %v2000 = vld [vmem:[%s1733 + $0xf8] sm:$0xff]
        %v2001 = vld [vmem:[%s1733 + $0x110] sm:$0xff]
        %v2002 = vld [vmem:[%s1733 + $0x128] sm:$0xff]
        %v2003 = vld [vmem:[%s1733 + $0x140] sm:$0xff]
        %v2004 = vld [vmem:[%s1733 + $0x158] sm:$0xff]
        %v2005 = vld [vmem:[%s1733 + $0x170] sm:$0xff]
        %2022 = vrot.lane.b32.xlu0 %v1990, 64
        %v2023 = vpop.permute.xlu0 %2022
        %2024 = vrot.lane.b32.xlu0 %v1991, 64
        %v2025 = vpop.permute.xlu0 %2024
        %2026 = vrot.lane.b32.xlu0 %v1992, 64
        %v2027 = vpop.permute.xlu0 %2026
        %2028 = vrot.lane.b32.xlu0 %v1993, 64
        %v2029 = vpop.permute.xlu0 %2028
        %2030 = vrot.lane.b32.xlu0 %v1994, 64
        %v2031 = vpop.permute.xlu0 %2030
        %2032 = vrot.lane.b32.xlu0 %v1995, 64
        %v2033 = vpop.permute.xlu0 %2032
        %2034 = vrot.lane.b32.xlu0 %v1996, 64
        %v2035 = vpop.permute.xlu0 %2034
        %2036 = vrot.lane.b32.xlu0 %v1997, 64
        %v2037 = vpop.permute.xlu0 %2036
        %2038 = vrot.lane.b32.xlu0 %v1998, 64
        %v2039 = vpop.permute.xlu0 %2038
        %2040 = vrot.lane.b32.xlu0 %v1999, 64
        %v2041 = vpop.permute.xlu0 %2040
        %2042 = vrot.lane.b32.xlu0 %v2000, 64
        %v2043 = vpop.permute.xlu0 %2042
        %2044 = vrot.lane.b32.xlu0 %v2001, 64
        %v2045 = vpop.permute.xlu0 %2044
        %2046 = vrot.lane.b32.xlu0 %v2002, 64
        %v2047 = vpop.permute.xlu0 %2046
        %2048 = vrot.lane.b32.xlu0 %v2003, 64
        %v2049 = vpop.permute.xlu0 %2048
        %2050 = vrot.lane.b32.xlu0 %v2004, 64
        %v2051 = vpop.permute.xlu0 %2050
        %2052 = vrot.lane.b32.xlu0 %v2005, 64
        %v2053 = vpop.permute.xlu0 %2052
        %2070 = vst.msk [vmem:[#allocation3 + $0x18] sm:$0xff] %vm851, %v2023
        %2071 = vst.msk [vmem:[#allocation3 + $0x40] sm:$0xff] %vm851, %v2025
        %2072 = vst.msk [vmem:[#allocation3 + $0x68] sm:$0xff] %vm851, %v2027
        %2073 = vst.msk [vmem:[#allocation3 + $0x90] sm:$0xff] %vm851, %v2029
        %2074 = vst.msk [vmem:[#allocation3 + $0xb8] sm:$0xff] %vm851, %v2031
        %2075 = vst.msk [vmem:[#allocation3 + $0xe0] sm:$0xff] %vm851, %v2033
        %2076 = vst.msk [vmem:[#allocation3 + $0x108] sm:$0xff] %vm851, %v2035
        %2077 = vst.msk [vmem:[#allocation3 + $0x130] sm:$0xff] %vm851, %v2037
        %2078 = vst.msk [vmem:[#allocation3 + $0x158] sm:$0xff] %vm851, %v2039
        %2079 = vst.msk [vmem:[#allocation3 + $0x180] sm:$0xff] %vm851, %v2041
        %2080 = vst.msk [vmem:[#allocation3 + $0x1a8] sm:$0xff] %vm851, %v2043
        %2081 = vst.msk [vmem:[#allocation3 + $0x1d0] sm:$0xff] %vm851, %v2045
        %2082 = vst.msk [vmem:[#allocation3 + $0x1f8] sm:$0xff] %vm851, %v2047
        %2083 = vst.msk [vmem:[#allocation3 + $0x220] sm:$0xff] %vm851, %v2049
        %2084 = vst.msk [vmem:[#allocation3 + $0x248] sm:$0xff] %vm851, %v2051
        %2085 = vst.msk [vmem:[#allocation3 + $0x270] sm:$0xff] %vm851, %v2053
        %v2086 = vld [vmem:[%s1733 + $0x8] sm:$0xff]
        %v2087 = vld [vmem:[%s1733 + $0x10] sm:$0x1]
        %v2088 = vld [vmem:[%s1733 + $0x20] sm:$0xff]
        %v2089 = vld [vmem:[%s1733 + $0x28] sm:$0x1]
        %v2090 = vld [vmem:[%s1733 + $0x38] sm:$0xff]
        %v2091 = vld [vmem:[%s1733 + $0x40] sm:$0x1]
        %v2092 = vld [vmem:[%s1733 + $0x50] sm:$0xff]
        %v2093 = vld [vmem:[%s1733 + $0x58] sm:$0x1]
        %v2094 = vld [vmem:[%s1733 + $0x68] sm:$0xff]
        %v2095 = vld [vmem:[%s1733 + $0x70] sm:$0x1]
        %v2096 = vld [vmem:[%s1733 + $0x80] sm:$0xff]
        %v2097 = vld [vmem:[%s1733 + $0x88] sm:$0x1]
        %v2098 = vld [vmem:[%s1733 + $0x98] sm:$0xff]
        %v2099 = vld [vmem:[%s1733 + $0xa0] sm:$0x1]
        %v2100 = vld [vmem:[%s1733 + $0xb0] sm:$0xff]
        %v2101 = vld [vmem:[%s1733 + $0xb8] sm:$0x1]
        %v2102 = vld [vmem:[%s1733 + $0xc8] sm:$0xff]
        %v2103 = vld [vmem:[%s1733 + $0xd0] sm:$0x1]
        %v2104 = vld [vmem:[%s1733 + $0xe0] sm:$0xff]
        %v2105 = vld [vmem:[%s1733 + $0xe8] sm:$0x1]
        %v2106 = vld [vmem:[%s1733 + $0xf8] sm:$0xff]
        %v2107 = vld [vmem:[%s1733 + $0x100] sm:$0x1]
        %v2108 = vld [vmem:[%s1733 + $0x110] sm:$0xff]
        %v2109 = vld [vmem:[%s1733 + $0x118] sm:$0x1]
        %v2110 = vld [vmem:[%s1733 + $0x128] sm:$0xff]
        %v2111 = vld [vmem:[%s1733 + $0x130] sm:$0x1]
        %v2112 = vld [vmem:[%s1733 + $0x140] sm:$0xff]
        %v2113 = vld [vmem:[%s1733 + $0x148] sm:$0x1]
        %v2114 = vld [vmem:[%s1733 + $0x158] sm:$0xff]
        %v2115 = vld [vmem:[%s1733 + $0x160] sm:$0x1]
        %v2116 = vld [vmem:[%s1733 + $0x170] sm:$0xff]
        %v2117 = vld [vmem:[%s1733 + $0x178] sm:$0x1]
        %v2119 = vshrl.u32 %v2086, 16
        %v2121 = vshll.u32 %v2086, 16
        %v2123 = vrot.slane %v2121, 1
        %v2124 = vor.u32 %v2119, %v2123
        %v2126 = vshll.u32 %v2087, 16
        %v2128 = vrot.slane %v2126, 1
        %v2129 = vsel %vm900, %v2124, %v2128
        %v2131 = vshrl.u32 %v2088, 16
        %v2133 = vshll.u32 %v2088, 16
        %v2135 = vrot.slane %v2133, 1
        %v2136 = vor.u32 %v2131, %v2135
        %v2138 = vshll.u32 %v2089, 16
        %v2140 = vrot.slane %v2138, 1
        %v2141 = vsel %vm900, %v2136, %v2140
        %v2143 = vshrl.u32 %v2090, 16
        %v2145 = vshll.u32 %v2090, 16
        %v2147 = vrot.slane %v2145, 1
        %v2148 = vor.u32 %v2143, %v2147
        %v2150 = vshll.u32 %v2091, 16
        %v2152 = vrot.slane %v2150, 1
        %v2153 = vsel %vm900, %v2148, %v2152
        %v2155 = vshrl.u32 %v2092, 16
        %v2157 = vshll.u32 %v2092, 16
        %v2159 = vrot.slane %v2157, 1
        %v2160 = vor.u32 %v2155, %v2159
        %v2162 = vshll.u32 %v2093, 16
        %v2164 = vrot.slane %v2162, 1
        %v2165 = vsel %vm900, %v2160, %v2164
        %v2167 = vshrl.u32 %v2094, 16
        %v2169 = vshll.u32 %v2094, 16
        %v2171 = vrot.slane %v2169, 1
        %v2172 = vor.u32 %v2167, %v2171
        %v2174 = vshll.u32 %v2095, 16
        %v2176 = vrot.slane %v2174, 1
        %v2177 = vsel %vm900, %v2172, %v2176
        %v2179 = vshrl.u32 %v2096, 16
        %v2181 = vshll.u32 %v2096, 16
        %v2183 = vrot.slane %v2181, 1
        %v2184 = vor.u32 %v2179, %v2183
        %v2186 = vshll.u32 %v2097, 16
        %v2188 = vrot.slane %v2186, 1
        %v2189 = vsel %vm900, %v2184, %v2188
        %v2191 = vshrl.u32 %v2098, 16
        %v2193 = vshll.u32 %v2098, 16
        %v2195 = vrot.slane %v2193, 1
        %v2196 = vor.u32 %v2191, %v2195
        %v2198 = vshll.u32 %v2099, 16
        %v2200 = vrot.slane %v2198, 1
        %v2201 = vsel %vm900, %v2196, %v2200
        %v2203 = vshrl.u32 %v2100, 16
        %v2205 = vshll.u32 %v2100, 16
        %v2207 = vrot.slane %v2205, 1
        %v2208 = vor.u32 %v2203, %v2207
        %v2210 = vshll.u32 %v2101, 16
        %v2212 = vrot.slane %v2210, 1
        %v2213 = vsel %vm900, %v2208, %v2212
        %v2215 = vshrl.u32 %v2102, 16
        %v2217 = vshll.u32 %v2102, 16
        %v2219 = vrot.slane %v2217, 1
        %v2220 = vor.u32 %v2215, %v2219
        %v2222 = vshll.u32 %v2103, 16
        %v2224 = vrot.slane %v2222, 1
        %v2225 = vsel %vm900, %v2220, %v2224
        %v2227 = vshrl.u32 %v2104, 16
        %v2229 = vshll.u32 %v2104, 16
        %v2231 = vrot.slane %v2229, 1
        %v2232 = vor.u32 %v2227, %v2231
        %v2234 = vshll.u32 %v2105, 16
        %v2236 = vrot.slane %v2234, 1
        %v2237 = vsel %vm900, %v2232, %v2236
        %v2239 = vshrl.u32 %v2106, 16
        %v2241 = vshll.u32 %v2106, 16
        %v2243 = vrot.slane %v2241, 1
        %v2244 = vor.u32 %v2239, %v2243
        %v2246 = vshll.u32 %v2107, 16
        %v2248 = vrot.slane %v2246, 1
        %v2249 = vsel %vm900, %v2244, %v2248
        %v2251 = vshrl.u32 %v2108, 16
        %v2253 = vshll.u32 %v2108, 16
        %v2255 = vrot.slane %v2253, 1
        %v2256 = vor.u32 %v2251, %v2255
        %v2258 = vshll.u32 %v2109, 16
        %v2260 = vrot.slane %v2258, 1
        %v2261 = vsel %vm900, %v2256, %v2260
        %v2263 = vshrl.u32 %v2110, 16
        %v2265 = vshll.u32 %v2110, 16
        %v2267 = vrot.slane %v2265, 1
        %v2268 = vor.u32 %v2263, %v2267
        %v2270 = vshll.u32 %v2111, 16
        %v2272 = vrot.slane %v2270, 1
        %v2273 = vsel %vm900, %v2268, %v2272
        %v2275 = vshrl.u32 %v2112, 16
        %v2277 = vshll.u32 %v2112, 16
        %v2279 = vrot.slane %v2277, 1
        %v2280 = vor.u32 %v2275, %v2279
        %v2282 = vshll.u32 %v2113, 16
        %v2284 = vrot.slane %v2282, 1
        %v2285 = vsel %vm900, %v2280, %v2284
        %v2287 = vshrl.u32 %v2114, 16
        %v2289 = vshll.u32 %v2114, 16
        %v2291 = vrot.slane %v2289, 1
        %v2292 = vor.u32 %v2287, %v2291
        %v2294 = vshll.u32 %v2115, 16
        %v2296 = vrot.slane %v2294, 1
        %v2297 = vsel %vm900, %v2292, %v2296
        %v2299 = vshrl.u32 %v2116, 16
        %v2301 = vshll.u32 %v2116, 16
        %v2303 = vrot.slane %v2301, 1
        %v2304 = vor.u32 %v2299, %v2303
        %v2306 = vshll.u32 %v2117, 16
        %v2308 = vrot.slane %v2306, 1
        %v2309 = vsel %vm900, %v2304, %v2308
        %2326 = vst.msk [vmem:[#allocation3 + $0x20] sm:$0xff] %vm338, %v2129
        %2327 = vst.msk [vmem:[#allocation3 + $0x48] sm:$0xff] %vm338, %v2141
        %2328 = vst.msk [vmem:[#allocation3 + $0x70] sm:$0xff] %vm338, %v2153
        %2329 = vst.msk [vmem:[#allocation3 + $0x98] sm:$0xff] %vm338, %v2165
        %2330 = vst.msk [vmem:[#allocation3 + $0xc0] sm:$0xff] %vm338, %v2177
        %2331 = vst.msk [vmem:[#allocation3 + $0xe8] sm:$0xff] %vm338, %v2189
        %2332 = vst.msk [vmem:[#allocation3 + $0x110] sm:$0xff] %vm338, %v2201
        %2333 = vst.msk [vmem:[#allocation3 + $0x138] sm:$0xff] %vm338, %v2213
        %2334 = vst.msk [vmem:[#allocation3 + $0x160] sm:$0xff] %vm338, %v2225
        %2335 = vst.msk [vmem:[#allocation3 + $0x188] sm:$0xff] %vm338, %v2237
        %2336 = vst.msk [vmem:[#allocation3 + $0x1b0] sm:$0xff] %vm338, %v2249
        %2337 = vst.msk [vmem:[#allocation3 + $0x1d8] sm:$0xff] %vm338, %v2261
        %2338 = vst.msk [vmem:[#allocation3 + $0x200] sm:$0xff] %vm338, %v2273
        %2339 = vst.msk [vmem:[#allocation3 + $0x228] sm:$0xff] %vm338, %v2285
        %2340 = vst.msk [vmem:[#allocation3 + $0x250] sm:$0xff] %vm338, %v2297
        %2341 = vst.msk [vmem:[#allocation3 + $0x278] sm:$0xff] %vm338, %v2309
        %v2342 = vld [vmem:[#allocation3] sm:$0xff]
        %v2343 = vld [vmem:[#allocation3 + $0x8] sm:$0xff]
        %v2344 = vld [vmem:[#allocation3 + $0x10] sm:$0xff]
        %v2345 = vld [vmem:[#allocation3 + $0x18] sm:$0xff]
        %v2346 = vld [vmem:[#allocation3 + $0x20] sm:$0xff]
        %v2347 = vld [vmem:[#allocation3 + $0x28] sm:$0xff]
        %v2348 = vld [vmem:[#allocation3 + $0x30] sm:$0xff]
        %v2349 = vld [vmem:[#allocation3 + $0x38] sm:$0xff]
        %v2350 = vld [vmem:[#allocation3 + $0x40] sm:$0xff]
        %v2351 = vld [vmem:[#allocation3 + $0x48] sm:$0xff]
        %v2352 = vld [vmem:[#allocation3 + $0x50] sm:$0xff]
        %v2353 = vld [vmem:[#allocation3 + $0x58] sm:$0xff]
        %v2354 = vld [vmem:[#allocation3 + $0x60] sm:$0xff]
        %v2355 = vld [vmem:[#allocation3 + $0x68] sm:$0xff]
        %v2356 = vld [vmem:[#allocation3 + $0x70] sm:$0xff]
        %v2357 = vld [vmem:[#allocation3 + $0x78] sm:$0xff]
        %v2358 = vld [vmem:[#allocation3 + $0x80] sm:$0xff]
        %v2359 = vld [vmem:[#allocation3 + $0x88] sm:$0xff]
        %v2360 = vld [vmem:[#allocation3 + $0x90] sm:$0xff]
        %v2361 = vld [vmem:[#allocation3 + $0x98] sm:$0xff]
        %v2362 = vld [vmem:[#allocation3 + $0xa0] sm:$0xff]
        %v2363 = vld [vmem:[#allocation3 + $0xa8] sm:$0xff]
        %v2364 = vld [vmem:[#allocation3 + $0xb0] sm:$0xff]
        %v2365 = vld [vmem:[#allocation3 + $0xb8] sm:$0xff]
        %v2366 = vld [vmem:[#allocation3 + $0xc0] sm:$0xff]
        %v2367 = vld [vmem:[#allocation3 + $0xc8] sm:$0xff]
        %v2368 = vld [vmem:[#allocation3 + $0xd0] sm:$0xff]
        %v2369 = vld [vmem:[#allocation3 + $0xd8] sm:$0xff]
        %v2370 = vld [vmem:[#allocation3 + $0xe0] sm:$0xff]
        %v2371 = vld [vmem:[#allocation3 + $0xe8] sm:$0xff]
        %v2372 = vld [vmem:[#allocation3 + $0xf0] sm:$0xff]
        %v2373 = vld [vmem:[#allocation3 + $0xf8] sm:$0xff]
        %v2374 = vld [vmem:[#allocation3 + $0x100] sm:$0xff]
        %v2375 = vld [vmem:[#allocation3 + $0x108] sm:$0xff]
        %v2376 = vld [vmem:[#allocation3 + $0x110] sm:$0xff]
        %v2377 = vld [vmem:[#allocation3 + $0x118] sm:$0xff]
        %v2378 = vld [vmem:[#allocation3 + $0x120] sm:$0xff]
        %v2379 = vld [vmem:[#allocation3 + $0x128] sm:$0xff]
        %v2380 = vld [vmem:[#allocation3 + $0x130] sm:$0xff]
        %v2381 = vld [vmem:[#allocation3 + $0x138] sm:$0xff]
        %v2382 = vld [vmem:[#allocation3 + $0x140] sm:$0xff]
        %v2383 = vld [vmem:[#allocation3 + $0x148] sm:$0xff]
        %v2384 = vld [vmem:[#allocation3 + $0x150] sm:$0xff]
        %v2385 = vld [vmem:[#allocation3 + $0x158] sm:$0xff]
        %v2386 = vld [vmem:[#allocation3 + $0x160] sm:$0xff]
        %v2387 = vld [vmem:[#allocation3 + $0x168] sm:$0xff]
        %v2388 = vld [vmem:[#allocation3 + $0x170] sm:$0xff]
        %v2389 = vld [vmem:[#allocation3 + $0x178] sm:$0xff]
        %v2390 = vld [vmem:[#allocation3 + $0x180] sm:$0xff]
        %v2391 = vld [vmem:[#allocation3 + $0x188] sm:$0xff]
        %v2392 = vld [vmem:[#allocation3 + $0x190] sm:$0xff]
        %v2393 = vld [vmem:[#allocation3 + $0x198] sm:$0xff]
        %v2394 = vld [vmem:[#allocation3 + $0x1a0] sm:$0xff]
        %v2395 = vld [vmem:[#allocation3 + $0x1a8] sm:$0xff]
        %v2396 = vld [vmem:[#allocation3 + $0x1b0] sm:$0xff]
        %v2397 = vld [vmem:[#allocation3 + $0x1b8] sm:$0xff]
        %v2398 = vld [vmem:[#allocation3 + $0x1c0] sm:$0xff]
        %v2399 = vld [vmem:[#allocation3 + $0x1c8] sm:$0xff]
        %v2400 = vld [vmem:[#allocation3 + $0x1d0] sm:$0xff]
        %v2401 = vld [vmem:[#allocation3 + $0x1d8] sm:$0xff]
        %v2402 = vld [vmem:[#allocation3 + $0x1e0] sm:$0xff]
        %v2403 = vld [vmem:[#allocation3 + $0x1e8] sm:$0xff]
        %v2404 = vld [vmem:[#allocation3 + $0x1f0] sm:$0xff]
        %v2405 = vld [vmem:[#allocation3 + $0x1f8] sm:$0xff]
        %v2406 = vld [vmem:[#allocation3 + $0x200] sm:$0xff]
        %v2407 = vld [vmem:[#allocation3 + $0x208] sm:$0xff]
        %v2408 = vld [vmem:[#allocation3 + $0x210] sm:$0xff]
        %v2409 = vld [vmem:[#allocation3 + $0x218] sm:$0xff]
        %v2410 = vld [vmem:[#allocation3 + $0x220] sm:$0xff]
        %v2411 = vld [vmem:[#allocation3 + $0x228] sm:$0xff]
        %v2412 = vld [vmem:[#allocation3 + $0x230] sm:$0xff]
        %v2413 = vld [vmem:[#allocation3 + $0x238] sm:$0xff]
        %v2414 = vld [vmem:[#allocation3 + $0x240] sm:$0xff]
        %v2415 = vld [vmem:[#allocation3 + $0x248] sm:$0xff]
        %v2416 = vld [vmem:[#allocation3 + $0x250] sm:$0xff]
        %v2417 = vld [vmem:[#allocation3 + $0x258] sm:$0xff]
        %v2418 = vld [vmem:[#allocation3 + $0x260] sm:$0xff]
        %v2419 = vld [vmem:[#allocation3 + $0x268] sm:$0xff]
        %v2420 = vld [vmem:[#allocation3 + $0x270] sm:$0xff]
        %v2421 = vld [vmem:[#allocation3 + $0x278] sm:$0xff]
        %v2422 = vld [vmem:[%s2] sm:$0xff]
        %v2423 = vld [vmem:[%s2 + $0x8] sm:$0xff]
        %v2424 = vld [vmem:[%s2 + $0x10] sm:$0xff]
        %v2425 = vld [vmem:[%s2 + $0x18] sm:$0xff]
        %v2426 = vld [vmem:[%s2 + $0x20] sm:$0xff]
        %v2427 = vld [vmem:[%s2 + $0x28] sm:$0xff]
        %v2428 = vld [vmem:[%s2 + $0x30] sm:$0xff]
        %v2429 = vld [vmem:[%s2 + $0x38] sm:$0xff]
        %v2430 = vld [vmem:[%s2 + $0x40] sm:$0xff]
        %v2431 = vld [vmem:[%s2 + $0x48] sm:$0xff]
        %v2432 = vld [vmem:[%s2 + $0x50] sm:$0xff]
        %v2433 = vld [vmem:[%s2 + $0x58] sm:$0xff]
        %v2434 = vld [vmem:[%s2 + $0x60] sm:$0xff]
        %v2435 = vld [vmem:[%s2 + $0x68] sm:$0xff]
        %v2436 = vld [vmem:[%s2 + $0x70] sm:$0xff]
        %v2437 = vld [vmem:[%s2 + $0x78] sm:$0xff]
        %v2438 = vld [vmem:[%s2 + $0x80] sm:$0xff]
        %v2439 = vld [vmem:[%s2 + $0x88] sm:$0xff]
        %v2440 = vld [vmem:[%s2 + $0x90] sm:$0xff]
        %v2441 = vld [vmem:[%s2 + $0x98] sm:$0xff]
        %v2442 = vld [vmem:[%s2 + $0xa0] sm:$0xff]
        %v2443 = vld [vmem:[%s2 + $0xa8] sm:$0xff]
        %v2444 = vld [vmem:[%s2 + $0xb0] sm:$0xff]
        %v2445 = vld [vmem:[%s2 + $0xb8] sm:$0xff]
        %v2446 = vld [vmem:[%s2 + $0xc0] sm:$0xff]
        %v2447 = vld [vmem:[%s2 + $0xc8] sm:$0xff]
        %v2448 = vld [vmem:[%s2 + $0xd0] sm:$0xff]
        %v2449 = vld [vmem:[%s2 + $0xd8] sm:$0xff]
        %v2450 = vld [vmem:[%s2 + $0xe0] sm:$0xff]
        %v2451 = vld [vmem:[%s2 + $0xe8] sm:$0xff]
        %v2452 = vld [vmem:[%s2 + $0xf0] sm:$0xff]
        %v2453 = vld [vmem:[%s2 + $0xf8] sm:$0xff]
        %v2454 = vld [vmem:[%s1] sm:$0xf]
        %v2455 = vld [vmem:[%s1 + $0x4] sm:$0xf]
        %v2456 = vld [vmem:[%s1 + $0x8] sm:$0xf]
        %v2457 = vld [vmem:[%s1 + $0xc] sm:$0xf]
        %v2458 = vld [vmem:[%s1 + $0x10] sm:$0xf]
        %v2459 = vld [vmem:[%s1 + $0x14] sm:$0xf]
        %v2460 = vld [vmem:[%s1 + $0x18] sm:$0xf]
        %v2461 = vld [vmem:[%s1 + $0x1c] sm:$0xf]
        %v2462 = vld [vmem:[%s1 + $0x20] sm:$0xf]
        %v2463 = vld [vmem:[%s1 + $0x24] sm:$0xf]
        %v2464 = vld [vmem:[%s1 + $0x28] sm:$0xf]
        %v2465 = vld [vmem:[%s1 + $0x2c] sm:$0xf]
        %v2466 = vld [vmem:[%s1 + $0x30] sm:$0xf]
        %v2467 = vld [vmem:[%s1 + $0x34] sm:$0xf]
        %v2468 = vld [vmem:[%s1 + $0x38] sm:$0xf]
        %v2469 = vld [vmem:[%s1 + $0x3c] sm:$0xf]
        %v2470 = vld [vmem:[%s1 + $0x40] sm:$0xf]
        %v2471 = vld [vmem:[%s1 + $0x44] sm:$0xf]
        %v2472 = vld [vmem:[%s1 + $0x48] sm:$0xf]
        %v2473 = vld [vmem:[%s1 + $0x4c] sm:$0xf]
        %v2474 = vld [vmem:[%s1 + $0x50] sm:$0xf]
        %v2475 = vld [vmem:[%s1 + $0x54] sm:$0xf]
        %v2476 = vld [vmem:[%s1 + $0x58] sm:$0xf]
        %v2477 = vld [vmem:[%s1 + $0x5c] sm:$0xf]
        %v2478 = vld [vmem:[%s1 + $0x60] sm:$0xf]
        %v2479 = vld [vmem:[%s1 + $0x64] sm:$0xf]
        %v2480 = vld [vmem:[%s1 + $0x68] sm:$0xf]
        %v2481 = vld [vmem:[%s1 + $0x6c] sm:$0xf]
        %v2482 = vld [vmem:[%s1 + $0x70] sm:$0xf]
        %v2483 = vld [vmem:[%s1 + $0x74] sm:$0xf]
        %v2484 = vld [vmem:[%s1 + $0x78] sm:$0xf]
        %v2485 = vld [vmem:[%s1 + $0x7c] sm:$0xf]
        %v2486 = vld [vmem:[%s1 + $0x80] sm:$0xf]
        %v2487 = vld [vmem:[%s1 + $0x84] sm:$0xf]
        %v2488 = vld [vmem:[%s1 + $0x88] sm:$0xf]
        %v2489 = vld [vmem:[%s1 + $0x8c] sm:$0xf]
        %v2490 = vld [vmem:[%s1 + $0x90] sm:$0xf]
        %v2491 = vld [vmem:[%s1 + $0x94] sm:$0xf]
        %v2492 = vld [vmem:[%s1 + $0x98] sm:$0xf]
        %v2493 = vld [vmem:[%s1 + $0x9c] sm:$0xf]
        %v2494 = vld [vmem:[%s1 + $0xa0] sm:$0xf]
        %v2495 = vld [vmem:[%s1 + $0xa4] sm:$0xf]
        %v2496 = vld [vmem:[%s1 + $0xa8] sm:$0xf]
        %v2497 = vld [vmem:[%s1 + $0xac] sm:$0xf]
        %v2498 = vld [vmem:[%s1 + $0xb0] sm:$0xf]
        %v2499 = vld [vmem:[%s1 + $0xb4] sm:$0xf]
        %v2500 = vld [vmem:[%s1 + $0xb8] sm:$0xf]
        %v2501 = vld [vmem:[%s1 + $0xbc] sm:$0xf]
        %v2502 = vld [vmem:[%s1 + $0xc0] sm:$0xf]
        %v2503 = vld [vmem:[%s1 + $0xc4] sm:$0xf]
        %v2504 = vld [vmem:[%s1 + $0xc8] sm:$0xf]
        %v2505 = vld [vmem:[%s1 + $0xcc] sm:$0xf]
        %v2506 = vld [vmem:[%s1 + $0xd0] sm:$0xf]
        %v2507 = vld [vmem:[%s1 + $0xd4] sm:$0xf]
        %v2508 = vld [vmem:[%s1 + $0xd8] sm:$0xf]
        %v2509 = vld [vmem:[%s1 + $0xdc] sm:$0xf]
        %v2510 = vld [vmem:[%s1 + $0xe0] sm:$0xf]
        %v2511 = vld [vmem:[%s1 + $0xe4] sm:$0xf]
        %v2512 = vld [vmem:[%s1 + $0xe8] sm:$0xf]
        %v2513 = vld [vmem:[%s1 + $0xec] sm:$0xf]
        %v2514 = vld [vmem:[%s1 + $0xf0] sm:$0xf]
        %v2515 = vld [vmem:[%s1 + $0xf4] sm:$0xf]
        %v2516 = vld [vmem:[%s1 + $0xf8] sm:$0xf]
        %v2517 = vld [vmem:[%s1 + $0xfc] sm:$0xf]
        %v2518 = vld [vmem:[%s1 + $0x100] sm:$0xf]
        %v2519 = vld [vmem:[%s1 + $0x104] sm:$0xf]
        %v2520 = vld [vmem:[%s1 + $0x108] sm:$0xf]
        %v2521 = vld [vmem:[%s1 + $0x10c] sm:$0xf]
        %v2522 = vld [vmem:[%s1 + $0x110] sm:$0xf]
        %v2523 = vld [vmem:[%s1 + $0x114] sm:$0xf]
        %v2524 = vld [vmem:[%s1 + $0x118] sm:$0xf]
        %v2525 = vld [vmem:[%s1 + $0x11c] sm:$0xf]
        %v2598 = vunpack.c.l.b16 %v2454
        %v2599 = vunpack.c.l.b16 %v2455
        %v2600 = vunpack.c.l.b16 %v2456
        %v2601 = vunpack.c.l.b16 %v2457
        %v2602 = vunpack.c.l.b16 %v2458
        %v2603 = vunpack.c.l.b16 %v2459
        %v2604 = vunpack.c.l.b16 %v2460
        %v2605 = vunpack.c.l.b16 %v2461
        %v2606 = vunpack.c.l.b16 %v2462
        %v2607 = vunpack.c.l.b16 %v2463
        %v2608 = vunpack.c.l.b16 %v2464
        %v2609 = vunpack.c.l.b16 %v2465
        %v2610 = vunpack.c.l.b16 %v2466
        %v2611 = vunpack.c.l.b16 %v2467
        %v2612 = vunpack.c.l.b16 %v2468
        %v2613 = vunpack.c.l.b16 %v2469
        %v2614 = vunpack.c.l.b16 %v2470
        %v2615 = vunpack.c.l.b16 %v2471
        %v2616 = vunpack.c.l.b16 %v2472
        %v2617 = vunpack.c.l.b16 %v2473
        %v2618 = vunpack.c.l.b16 %v2474
        %v2619 = vunpack.c.l.b16 %v2475
        %v2620 = vunpack.c.l.b16 %v2476
        %v2621 = vunpack.c.l.b16 %v2477
        %v2622 = vunpack.c.l.b16 %v2478
        %v2623 = vunpack.c.l.b16 %v2479
        %v2624 = vunpack.c.l.b16 %v2480
        %v2625 = vunpack.c.l.b16 %v2481
        %v2626 = vunpack.c.l.b16 %v2482
        %v2627 = vunpack.c.l.b16 %v2483
        %v2628 = vunpack.c.l.b16 %v2484
        %v2629 = vunpack.c.l.b16 %v2485
        %v2630 = vunpack.c.l.b16 %v2486
        %v2631 = vunpack.c.l.b16 %v2487
        %v2632 = vunpack.c.l.b16 %v2488
        %v2633 = vunpack.c.l.b16 %v2489
        %v2634 = vunpack.c.l.b16 %v2490
        %v2635 = vunpack.c.l.b16 %v2491
        %v2636 = vunpack.c.l.b16 %v2492
        %v2637 = vunpack.c.l.b16 %v2493
        %v2638 = vunpack.c.l.b16 %v2494
        %v2639 = vunpack.c.l.b16 %v2495
        %v2640 = vunpack.c.l.b16 %v2496
        %v2641 = vunpack.c.l.b16 %v2497
        %v2642 = vunpack.c.l.b16 %v2498
        %v2643 = vunpack.c.l.b16 %v2499
        %v2644 = vunpack.c.l.b16 %v2500
        %v2645 = vunpack.c.l.b16 %v2501
        %v2646 = vunpack.c.l.b16 %v2502
        %v2647 = vunpack.c.l.b16 %v2503
        %v2648 = vunpack.c.l.b16 %v2504
        %v2649 = vunpack.c.l.b16 %v2505
        %v2650 = vunpack.c.l.b16 %v2506
        %v2651 = vunpack.c.l.b16 %v2507
        %v2652 = vunpack.c.l.b16 %v2508
        %v2653 = vunpack.c.l.b16 %v2509
        %v2654 = vunpack.c.l.b16 %v2510
        %v2655 = vunpack.c.l.b16 %v2511
        %v2656 = vunpack.c.l.b16 %v2512
        %v2657 = vunpack.c.l.b16 %v2513
        %v2658 = vunpack.c.l.b16 %v2514
        %v2659 = vunpack.c.l.b16 %v2515
        %v2660 = vunpack.c.l.b16 %v2516
        %v2661 = vunpack.c.l.b16 %v2517
        %v2662 = vunpack.c.l.b16 %v2518
        %v2663 = vunpack.c.l.b16 %v2519
        %v2664 = vunpack.c.l.b16 %v2520
        %v2665 = vunpack.c.l.b16 %v2521
        %v2666 = vunpack.c.l.b16 %v2522
        %v2667 = vunpack.c.l.b16 %v2523
        %v2668 = vunpack.c.l.b16 %v2524
        %v2669 = vunpack.c.l.b16 %v2525
        %v2670 = vpack.c.b16 %v2599, %v2598
        %v2671 = vpack.c.b16 %v2601, %v2600
        %v2672 = vpack.c.b16 %v2603, %v2602
        %v2673 = vpack.c.b16 %v2605, %v2604
        %v2674 = vpack.c.b16 %v2607, %v2606
        %v2675 = vpack.c.b16 %v2609, %v2608
        %v2676 = vpack.c.b16 %v2611, %v2610
        %v2677 = vpack.c.b16 %v2613, %v2612
        %v2678 = vpack.c.b16 %v2615, %v2614
        %v2679 = vpack.c.b16 %v2617, %v2616
        %v2680 = vpack.c.b16 %v2619, %v2618
        %v2681 = vpack.c.b16 %v2621, %v2620
        %v2682 = vpack.c.b16 %v2623, %v2622
        %v2683 = vpack.c.b16 %v2625, %v2624
        %v2684 = vpack.c.b16 %v2627, %v2626
        %v2685 = vpack.c.b16 %v2629, %v2628
        %v2686 = vpack.c.b16 %v2631, %v2630
        %v2687 = vpack.c.b16 %v2633, %v2632
        %v2688 = vpack.c.b16 %v2635, %v2634
        %v2689 = vpack.c.b16 %v2637, %v2636
        %v2690 = vpack.c.b16 %v2639, %v2638
        %v2691 = vpack.c.b16 %v2641, %v2640
        %v2692 = vpack.c.b16 %v2643, %v2642
        %v2693 = vpack.c.b16 %v2645, %v2644
        %v2694 = vpack.c.b16 %v2647, %v2646
        %v2695 = vpack.c.b16 %v2649, %v2648
        %v2696 = vpack.c.b16 %v2651, %v2650
        %v2697 = vpack.c.b16 %v2653, %v2652
        %v2698 = vpack.c.b16 %v2655, %v2654
        %v2699 = vpack.c.b16 %v2657, %v2656
        %v2700 = vpack.c.b16 %v2659, %v2658
        %v2701 = vpack.c.b16 %v2661, %v2660
        %v2702 = vpack.c.b16 %v2663, %v2662
        %v2703 = vpack.c.b16 %v2665, %v2664
        %v2704 = vpack.c.b16 %v2667, %v2666
        %v2705 = vpack.c.b16 %v2669, %v2668
        %v2743 = vsel %vm338, %v2346, 0
        %v2746 = vsel %vm338, %v2351, 0
        %v2749 = vsel %vm338, %v2356, 0
        %v2752 = vsel %vm338, %v2361, 0
        %v2755 = vsel %vm338, %v2366, 0
        %v2758 = vsel %vm338, %v2371, 0
        %v2761 = vsel %vm338, %v2376, 0
        %v2764 = vsel %vm338, %v2381, 0
        %v2767 = vsel %vm338, %v2386, 0
        %v2770 = vsel %vm338, %v2391, 0
        %v2773 = vsel %vm338, %v2396, 0
        %v2776 = vsel %vm338, %v2401, 0
        %v2779 = vsel %vm338, %v2406, 0
        %v2782 = vsel %vm338, %v2411, 0
        %v2785 = vsel %vm338, %v2416, 0
        %v2788 = vsel %vm338, %v2421, 0
        %2790 = vmatprep.subr.bf16.mxu0 0
        %2791 = vmatpush1.bf16.msra.mxu0 %v2670
        %2792 = vmatprep.subr.bf16.mxu0 0
        %2793 = vmatpush1.bf16.msra.mxu0 %v2671
        %2794 = vmatprep.subr.bf16.mxu0 0
        %2795 = vmatpush1.bf16.msra.mxu0 %v2672
        %2796 = vmatprep.subr.bf16.mxu0 0
        %2797 = vmatpush1.bf16.msra.mxu0 %v2673
        %2798 = vmatprep.subr.bf16.mxu0 0
        %2799 = vmatpush1.bf16.msra.mxu0 %v2674
        %2800 = vmatprep.subr.bf16.mxu0 0
        %2801 = vmatpush1.bf16.msra.mxu0 %v2675
        %2802 = vmatprep.subr.bf16.mxu0 0
        %2803 = vmatpush1.bf16.msra.mxu0 %v2676
        %2804 = vmatprep.subr.bf16.mxu0 0
        %2805 = vmatpush1.bf16.msra.mxu0 %v2677
        %2806 = vmatprep.subr.bf16.mxu0 0
        %2807 = vmatpush1.bf16.msra.mxu0 %v2678
        %2808 = vmatprep.subr.bf16.mxu0 0
        %2809 = vmatpush1.bf16.msra.mxu0 %v2679
        %2810 = vmatprep.subr.bf16.mxu0 0
        %2811 = vmatpush1.bf16.msra.mxu0 %v2680
        %2812 = vmatprep.subr.bf16.mxu0 0
        %2813 = vmatpush1.bf16.msra.mxu0 %v2681
        %2814 = vmatprep.subr.bf16.mxu0 0
        %2815 = vmatpush1.bf16.msra.mxu0 %v2682
        %2816 = vmatprep.subr.bf16.mxu0 0
        %2817 = vmatpush1.bf16.msra.mxu0 %v2683
        %2818 = vmatprep.subr.bf16.mxu0 0
        %2819 = vmatpush1.bf16.msra.mxu0 %v2684
        %2820 = vmatprep.subr.bf16.mxu0 0
        %2821 = vmatpush1.bf16.msra.mxu0 %v2685
        %2822 = vmatprep.mubr.bf16.mxu0 %v2343
        %2823 = vmatmul.mubr.bf16.gmra.mrb[0].mxu0 %v2342
        %v2824 = vpop.f32.mrb[0].mxu0
        %v2825 = vadd.f32 0.0, %v2824
        %v2826 = vpop.f32.mrb[0].mxu0
        %v2827 = vpop.f32.mrb[0].mxu0
        %v2828 = vadd.f32 0.0, %v2827
        %v2829 = vpop.f32.mrb[0].mxu0
        %2830 = vmatprep.mubr.bf16.mxu0 %v2348
        %2831 = vmatmul.mubr.bf16.gmra.mrb[0].mxu0 %v2347
        %v2832 = vpop.f32.mrb[0].mxu0
        %v2833 = vadd.f32 0.0, %v2832
        %v2834 = vpop.f32.mrb[0].mxu0
        %v2835 = vpop.f32.mrb[0].mxu0
        %v2836 = vadd.f32 0.0, %v2835
        %v2837 = vpop.f32.mrb[0].mxu0
        %2838 = vmatprep.mubr.bf16.mxu0 %v2353
        %2839 = vmatmul.mubr.bf16.gmra.mrb[0].mxu0 %v2352
        %v2840 = vpop.f32.mrb[0].mxu0
        %v2841 = vadd.f32 0.0, %v2840
        %v2842 = vpop.f32.mrb[0].mxu0
        %v2843 = vpop.f32.mrb[0].mxu0
        %v2844 = vadd.f32 0.0, %v2843
        %v2845 = vpop.f32.mrb[0].mxu0
        %2846 = vmatprep.mubr.bf16.mxu0 %v2358
        %2847 = vmatmul.mubr.bf16.gmra.mrb[0].mxu0 %v2357
        %v2848 = vpop.f32.mrb[0].mxu0
        %v2849 = vadd.f32 0.0, %v2848
        %v2850 = vpop.f32.mrb[0].mxu0
        %v2851 = vpop.f32.mrb[0].mxu0
        %v2852 = vadd.f32 0.0, %v2851
        %v2853 = vpop.f32.mrb[0].mxu0
        %2854 = vmatprep.mubr.bf16.mxu0 %v2363
        %2855 = vmatmul.mubr.bf16.gmra.mrb[0].mxu0 %v2362
        %v2856 = vpop.f32.mrb[0].mxu0
        %v2857 = vadd.f32 0.0, %v2856
        %v2858 = vpop.f32.mrb[0].mxu0
        %v2859 = vpop.f32.mrb[0].mxu0
        %v2860 = vadd.f32 0.0, %v2859
        %v2861 = vpop.f32.mrb[0].mxu0
        %2862 = vmatprep.mubr.bf16.mxu0 %v2368
        %2863 = vmatmul.mubr.bf16.gmra.mrb[0].mxu0 %v2367
        %v2864 = vpop.f32.mrb[0].mxu0
        %v2865 = vadd.f32 0.0, %v2864
        %v2866 = vpop.f32.mrb[0].mxu0
        %v2867 = vpop.f32.mrb[0].mxu0
        %v2868 = vadd.f32 0.0, %v2867
        %v2869 = vpop.f32.mrb[0].mxu0
        %2870 = vmatprep.mubr.bf16.mxu0 %v2373
        %2871 = vmatmul.mubr.bf16.gmra.mrb[0].mxu0 %v2372
        %v2872 = vpop.f32.mrb[0].mxu0
        %v2873 = vadd.f32 0.0, %v2872
        %v2874 = vpop.f32.mrb[0].mxu0
        %v2875 = vpop.f32.mrb[0].mxu0
        %v2876 = vadd.f32 0.0, %v2875
        %v2877 = vpop.f32.mrb[0].mxu0
        %2878 = vmatprep.mubr.bf16.mxu0 %v2378
        %2879 = vmatmul.mubr.bf16.gmra.mrb[0].mxu0 %v2377
        %v2880 = vpop.f32.mrb[0].mxu0
        %v2881 = vadd.f32 0.0, %v2880
        %v2882 = vpop.f32.mrb[0].mxu0
        %v2883 = vpop.f32.mrb[0].mxu0
        %v2884 = vadd.f32 0.0, %v2883
        %v2885 = vpop.f32.mrb[0].mxu0
        %2886 = vmatprep.mubr.bf16.mxu0 %v2383
        %2887 = vmatmul.mubr.bf16.gmra.mrb[0].mxu0 %v2382
        %v2888 = vpop.f32.mrb[0].mxu0
        %v2889 = vadd.f32 0.0, %v2888
        %v2890 = vpop.f32.mrb[0].mxu0
        %v2891 = vpop.f32.mrb[0].mxu0
        %v2892 = vadd.f32 0.0, %v2891
        %v2893 = vpop.f32.mrb[0].mxu0
        %2894 = vmatprep.mubr.bf16.mxu0 %v2388
        %2895 = vmatmul.mubr.bf16.gmra.mrb[0].mxu0 %v2387
        %v2896 = vpop.f32.mrb[0].mxu0
        %v2897 = vadd.f32 0.0, %v2896
        %v2898 = vpop.f32.mrb[0].mxu0
        %v2899 = vpop.f32.mrb[0].mxu0
        %v2900 = vadd.f32 0.0, %v2899
        %v2901 = vpop.f32.mrb[0].mxu0
        %2902 = vmatprep.mubr.bf16.mxu0 %v2393
        %2903 = vmatmul.mubr.bf16.gmra.mrb[0].mxu0 %v2392
        %v2904 = vpop.f32.mrb[0].mxu0
        %v2905 = vadd.f32 0.0, %v2904
        %v2906 = vpop.f32.mrb[0].mxu0
        %v2907 = vpop.f32.mrb[0].mxu0
        %v2908 = vadd.f32 0.0, %v2907
        %v2909 = vpop.f32.mrb[0].mxu0
        %2910 = vmatprep.mubr.bf16.mxu0 %v2398
        %2911 = vmatmul.mubr.bf16.gmra.mrb[0].mxu0 %v2397
        %v2912 = vpop.f32.mrb[0].mxu0
        %v2913 = vadd.f32 0.0, %v2912
        %v2914 = vpop.f32.mrb[0].mxu0
        %v2915 = vpop.f32.mrb[0].mxu0
        %v2916 = vadd.f32 0.0, %v2915
        %v2917 = vpop.f32.mrb[0].mxu0
        %2918 = vmatprep.mubr.bf16.mxu0 %v2403
        %2919 = vmatmul.mubr.bf16.gmra.mrb[0].mxu0 %v2402
        %v2920 = vpop.f32.mrb[0].mxu0
        %v2921 = vadd.f32 0.0, %v2920
        %v2922 = vpop.f32.mrb[0].mxu0
        %v2923 = vpop.f32.mrb[0].mxu0
        %v2924 = vadd.f32 0.0, %v2923
        %v2925 = vpop.f32.mrb[0].mxu0
        %2926 = vmatprep.mubr.bf16.mxu0 %v2408
        %2927 = vmatmul.mubr.bf16.gmra.mrb[0].mxu0 %v2407
        %v2928 = vpop.f32.mrb[0].mxu0
        %v2929 = vadd.f32 0.0, %v2928
        %v2930 = vpop.f32.mrb[0].mxu0
        %v2931 = vpop.f32.mrb[0].mxu0
        %v2932 = vadd.f32 0.0, %v2931
        %v2933 = vpop.f32.mrb[0].mxu0
        %2934 = vmatprep.mubr.bf16.mxu0 %v2413
        %2935 = vmatmul.mubr.bf16.gmra.mrb[0].mxu0 %v2412
        %v2936 = vpop.f32.mrb[0].mxu0
        %v2937 = vadd.f32 0.0, %v2936
        %v2938 = vpop.f32.mrb[0].mxu0
        %v2939 = vpop.f32.mrb[0].mxu0
        %v2940 = vadd.f32 0.0, %v2939
        %v2941 = vpop.f32.mrb[0].mxu0
        %2942 = vmatprep.mubr.bf16.mxu0 %v2418
        %2943 = vmatmul.mubr.bf16.gmra.mrb[0].mxu0 %v2417
        %v2944 = vpop.f32.mrb[0].mxu0
        %v2945 = vadd.f32 0.0, %v2944
        %v2946 = vpop.f32.mrb[0].mxu0
        %v2947 = vpop.f32.mrb[0].mxu0
        %v2948 = vadd.f32 0.0, %v2947
        %v2949 = vpop.f32.mrb[0].mxu0
        %2950 = vdwg.mxu0
        %2951 = vmatprep.subr.bf16.mxu0 0
        %2952 = vmatpush1.bf16.msra.mxu0 %v2686
        %2953 = vmatprep.subr.bf16.mxu0 0
        %2954 = vmatpush1.bf16.msra.mxu0 %v2687
        %2955 = vmatprep.subr.bf16.mxu0 0
        %2956 = vmatpush1.bf16.msra.mxu0 %v2688
        %2957 = vmatprep.subr.bf16.mxu0 0
        %2958 = vmatpush1.bf16.msra.mxu0 %v2689
        %2959 = vmatprep.subr.bf16.mxu0 0
        %2960 = vmatpush1.bf16.msra.mxu0 %v2690
        %2961 = vmatprep.subr.bf16.mxu0 0
        %2962 = vmatpush1.bf16.msra.mxu0 %v2691
        %2963 = vmatprep.subr.bf16.mxu0 0
        %2964 = vmatpush1.bf16.msra.mxu0 %v2692
        %2965 = vmatprep.subr.bf16.mxu0 0
        %2966 = vmatpush1.bf16.msra.mxu0 %v2693
        %2967 = vmatprep.subr.bf16.mxu0 0
        %2968 = vmatpush1.bf16.msra.mxu0 %v2694
        %2969 = vmatprep.subr.bf16.mxu0 0
        %2970 = vmatpush1.bf16.msra.mxu0 %v2695
        %2971 = vmatprep.subr.bf16.mxu0 0
        %2972 = vmatpush1.bf16.msra.mxu0 %v2696
        %2973 = vmatprep.subr.bf16.mxu0 0
        %2974 = vmatpush1.bf16.msra.mxu0 %v2697
        %2975 = vmatprep.subr.bf16.mxu0 0
        %2976 = vmatpush1.bf16.msra.mxu0 %v2698
        %2977 = vmatprep.subr.bf16.mxu0 0
        %2978 = vmatpush1.bf16.msra.mxu0 %v2699
        %2979 = vmatprep.subr.bf16.mxu0 0
        %2980 = vmatpush1.bf16.msra.mxu0 %v2700
        %2981 = vmatprep.subr.bf16.mxu0 0
        %2982 = vmatpush1.bf16.msra.mxu0 %v2701
        %2983 = vmatprep.mubr.bf16.mxu0 %v2345
        %2984 = vmatmul.mubr.bf16.gmra.mrb[0].mxu0 %v2344
        %v2985 = vpop.f32.mrb[0].mxu0
        %v2986 = vadd.f32 %v2825, %v2985
        %v2987 = vpop.f32.mrb[0].mxu0
        %v2988 = vpop.f32.mrb[0].mxu0
        %v2989 = vadd.f32 %v2828, %v2988
        %v2990 = vpop.f32.mrb[0].mxu0
        %2991 = vmatprep.mubr.bf16.mxu0 %v2350
        %2992 = vmatmul.mubr.bf16.gmra.mrb[0].mxu0 %v2349
        %v2993 = vpop.f32.mrb[0].mxu0
        %v2994 = vadd.f32 %v2833, %v2993
        %v2995 = vpop.f32.mrb[0].mxu0
        %v2996 = vpop.f32.mrb[0].mxu0
        %v2997 = vadd.f32 %v2836, %v2996
        %v2998 = vpop.f32.mrb[0].mxu0
        %2999 = vmatprep.mubr.bf16.mxu0 %v2355
        %3000 = vmatmul.mubr.bf16.gmra.mrb[0].mxu0 %v2354
        %v3001 = vpop.f32.mrb[0].mxu0
        %v3002 = vadd.f32 %v2841, %v3001
        %v3003 = vpop.f32.mrb[0].mxu0
        %v3004 = vpop.f32.mrb[0].mxu0
        %v3005 = vadd.f32 %v2844, %v3004
        %v3006 = vpop.f32.mrb[0].mxu0
        %3007 = vmatprep.mubr.bf16.mxu0 %v2360
        %3008 = vmatmul.mubr.bf16.gmra.mrb[0].mxu0 %v2359
        %v3009 = vpop.f32.mrb[0].mxu0
        %v3010 = vadd.f32 %v2849, %v3009
        %v3011 = vpop.f32.mrb[0].mxu0
        %v3012 = vpop.f32.mrb[0].mxu0
        %v3013 = vadd.f32 %v2852, %v3012
        %v3014 = vpop.f32.mrb[0].mxu0
        %3015 = vmatprep.mubr.bf16.mxu0 %v2365
        %3016 = vmatmul.mubr.bf16.gmra.mrb[0].mxu0 %v2364
        %v3017 = vpop.f32.mrb[0].mxu0
        %v3018 = vadd.f32 %v2857, %v3017
        %v3019 = vpop.f32.mrb[0].mxu0
        %v3020 = vpop.f32.mrb[0].mxu0
        %v3021 = vadd.f32 %v2860, %v3020
        %v3022 = vpop.f32.mrb[0].mxu0
        %3023 = vmatprep.mubr.bf16.mxu0 %v2370
        %3024 = vmatmul.mubr.bf16.gmra.mrb[0].mxu0 %v2369
        %v3025 = vpop.f32.mrb[0].mxu0
        %v3026 = vadd.f32 %v2865, %v3025
        %v3027 = vpop.f32.mrb[0].mxu0
        %v3028 = vpop.f32.mrb[0].mxu0
        %v3029 = vadd.f32 %v2868, %v3028
        %v3030 = vpop.f32.mrb[0].mxu0
        %3031 = vmatprep.mubr.bf16.mxu0 %v2375
        %3032 = vmatmul.mubr.bf16.gmra.mrb[0].mxu0 %v2374
        %v3033 = vpop.f32.mrb[0].mxu0
        %v3034 = vadd.f32 %v2873, %v3033
        %v3035 = vpop.f32.mrb[0].mxu0
        %v3036 = vpop.f32.mrb[0].mxu0
        %v3037 = vadd.f32 %v2876, %v3036
        %v3038 = vpop.f32.mrb[0].mxu0
        %3039 = vmatprep.mubr.bf16.mxu0 %v2380
        %3040 = vmatmul.mubr.bf16.gmra.mrb[0].mxu0 %v2379
        %v3041 = vpop.f32.mrb[0].mxu0
        %v3042 = vadd.f32 %v2881, %v3041
        %v3043 = vpop.f32.mrb[0].mxu0
        %v3044 = vpop.f32.mrb[0].mxu0
        %v3045 = vadd.f32 %v2884, %v3044
        %v3046 = vpop.f32.mrb[0].mxu0
        %3047 = vmatprep.mubr.bf16.mxu0 %v2385
        %3048 = vmatmul.mubr.bf16.gmra.mrb[0].mxu0 %v2384
        %v3049 = vpop.f32.mrb[0].mxu0
        %v3050 = vadd.f32 %v2889, %v3049
        %v3051 = vpop.f32.mrb[0].mxu0
        %v3052 = vpop.f32.mrb[0].mxu0
        %v3053 = vadd.f32 %v2892, %v3052
        %v3054 = vpop.f32.mrb[0].mxu0
        %3055 = vmatprep.mubr.bf16.mxu0 %v2390
        %3056 = vmatmul.mubr.bf16.gmra.mrb[0].mxu0 %v2389
        %v3057 = vpop.f32.mrb[0].mxu0
        %v3058 = vadd.f32 %v2897, %v3057
        %v3059 = vpop.f32.mrb[0].mxu0
        %v3060 = vpop.f32.mrb[0].mxu0
        %v3061 = vadd.f32 %v2900, %v3060
        %v3062 = vpop.f32.mrb[0].mxu0
        %3063 = vmatprep.mubr.bf16.mxu0 %v2395
        %3064 = vmatmul.mubr.bf16.gmra.mrb[0].mxu0 %v2394
        %v3065 = vpop.f32.mrb[0].mxu0
        %v3066 = vadd.f32 %v2905, %v3065
        %v3067 = vpop.f32.mrb[0].mxu0
        %v3068 = vpop.f32.mrb[0].mxu0
        %v3069 = vadd.f32 %v2908, %v3068
        %v3070 = vpop.f32.mrb[0].mxu0
        %3071 = vmatprep.mubr.bf16.mxu0 %v2400
        %3072 = vmatmul.mubr.bf16.gmra.mrb[0].mxu0 %v2399
        %v3073 = vpop.f32.mrb[0].mxu0
        %v3074 = vadd.f32 %v2913, %v3073
        %v3075 = vpop.f32.mrb[0].mxu0
        %v3076 = vpop.f32.mrb[0].mxu0
        %v3077 = vadd.f32 %v2916, %v3076
        %v3078 = vpop.f32.mrb[0].mxu0
        %3079 = vmatprep.mubr.bf16.mxu0 %v2405
        %3080 = vmatmul.mubr.bf16.gmra.mrb[0].mxu0 %v2404
        %v3081 = vpop.f32.mrb[0].mxu0
        %v3082 = vadd.f32 %v2921, %v3081
        %v3083 = vpop.f32.mrb[0].mxu0
        %v3084 = vpop.f32.mrb[0].mxu0
        %v3085 = vadd.f32 %v2924, %v3084
        %v3086 = vpop.f32.mrb[0].mxu0
        %3087 = vmatprep.mubr.bf16.mxu0 %v2410
        %3088 = vmatmul.mubr.bf16.gmra.mrb[0].mxu0 %v2409
        %v3089 = vpop.f32.mrb[0].mxu0
        %v3090 = vadd.f32 %v2929, %v3089
        %v3091 = vpop.f32.mrb[0].mxu0
        %v3092 = vpop.f32.mrb[0].mxu0
        %v3093 = vadd.f32 %v2932, %v3092
        %v3094 = vpop.f32.mrb[0].mxu0
        %3095 = vmatprep.mubr.bf16.mxu0 %v2415
        %3096 = vmatmul.mubr.bf16.gmra.mrb[0].mxu0 %v2414
        %v3097 = vpop.f32.mrb[0].mxu0
        %v3098 = vadd.f32 %v2937, %v3097
        %v3099 = vpop.f32.mrb[0].mxu0
        %v3100 = vpop.f32.mrb[0].mxu0
        %v3101 = vadd.f32 %v2940, %v3100
        %v3102 = vpop.f32.mrb[0].mxu0
        %3103 = vmatprep.mubr.bf16.mxu0 %v2420
        %3104 = vmatmul.mubr.bf16.gmra.mrb[0].mxu0 %v2419
        %v3105 = vpop.f32.mrb[0].mxu0
        %v3106 = vadd.f32 %v2945, %v3105
        %v3107 = vpop.f32.mrb[0].mxu0
        %v3108 = vpop.f32.mrb[0].mxu0
        %v3109 = vadd.f32 %v2948, %v3108
        %v3110 = vpop.f32.mrb[0].mxu0
        %3111 = vdwg.mxu0
        %3112 = vmatprep.subr.bf16.mxu0 0
        %3113 = vmatpush1.bf16.msra.mxu0 %v2702
        %3114 = vmatprep.subr.bf16.mxu0 0
        %3115 = vmatpush1.bf16.msra.mxu0 %v2703
        %3116 = vmatprep.subr.bf16.mxu0 0
        %3117 = vmatpush1.bf16.msra.mxu0 %v2704
        %3118 = vmatprep.subr.bf16.mxu0 0
        %3119 = vmatpush1.bf16.msra.mxu0 %v2705
        %3120 = vmatprep.subr.bf16.mxu0 0
        %3121 = vmatpush1.bf16.msra.mxu0 0
        %3122 = vmatprep.subr.bf16.mxu0 0
        %3123 = vmatpush1.bf16.msra.mxu0 0
        %3124 = vmatprep.subr.bf16.mxu0 0
        %3125 = vmatpush1.bf16.msra.mxu0 0
        %3126 = vmatprep.subr.bf16.mxu0 0
        %3127 = vmatpush1.bf16.msra.mxu0 0
        %3128 = vmatprep.subr.bf16.mxu0 0
        %3129 = vmatpush1.bf16.msra.mxu0 0
        %3130 = vmatprep.subr.bf16.mxu0 0
        %3131 = vmatpush1.bf16.msra.mxu0 0
        %3132 = vmatprep.subr.bf16.mxu0 0
        %3133 = vmatpush1.bf16.msra.mxu0 0
        %3134 = vmatprep.subr.bf16.mxu0 0
        %3135 = vmatpush1.bf16.msra.mxu0 0
        %3136 = vmatprep.subr.bf16.mxu0 0
        %3137 = vmatpush1.bf16.msra.mxu0 0
        %3138 = vmatprep.subr.bf16.mxu0 0
        %3139 = vmatpush1.bf16.msra.mxu0 0
        %3140 = vmatprep.subr.bf16.mxu0 0
        %3141 = vmatpush1.bf16.msra.mxu0 0
        %3142 = vmatprep.subr.bf16.mxu0 0
        %3143 = vmatpush1.bf16.msra.mxu0 0
        %3144 = vmatprep.mubr.bf16.mxu0 0
        %3145 = vmatmul.mubr.bf16.gmra.mrb[0].mxu0 %v2743
        %v3146 = vpop.f32.mrb[0].mxu0
        %v3147 = vadd.f32 %v2986, %v3146
        %v3148 = vpop.f32.mrb[0].mxu0
        %v3149 = vpop.f32.mrb[0].mxu0
        %v3150 = vadd.f32 %v2989, %v3149
        %v3151 = vpop.f32.mrb[0].mxu0
        %3152 = vmatprep.mubr.bf16.mxu0 0
        %3153 = vmatmul.mubr.bf16.gmra.mrb[0].mxu0 %v2746
        %v3154 = vpop.f32.mrb[0].mxu0
        %v3155 = vadd.f32 %v2994, %v3154
        %v3156 = vpop.f32.mrb[0].mxu0
        %v3157 = vpop.f32.mrb[0].mxu0
        %v3158 = vadd.f32 %v2997, %v3157
        %v3159 = vpop.f32.mrb[0].mxu0
        %3160 = vmatprep.mubr.bf16.mxu0 0
        %3161 = vmatmul.mubr.bf16.gmra.mrb[0].mxu0 %v2749
        %v3162 = vpop.f32.mrb[0].mxu0
        %v3163 = vadd.f32 %v3002, %v3162
        %v3164 = vpop.f32.mrb[0].mxu0
        %v3165 = vpop.f32.mrb[0].mxu0
        %v3166 = vadd.f32 %v3005, %v3165
        %v3167 = vpop.f32.mrb[0].mxu0
        %3168 = vmatprep.mubr.bf16.mxu0 0
        %3169 = vmatmul.mubr.bf16.gmra.mrb[0].mxu0 %v2752
        %v3170 = vpop.f32.mrb[0].mxu0
        %v3171 = vadd.f32 %v3010, %v3170
        %v3172 = vpop.f32.mrb[0].mxu0
        %v3173 = vpop.f32.mrb[0].mxu0
        %v3174 = vadd.f32 %v3013, %v3173
        %v3175 = vpop.f32.mrb[0].mxu0
        %3176 = vmatprep.mubr.bf16.mxu0 0
        %3177 = vmatmul.mubr.bf16.gmra.mrb[0].mxu0 %v2755
        %v3178 = vpop.f32.mrb[0].mxu0
        %v3179 = vadd.f32 %v3018, %v3178
        %v3180 = vpop.f32.mrb[0].mxu0
        %v3181 = vpop.f32.mrb[0].mxu0
        %v3182 = vadd.f32 %v3021, %v3181
        %v3183 = vpop.f32.mrb[0].mxu0
        %3184 = vmatprep.mubr.bf16.mxu0 0
        %3185 = vmatmul.mubr.bf16.gmra.mrb[0].mxu0 %v2758
        %v3186 = vpop.f32.mrb[0].mxu0
        %v3187 = vadd.f32 %v3026, %v3186
        %v3188 = vpop.f32.mrb[0].mxu0
        %v3189 = vpop.f32.mrb[0].mxu0
        %v3190 = vadd.f32 %v3029, %v3189
        %v3191 = vpop.f32.mrb[0].mxu0
        %3192 = vmatprep.mubr.bf16.mxu0 0
        %3193 = vmatmul.mubr.bf16.gmra.mrb[0].mxu0 %v2761
        %v3194 = vpop.f32.mrb[0].mxu0
        %v3195 = vadd.f32 %v3034, %v3194
        %v3196 = vpop.f32.mrb[0].mxu0
        %v3197 = vpop.f32.mrb[0].mxu0
        %v3198 = vadd.f32 %v3037, %v3197
        %v3199 = vpop.f32.mrb[0].mxu0
        %3200 = vmatprep.mubr.bf16.mxu0 0
        %3201 = vmatmul.mubr.bf16.gmra.mrb[0].mxu0 %v2764
        %v3202 = vpop.f32.mrb[0].mxu0
        %v3203 = vadd.f32 %v3042, %v3202
        %v3204 = vpop.f32.mrb[0].mxu0
        %v3205 = vpop.f32.mrb[0].mxu0
        %v3206 = vadd.f32 %v3045, %v3205
        %v3207 = vpop.f32.mrb[0].mxu0
        %3208 = vmatprep.mubr.bf16.mxu0 0
        %3209 = vmatmul.mubr.bf16.gmra.mrb[0].mxu0 %v2767
        %v3210 = vpop.f32.mrb[0].mxu0
        %v3211 = vadd.f32 %v3050, %v3210
        %v3212 = vpop.f32.mrb[0].mxu0
        %v3213 = vpop.f32.mrb[0].mxu0
        %v3214 = vadd.f32 %v3053, %v3213
        %v3215 = vpop.f32.mrb[0].mxu0
        %3216 = vmatprep.mubr.bf16.mxu0 0
        %3217 = vmatmul.mubr.bf16.gmra.mrb[0].mxu0 %v2770
        %v3218 = vpop.f32.mrb[0].mxu0
        %v3219 = vadd.f32 %v3058, %v3218
        %v3220 = vpop.f32.mrb[0].mxu0
        %v3221 = vpop.f32.mrb[0].mxu0
        %v3222 = vadd.f32 %v3061, %v3221
        %v3223 = vpop.f32.mrb[0].mxu0
        %3224 = vmatprep.mubr.bf16.mxu0 0
        %3225 = vmatmul.mubr.bf16.gmra.mrb[0].mxu0 %v2773
        %v3226 = vpop.f32.mrb[0].mxu0
        %v3227 = vadd.f32 %v3066, %v3226
        %v3228 = vpop.f32.mrb[0].mxu0
        %v3229 = vpop.f32.mrb[0].mxu0
        %v3230 = vadd.f32 %v3069, %v3229
        %v3231 = vpop.f32.mrb[0].mxu0
        %3232 = vmatprep.mubr.bf16.mxu0 0
        %3233 = vmatmul.mubr.bf16.gmra.mrb[0].mxu0 %v2776
        %v3234 = vpop.f32.mrb[0].mxu0
        %v3235 = vadd.f32 %v3074, %v3234
        %v3236 = vpop.f32.mrb[0].mxu0
        %v3237 = vpop.f32.mrb[0].mxu0
        %v3238 = vadd.f32 %v3077, %v3237
        %v3239 = vpop.f32.mrb[0].mxu0
        %3240 = vmatprep.mubr.bf16.mxu0 0
        %3241 = vmatmul.mubr.bf16.gmra.mrb[0].mxu0 %v2779
        %v3242 = vpop.f32.mrb[0].mxu0
        %v3243 = vadd.f32 %v3082, %v3242
        %v3244 = vpop.f32.mrb[0].mxu0
        %v3245 = vpop.f32.mrb[0].mxu0
        %v3246 = vadd.f32 %v3085, %v3245
        %v3247 = vpop.f32.mrb[0].mxu0
        %3248 = vmatprep.mubr.bf16.mxu0 0
        %3249 = vmatmul.mubr.bf16.gmra.mrb[0].mxu0 %v2782
        %v3250 = vpop.f32.mrb[0].mxu0
        %v3251 = vadd.f32 %v3090, %v3250
        %v3252 = vpop.f32.mrb[0].mxu0
        %v3253 = vpop.f32.mrb[0].mxu0
        %v3254 = vadd.f32 %v3093, %v3253
        %v3255 = vpop.f32.mrb[0].mxu0
        %3256 = vmatprep.mubr.bf16.mxu0 0
        %3257 = vmatmul.mubr.bf16.gmra.mrb[0].mxu0 %v2785
        %v3258 = vpop.f32.mrb[0].mxu0
        %v3259 = vadd.f32 %v3098, %v3258
        %v3260 = vpop.f32.mrb[0].mxu0
        %v3261 = vpop.f32.mrb[0].mxu0
        %v3262 = vadd.f32 %v3101, %v3261
        %v3263 = vpop.f32.mrb[0].mxu0
        %3264 = vmatprep.mubr.bf16.mxu0 0
        %3265 = vmatmul.mubr.bf16.gmra.mrb[0].mxu0 %v2788
        %v3266 = vpop.f32.mrb[0].mxu0
        %v3267 = vadd.f32 %v3106, %v3266
        %v3268 = vpop.f32.mrb[0].mxu0
        %v3269 = vpop.f32.mrb[0].mxu0
        %v3270 = vadd.f32 %v3109, %v3269
        %v3271 = vpop.f32.mrb[0].mxu0
        %3272 = vdwg.mxu0
        %v3273 = vadd.f32 %v2422, %v3147
        %v3274 = vadd.f32 %v2423, %v3150
        %v3275 = vadd.f32 %v2424, %v3155
        %v3276 = vadd.f32 %v2425, %v3158
        %v3277 = vadd.f32 %v2426, %v3163
        %v3278 = vadd.f32 %v2427, %v3166
        %v3279 = vadd.f32 %v2428, %v3171
        %v3280 = vadd.f32 %v2429, %v3174
        %v3281 = vadd.f32 %v2430, %v3179
        %v3282 = vadd.f32 %v2431, %v3182
        %v3283 = vadd.f32 %v2432, %v3187
        %v3284 = vadd.f32 %v2433, %v3190
        %v3285 = vadd.f32 %v2434, %v3195
        %v3286 = vadd.f32 %v2435, %v3198
        %v3287 = vadd.f32 %v2436, %v3203
        %v3288 = vadd.f32 %v2437, %v3206
        %v3289 = vadd.f32 %v2438, %v3211
        %v3290 = vadd.f32 %v2439, %v3214
        %v3291 = vadd.f32 %v2440, %v3219
        %v3292 = vadd.f32 %v2441, %v3222
        %v3293 = vadd.f32 %v2442, %v3227
        %v3294 = vadd.f32 %v2443, %v3230
        %v3295 = vadd.f32 %v2444, %v3235
        %v3296 = vadd.f32 %v2445, %v3238
        %v3297 = vadd.f32 %v2446, %v3243
        %v3298 = vadd.f32 %v2447, %v3246
        %v3299 = vadd.f32 %v2448, %v3251
        %v3300 = vadd.f32 %v2449, %v3254
        %v3301 = vadd.f32 %v2450, %v3259
        %v3302 = vadd.f32 %v2451, %v3262
        %v3303 = vadd.f32 %v2452, %v3267
        %v3304 = vadd.f32 %v2453, %v3270
        %v3305 = vsel %vm338, %v3273, 0.0
        %v3306 = vsel %vm338, %v3274, 0.0
        %v3307 = vadd.f32 %v3305, %v3306
        %v3308 = vsel %vm338, %v3275, 0.0
        %v3309 = vadd.f32 %v3307, %v3308
        %v3310 = vsel %vm338, %v3276, 0.0
        %v3311 = vadd.f32 %v3309, %v3310
        %v3312 = vsel %vm338, %v3277, 0.0
        %v3313 = vadd.f32 %v3311, %v3312
        %v3314 = vsel %vm338, %v3278, 0.0
        %v3315 = vadd.f32 %v3313, %v3314
        %v3316 = vsel %vm338, %v3279, 0.0
        %v3317 = vadd.f32 %v3315, %v3316
        %v3318 = vsel %vm338, %v3280, 0.0
        %v3319 = vadd.f32 %v3317, %v3318
        %v3320 = vsel %vm338, %v3281, 0.0
        %v3321 = vadd.f32 %v3319, %v3320
        %v3322 = vsel %vm338, %v3282, 0.0
        %v3323 = vadd.f32 %v3321, %v3322
        %v3324 = vsel %vm338, %v3283, 0.0
        %v3325 = vadd.f32 %v3323, %v3324
        %v3326 = vsel %vm338, %v3284, 0.0
        %v3327 = vadd.f32 %v3325, %v3326
        %v3328 = vsel %vm338, %v3285, 0.0
        %v3329 = vadd.f32 %v3327, %v3328
        %v3330 = vsel %vm338, %v3286, 0.0
        %v3331 = vadd.f32 %v3329, %v3330
        %v3332 = vsel %vm338, %v3287, 0.0
        %v3333 = vadd.f32 %v3331, %v3332
        %v3334 = vsel %vm338, %v3288, 0.0
        %v3335 = vadd.f32 %v3333, %v3334
        %v3336 = vsel %vm338, %v3289, 0.0
        %v3337 = vadd.f32 %v3335, %v3336
        %v3338 = vsel %vm338, %v3290, 0.0
        %v3339 = vadd.f32 %v3337, %v3338
        %v3340 = vsel %vm338, %v3291, 0.0
        %v3341 = vadd.f32 %v3339, %v3340
        %v3342 = vsel %vm338, %v3292, 0.0
        %v3343 = vadd.f32 %v3341, %v3342
        %v3344 = vsel %vm338, %v3293, 0.0
        %v3345 = vadd.f32 %v3343, %v3344
        %v3346 = vsel %vm338, %v3294, 0.0
        %v3347 = vadd.f32 %v3345, %v3346
        %v3348 = vsel %vm338, %v3295, 0.0
        %v3349 = vadd.f32 %v3347, %v3348
        %v3350 = vsel %vm338, %v3296, 0.0
        %v3351 = vadd.f32 %v3349, %v3350
        %v3352 = vsel %vm338, %v3297, 0.0
        %v3353 = vadd.f32 %v3351, %v3352
        %v3354 = vsel %vm338, %v3298, 0.0
        %v3355 = vadd.f32 %v3353, %v3354
        %v3356 = vsel %vm338, %v3299, 0.0
        %v3357 = vadd.f32 %v3355, %v3356
        %v3358 = vsel %vm338, %v3300, 0.0
        %v3359 = vadd.f32 %v3357, %v3358
        %v3360 = vsel %vm338, %v3301, 0.0
        %v3361 = vadd.f32 %v3359, %v3360
        %v3362 = vsel %vm338, %v3302, 0.0
        %v3363 = vadd.f32 %v3361, %v3362
        %v3364 = vsel %vm338, %v3303, 0.0
        %v3365 = vadd.f32 %v3363, %v3364
        %v3366 = vsel %vm338, %v3304, 0.0
        %v3367 = vadd.f32 %v3365, %v3366
        %v3368 = vrot.slane %v3367, 4
        %v3369 = vadd.f32 %v3367, %v3368
        %v3370 = vrot.slane %v3369, 2
        %v3371 = vadd.f32 %v3369, %v3370
        %v3372 = vrot.slane %v3371, 1
        %v3373 = vadd.f32 %v3371, %v3372
        %v3374 = vmul.f32 %v3273, %v3273
        %v3375 = vmul.f32 %v3274, %v3274
        %v3376 = vmul.f32 %v3275, %v3275
        %v3377 = vmul.f32 %v3276, %v3276
        %v3378 = vmul.f32 %v3277, %v3277
        %v3379 = vmul.f32 %v3278, %v3278
        %v3380 = vmul.f32 %v3279, %v3279
        %v3381 = vmul.f32 %v3280, %v3280
        %v3382 = vmul.f32 %v3281, %v3281
        %v3383 = vmul.f32 %v3282, %v3282
        %v3384 = vmul.f32 %v3283, %v3283
        %v3385 = vmul.f32 %v3284, %v3284
        %v3386 = vmul.f32 %v3285, %v3285
        %v3387 = vmul.f32 %v3286, %v3286
        %v3388 = vmul.f32 %v3287, %v3287
        %v3389 = vmul.f32 %v3288, %v3288
        %v3390 = vmul.f32 %v3289, %v3289
        %v3391 = vmul.f32 %v3290, %v3290
        %v3392 = vmul.f32 %v3291, %v3291
        %v3393 = vmul.f32 %v3292, %v3292
        %v3394 = vmul.f32 %v3293, %v3293
        %v3395 = vmul.f32 %v3294, %v3294
        %v3396 = vmul.f32 %v3295, %v3295
        %v3397 = vmul.f32 %v3296, %v3296
        %v3398 = vmul.f32 %v3297, %v3297
        %v3399 = vmul.f32 %v3298, %v3298
        %v3400 = vmul.f32 %v3299, %v3299
        %v3401 = vmul.f32 %v3300, %v3300
        %v3402 = vmul.f32 %v3301, %v3301
        %v3403 = vmul.f32 %v3302, %v3302
        %v3404 = vmul.f32 %v3303, %v3303
        %v3405 = vmul.f32 %v3304, %v3304
        %v3406 = vsel %vm338, %v3374, 0.0
        %v3407 = vsel %vm338, %v3375, 0.0
        %v3408 = vadd.f32 %v3406, %v3407
        %v3409 = vsel %vm338, %v3376, 0.0
        %v3410 = vadd.f32 %v3408, %v3409
        %v3411 = vsel %vm338, %v3377, 0.0
        %v3412 = vadd.f32 %v3410, %v3411
        %v3413 = vsel %vm338, %v3378, 0.0
        %v3414 = vadd.f32 %v3412, %v3413
        %v3415 = vsel %vm338, %v3379, 0.0
        %v3416 = vadd.f32 %v3414, %v3415
        %v3417 = vsel %vm338, %v3380, 0.0
        %v3418 = vadd.f32 %v3416, %v3417
        %v3419 = vsel %vm338, %v3381, 0.0
        %v3420 = vadd.f32 %v3418, %v3419
        %v3421 = vsel %vm338, %v3382, 0.0
        %v3422 = vadd.f32 %v3420, %v3421
        %v3423 = vsel %vm338, %v3383, 0.0
        %v3424 = vadd.f32 %v3422, %v3423
        %v3425 = vsel %vm338, %v3384, 0.0
        %v3426 = vadd.f32 %v3424, %v3425
        %v3427 = vsel %vm338, %v3385, 0.0
        %v3428 = vadd.f32 %v3426, %v3427
        %v3429 = vsel %vm338, %v3386, 0.0
        %v3430 = vadd.f32 %v3428, %v3429
        %v3431 = vsel %vm338, %v3387, 0.0
        %v3432 = vadd.f32 %v3430, %v3431
        %v3433 = vsel %vm338, %v3388, 0.0
        %v3434 = vadd.f32 %v3432, %v3433
        %v3435 = vsel %vm338, %v3389, 0.0
        %v3436 = vadd.f32 %v3434, %v3435
        %v3437 = vsel %vm338, %v3390, 0.0
        %v3438 = vadd.f32 %v3436, %v3437
        %v3439 = vsel %vm338, %v3391, 0.0
        %v3440 = vadd.f32 %v3438, %v3439
        %v3441 = vsel %vm338, %v3392, 0.0
        %v3442 = vadd.f32 %v3440, %v3441
        %v3443 = vsel %vm338, %v3393, 0.0
        %v3444 = vadd.f32 %v3442, %v3443
        %v3445 = vsel %vm338, %v3394, 0.0
        %v3446 = vadd.f32 %v3444, %v3445
        %v3447 = vsel %vm338, %v3395, 0.0
        %v3448 = vadd.f32 %v3446, %v3447
        %v3449 = vsel %vm338, %v3396, 0.0
        %v3450 = vadd.f32 %v3448, %v3449
        %v3451 = vsel %vm338, %v3397, 0.0
        %v3452 = vadd.f32 %v3450, %v3451
        %v3453 = vsel %vm338, %v3398, 0.0
        %v3454 = vadd.f32 %v3452, %v3453
        %v3455 = vsel %vm338, %v3399, 0.0
        %v3456 = vadd.f32 %v3454, %v3455
        %v3457 = vsel %vm338, %v3400, 0.0
        %v3458 = vadd.f32 %v3456, %v3457
        %v3459 = vsel %vm338, %v3401, 0.0
        %v3460 = vadd.f32 %v3458, %v3459
        %v3461 = vsel %vm338, %v3402, 0.0
        %v3462 = vadd.f32 %v3460, %v3461
        %v3463 = vsel %vm338, %v3403, 0.0
        %v3464 = vadd.f32 %v3462, %v3463
        %v3465 = vsel %vm338, %v3404, 0.0
        %v3466 = vadd.f32 %v3464, %v3465
        %v3467 = vsel %vm338, %v3405, 0.0
        %v3468 = vadd.f32 %v3466, %v3467
        %v3469 = vrot.slane %v3468, 4
        %v3470 = vadd.f32 %v3468, %v3469
        %v3471 = vrot.slane %v3470, 2
        %v3472 = vadd.f32 %v3470, %v3471
        %v3473 = vrot.slane %v3472, 1
        %v3474 = vadd.f32 %v3472, %v3473
        %v3475 = vmul.f32 %v3373, 0.00390625
        %v3476 = vmul.f32 %v3474, 0.00390625
        %v3477 = vmul.f32 %v3475, %v3475
        %v3478 = vsub.f32 %v3476, %v3477
        %v3479 = vsub.f32 %v3273, %v3475
        %v3480 = vsub.f32 %v3274, %v3475
        %v3481 = vsub.f32 %v3275, %v3475
        %v3482 = vsub.f32 %v3276, %v3475
        %v3483 = vsub.f32 %v3277, %v3475
        %v3484 = vsub.f32 %v3278, %v3475
        %v3485 = vsub.f32 %v3279, %v3475
        %v3486 = vsub.f32 %v3280, %v3475
        %v3487 = vsub.f32 %v3281, %v3475
        %v3488 = vsub.f32 %v3282, %v3475
        %v3489 = vsub.f32 %v3283, %v3475
        %v3490 = vsub.f32 %v3284, %v3475
        %v3491 = vsub.f32 %v3285, %v3475
        %v3492 = vsub.f32 %v3286, %v3475
        %v3493 = vsub.f32 %v3287, %v3475
        %v3494 = vsub.f32 %v3288, %v3475
        %v3495 = vsub.f32 %v3289, %v3475
        %v3496 = vsub.f32 %v3290, %v3475
        %v3497 = vsub.f32 %v3291, %v3475
        %v3498 = vsub.f32 %v3292, %v3475
        %v3499 = vsub.f32 %v3293, %v3475
        %v3500 = vsub.f32 %v3294, %v3475
        %v3501 = vsub.f32 %v3295, %v3475
        %v3502 = vsub.f32 %v3296, %v3475
        %v3503 = vsub.f32 %v3297, %v3475
        %v3504 = vsub.f32 %v3298, %v3475
        %v3505 = vsub.f32 %v3299, %v3475
        %v3506 = vsub.f32 %v3300, %v3475
        %v3507 = vsub.f32 %v3301, %v3475
        %v3508 = vsub.f32 %v3302, %v3475
        %v3509 = vsub.f32 %v3303, %v3475
        %v3510 = vsub.f32 %v3304, %v3475
        %v3511 = vadd.f32 %v3478, 1e-05
        %v3512 = vrsqrt.pop %v3511
        %v3513 = vmul.f32 %v3479, %v3512
        %v3514 = vmul.f32 %v3480, %v3512
        %v3515 = vmul.f32 %v3481, %v3512
        %v3516 = vmul.f32 %v3482, %v3512
        %v3517 = vmul.f32 %v3483, %v3512
        %v3518 = vmul.f32 %v3484, %v3512
        %v3519 = vmul.f32 %v3485, %v3512
        %v3520 = vmul.f32 %v3486, %v3512
        %v3521 = vmul.f32 %v3487, %v3512
        %v3522 = vmul.f32 %v3488, %v3512
        %v3523 = vmul.f32 %v3489, %v3512
        %v3524 = vmul.f32 %v3490, %v3512
        %v3525 = vmul.f32 %v3491, %v3512
        %v3526 = vmul.f32 %v3492, %v3512
        %v3527 = vmul.f32 %v3493, %v3512
        %v3528 = vmul.f32 %v3494, %v3512
        %v3529 = vmul.f32 %v3495, %v3512
        %v3530 = vmul.f32 %v3496, %v3512
        %v3531 = vmul.f32 %v3497, %v3512
        %v3532 = vmul.f32 %v3498, %v3512
        %v3533 = vmul.f32 %v3499, %v3512
        %v3534 = vmul.f32 %v3500, %v3512
        %v3535 = vmul.f32 %v3501, %v3512
        %v3536 = vmul.f32 %v3502, %v3512
        %v3537 = vmul.f32 %v3503, %v3512
        %v3538 = vmul.f32 %v3504, %v3512
        %v3539 = vmul.f32 %v3505, %v3512
        %v3540 = vmul.f32 %v3506, %v3512
        %v3541 = vmul.f32 %v3507, %v3512
        %v3542 = vmul.f32 %v3508, %v3512
        %v3543 = vmul.f32 %v3509, %v3512
        %v3544 = vmul.f32 %v3510, %v3512
        %v3545 = vld [vmem:[%s3] sm:$0x1]
        %v3547 = vlaneseq
        %v3548 = vshrl.u32 %v3547, 7
        %v3549 = vsub.s32 0, %v3548
        %v3550 = vrot.slane %v3545, %v3549
        %v3552 = vmul.f32 %v3513, %v3550
        %v3553 = vmul.f32 %v3514, %v3550
        %v3554 = vmul.f32 %v3515, %v3550
        %v3555 = vmul.f32 %v3516, %v3550
        %v3556 = vmul.f32 %v3517, %v3550
        %v3557 = vmul.f32 %v3518, %v3550
        %v3558 = vmul.f32 %v3519, %v3550
        %v3559 = vmul.f32 %v3520, %v3550
        %v3560 = vmul.f32 %v3521, %v3550
        %v3561 = vmul.f32 %v3522, %v3550
        %v3562 = vmul.f32 %v3523, %v3550
        %v3563 = vmul.f32 %v3524, %v3550
        %v3564 = vmul.f32 %v3525, %v3550
        %v3565 = vmul.f32 %v3526, %v3550
        %v3566 = vmul.f32 %v3527, %v3550
        %v3567 = vmul.f32 %v3528, %v3550
        %v3568 = vmul.f32 %v3529, %v3550
        %v3569 = vmul.f32 %v3530, %v3550
        %v3570 = vmul.f32 %v3531, %v3550
        %v3571 = vmul.f32 %v3532, %v3550
        %v3572 = vmul.f32 %v3533, %v3550
        %v3573 = vmul.f32 %v3534, %v3550
        %v3574 = vmul.f32 %v3535, %v3550
        %v3575 = vmul.f32 %v3536, %v3550
        %v3576 = vmul.f32 %v3537, %v3550
        %v3577 = vmul.f32 %v3538, %v3550
        %v3578 = vmul.f32 %v3539, %v3550
        %v3579 = vmul.f32 %v3540, %v3550
        %v3580 = vmul.f32 %v3541, %v3550
        %v3581 = vmul.f32 %v3542, %v3550
        %v3582 = vmul.f32 %v3543, %v3550
        %v3583 = vmul.f32 %v3544, %v3550
        %v3584 = vld [vmem:[%s4] sm:$0x1]
        %v3586 = vlaneseq
        %v3587 = vshrl.u32 %v3586, 7
        %v3588 = vsub.s32 0, %v3587
        %v3589 = vrot.slane %v3584, %v3588
        %v3591 = vadd.f32 %v3552, %v3589
        %v3592 = vadd.f32 %v3553, %v3589
        %v3593 = vadd.f32 %v3554, %v3589
        %v3594 = vadd.f32 %v3555, %v3589
        %v3595 = vadd.f32 %v3556, %v3589
        %v3596 = vadd.f32 %v3557, %v3589
        %v3597 = vadd.f32 %v3558, %v3589
        %v3598 = vadd.f32 %v3559, %v3589
        %v3599 = vadd.f32 %v3560, %v3589
        %v3600 = vadd.f32 %v3561, %v3589
        %v3601 = vadd.f32 %v3562, %v3589
        %v3602 = vadd.f32 %v3563, %v3589
        %v3603 = vadd.f32 %v3564, %v3589
        %v3604 = vadd.f32 %v3565, %v3589
        %v3605 = vadd.f32 %v3566, %v3589
        %v3606 = vadd.f32 %v3567, %v3589
        %v3607 = vadd.f32 %v3568, %v3589
        %v3608 = vadd.f32 %v3569, %v3589
        %v3609 = vadd.f32 %v3570, %v3589
        %v3610 = vadd.f32 %v3571, %v3589
        %v3611 = vadd.f32 %v3572, %v3589
        %v3612 = vadd.f32 %v3573, %v3589
        %v3613 = vadd.f32 %v3574, %v3589
        %v3614 = vadd.f32 %v3575, %v3589
        %v3615 = vadd.f32 %v3576, %v3589
        %v3616 = vadd.f32 %v3577, %v3589
        %v3617 = vadd.f32 %v3578, %v3589
        %v3618 = vadd.f32 %v3579, %v3589
        %v3619 = vadd.f32 %v3580, %v3589
        %v3620 = vadd.f32 %v3581, %v3589
        %v3621 = vadd.f32 %v3582, %v3589
        %v3622 = vadd.f32 %v3583, %v3589
        %v3623 = vmul.f32 %v3591, 0.2
        %v3624 = vmul.f32 %v3592, 0.2
        %v3625 = vmul.f32 %v3593, 0.2
        %v3626 = vmul.f32 %v3594, 0.2
        %v3627 = vmul.f32 %v3595, 0.2
        %v3628 = vmul.f32 %v3596, 0.2
        %v3629 = vmul.f32 %v3597, 0.2
        %v3630 = vmul.f32 %v3598, 0.2
        %v3631 = vmul.f32 %v3599, 0.2
        %v3632 = vmul.f32 %v3600, 0.2
        %v3633 = vmul.f32 %v3601, 0.2
        %v3634 = vmul.f32 %v3602, 0.2
        %v3635 = vmul.f32 %v3603, 0.2
        %v3636 = vmul.f32 %v3604, 0.2
        %v3637 = vmul.f32 %v3605, 0.2
        %v3638 = vmul.f32 %v3606, 0.2
        %v3639 = vmul.f32 %v3607, 0.2
        %v3640 = vmul.f32 %v3608, 0.2
        %v3641 = vmul.f32 %v3609, 0.2
        %v3642 = vmul.f32 %v3610, 0.2
        %v3643 = vmul.f32 %v3611, 0.2
        %v3644 = vmul.f32 %v3612, 0.2
        %v3645 = vmul.f32 %v3613, 0.2
        %v3646 = vmul.f32 %v3614, 0.2
        %v3647 = vmul.f32 %v3615, 0.2
        %v3648 = vmul.f32 %v3616, 0.2
        %v3649 = vmul.f32 %v3617, 0.2
        %v3650 = vmul.f32 %v3618, 0.2
        %v3651 = vmul.f32 %v3619, 0.2
        %v3652 = vmul.f32 %v3620, 0.2
        %v3653 = vmul.f32 %v3621, 0.2
        %v3654 = vmul.f32 %v3622, 0.2
        %v3655 = vmax.f32 %v3591, %v3623
        %v3656 = vmax.f32 %v3592, %v3624
        %v3657 = vmax.f32 %v3593, %v3625
        %v3658 = vmax.f32 %v3594, %v3626
        %v3659 = vmax.f32 %v3595, %v3627
        %v3660 = vmax.f32 %v3596, %v3628
        %v3661 = vmax.f32 %v3597, %v3629
        %v3662 = vmax.f32 %v3598, %v3630
        %v3663 = vmax.f32 %v3599, %v3631
        %v3664 = vmax.f32 %v3600, %v3632
        %v3665 = vmax.f32 %v3601, %v3633
        %v3666 = vmax.f32 %v3602, %v3634
        %v3667 = vmax.f32 %v3603, %v3635
        %v3668 = vmax.f32 %v3604, %v3636
        %v3669 = vmax.f32 %v3605, %v3637
        %v3670 = vmax.f32 %v3606, %v3638
        %v3671 = vmax.f32 %v3607, %v3639
        %v3672 = vmax.f32 %v3608, %v3640
        %v3673 = vmax.f32 %v3609, %v3641
        %v3674 = vmax.f32 %v3610, %v3642
        %v3675 = vmax.f32 %v3611, %v3643
        %v3676 = vmax.f32 %v3612, %v3644
        %v3677 = vmax.f32 %v3613, %v3645
        %v3678 = vmax.f32 %v3614, %v3646
        %v3679 = vmax.f32 %v3615, %v3647
        %v3680 = vmax.f32 %v3616, %v3648
        %v3681 = vmax.f32 %v3617, %v3649
        %v3682 = vmax.f32 %v3618, %v3650
        %v3683 = vmax.f32 %v3619, %v3651
        %v3684 = vmax.f32 %v3620, %v3652
        %v3685 = vmax.f32 %v3621, %v3653
        %v3686 = vmax.f32 %v3622, %v3654
        %v3687 = vpack.c.bf16 %v3656, %v3655
        %v3688 = vpack.c.bf16 %v3658, %v3657
        %v3689 = vpack.c.bf16 %v3660, %v3659
        %v3690 = vpack.c.bf16 %v3662, %v3661
        %v3691 = vpack.c.bf16 %v3664, %v3663
        %v3692 = vpack.c.bf16 %v3666, %v3665
        %v3693 = vpack.c.bf16 %v3668, %v3667
        %v3694 = vpack.c.bf16 %v3670, %v3669
        %v3695 = vpack.c.bf16 %v3672, %v3671
        %v3696 = vpack.c.bf16 %v3674, %v3673
        %v3697 = vpack.c.bf16 %v3676, %v3675
        %v3698 = vpack.c.bf16 %v3678, %v3677
        %v3699 = vpack.c.bf16 %v3680, %v3679
        %v3700 = vpack.c.bf16 %v3682, %v3681
        %v3701 = vpack.c.bf16 %v3684, %v3683
        %v3702 = vpack.c.bf16 %v3686, %v3685
        %3703 = vst.msk [vmem:[%s354 + $0x8] sm:$0xff] %vm338, %v3687
        %3704 = vst.msk [vmem:[%s354 + $0x20] sm:$0xff] %vm338, %v3688
        %3705 = vst.msk [vmem:[%s354 + $0x38] sm:$0xff] %vm338, %v3689
        %3706 = vst.msk [vmem:[%s354 + $0x50] sm:$0xff] %vm338, %v3690
        %3707 = vst.msk [vmem:[%s354 + $0x68] sm:$0xff] %vm338, %v3691
        %3708 = vst.msk [vmem:[%s354 + $0x80] sm:$0xff] %vm338, %v3692
        %3709 = vst.msk [vmem:[%s354 + $0x98] sm:$0xff] %vm338, %v3693
        %3710 = vst.msk [vmem:[%s354 + $0xb0] sm:$0xff] %vm338, %v3694
        %3711 = vst.msk [vmem:[%s354 + $0xc8] sm:$0xff] %vm338, %v3695
        %3712 = vst.msk [vmem:[%s354 + $0xe0] sm:$0xff] %vm338, %v3696
        %3713 = vst.msk [vmem:[%s354 + $0xf8] sm:$0xff] %vm338, %v3697
        %3714 = vst.msk [vmem:[%s354 + $0x110] sm:$0xff] %vm338, %v3698
        %3715 = vst.msk [vmem:[%s354 + $0x128] sm:$0xff] %vm338, %v3699
        %3716 = vst.msk [vmem:[%s354 + $0x140] sm:$0xff] %vm338, %v3700
        %3717 = vst.msk [vmem:[%s354 + $0x158] sm:$0xff] %vm338, %v3701
        %3718 = vst.msk [vmem:[%s354 + $0x170] sm:$0xff] %vm338, %v3702
        %v3719 = vld [vmem:[#allocation2] sm:$0x80]
        %v3720 = vld [vmem:[#allocation2 + $0x8] sm:$0xff]
        %v3721 = vld [vmem:[#allocation2 + $0x18] sm:$0x80]
        %v3722 = vld [vmem:[#allocation2 + $0x20] sm:$0xff]
        %v3723 = vld [vmem:[#allocation2 + $0x30] sm:$0x80]
        %v3724 = vld [vmem:[#allocation2 + $0x38] sm:$0xff]
        %v3725 = vld [vmem:[#allocation2 + $0x48] sm:$0x80]
        %v3726 = vld [vmem:[#allocation2 + $0x50] sm:$0xff]
        %v3727 = vld [vmem:[#allocation2 + $0x60] sm:$0x80]
        %v3728 = vld [vmem:[#allocation2 + $0x68] sm:$0xff]
        %v3729 = vld [vmem:[#allocation2 + $0x78] sm:$0x80]
        %v3730 = vld [vmem:[#allocation2 + $0x80] sm:$0xff]
        %v3731 = vld [vmem:[#allocation2 + $0x90] sm:$0x80]
        %v3732 = vld [vmem:[#allocation2 + $0x98] sm:$0xff]
        %v3733 = vld [vmem:[#allocation2 + $0xa8] sm:$0x80]
        %v3734 = vld [vmem:[#allocation2 + $0xb0] sm:$0xff]
        %v3735 = vld [vmem:[#allocation2 + $0xc0] sm:$0x80]
        %v3736 = vld [vmem:[#allocation2 + $0xc8] sm:$0xff]
        %v3737 = vld [vmem:[#allocation2 + $0xd8] sm:$0x80]
        %v3738 = vld [vmem:[#allocation2 + $0xe0] sm:$0xff]
        %v3739 = vld [vmem:[#allocation2 + $0xf0] sm:$0x80]
        %v3740 = vld [vmem:[#allocation2 + $0xf8] sm:$0xff]
        %v3741 = vld [vmem:[#allocation2 + $0x108] sm:$0x80]
        %v3742 = vld [vmem:[#allocation2 + $0x110] sm:$0xff]
        %v3743 = vld [vmem:[#allocation2 + $0x120] sm:$0x80]
        %v3744 = vld [vmem:[#allocation2 + $0x128] sm:$0xff]
        %v3745 = vld [vmem:[#allocation2 + $0x138] sm:$0x80]
        %v3746 = vld [vmem:[#allocation2 + $0x140] sm:$0xff]
        %v3747 = vld [vmem:[#allocation2 + $0x150] sm:$0x80]
        %v3748 = vld [vmem:[#allocation2 + $0x158] sm:$0xff]
        %v3749 = vld [vmem:[#allocation2 + $0x168] sm:$0x80]
        %v3750 = vld [vmem:[#allocation2 + $0x170] sm:$0xff]
        %v3752 = vshrl.u32 %v3719, 16
        %v3754 = vrot.slane %v3752, 7
        %v3756 = vshrl.u32 %v3720, 16
        %v3758 = vrot.slane %v3756, 7
        %v3759 = vshll.u32 %v3720, 16
        %v3761 = vor.u32 %v3758, %v3759
        %v3762 = vsel %vm341, %v3754, %v3761
        %v3764 = vshrl.u32 %v3721, 16
        %v3766 = vrot.slane %v3764, 7
        %v3768 = vshrl.u32 %v3722, 16
        %v3770 = vrot.slane %v3768, 7
        %v3771 = vshll.u32 %v3722, 16
        %v3773 = vor.u32 %v3770, %v3771
        %v3774 = vsel %vm341, %v3766, %v3773
        %v3776 = vshrl.u32 %v3723, 16
        %v3778 = vrot.slane %v3776, 7
        %v3780 = vshrl.u32 %v3724, 16
        %v3782 = vrot.slane %v3780, 7
        %v3783 = vshll.u32 %v3724, 16
        %v3785 = vor.u32 %v3782, %v3783
        %v3786 = vsel %vm341, %v3778, %v3785
        %v3788 = vshrl.u32 %v3725, 16
        %v3790 = vrot.slane %v3788, 7
        %v3792 = vshrl.u32 %v3726, 16
        %v3794 = vrot.slane %v3792, 7
        %v3795 = vshll.u32 %v3726, 16
        %v3797 = vor.u32 %v3794, %v3795
        %v3798 = vsel %vm341, %v3790, %v3797
        %v3800 = vshrl.u32 %v3727, 16
        %v3802 = vrot.slane %v3800, 7
        %v3804 = vshrl.u32 %v3728, 16
        %v3806 = vrot.slane %v3804, 7
        %v3807 = vshll.u32 %v3728, 16
        %v3809 = vor.u32 %v3806, %v3807
        %v3810 = vsel %vm341, %v3802, %v3809
        %v3812 = vshrl.u32 %v3729, 16
        %v3814 = vrot.slane %v3812, 7
        %v3816 = vshrl.u32 %v3730, 16
        %v3818 = vrot.slane %v3816, 7
        %v3819 = vshll.u32 %v3730, 16
        %v3821 = vor.u32 %v3818, %v3819
        %v3822 = vsel %vm341, %v3814, %v3821
        %v3824 = vshrl.u32 %v3731, 16
        %v3826 = vrot.slane %v3824, 7
        %v3828 = vshrl.u32 %v3732, 16
        %v3830 = vrot.slane %v3828, 7
        %v3831 = vshll.u32 %v3732, 16
        %v3833 = vor.u32 %v3830, %v3831
        %v3834 = vsel %vm341, %v3826, %v3833
        %v3836 = vshrl.u32 %v3733, 16
        %v3838 = vrot.slane %v3836, 7
        %v3840 = vshrl.u32 %v3734, 16
        %v3842 = vrot.slane %v3840, 7
        %v3843 = vshll.u32 %v3734, 16
        %v3845 = vor.u32 %v3842, %v3843
        %v3846 = vsel %vm341, %v3838, %v3845
        %v3848 = vshrl.u32 %v3735, 16
        %v3850 = vrot.slane %v3848, 7
        %v3852 = vshrl.u32 %v3736, 16
        %v3854 = vrot.slane %v3852, 7
        %v3855 = vshll.u32 %v3736, 16
        %v3857 = vor.u32 %v3854, %v3855
        %v3858 = vsel %vm341, %v3850, %v3857
        %v3860 = vshrl.u32 %v3737, 16
        %v3862 = vrot.slane %v3860, 7
        %v3864 = vshrl.u32 %v3738, 16
        %v3866 = vrot.slane %v3864, 7
        %v3867 = vshll.u32 %v3738, 16
        %v3869 = vor.u32 %v3866, %v3867
        %v3870 = vsel %vm341, %v3862, %v3869
        %v3872 = vshrl.u32 %v3739, 16
        %v3874 = vrot.slane %v3872, 7
        %v3876 = vshrl.u32 %v3740, 16
        %v3878 = vrot.slane %v3876, 7
        %v3879 = vshll.u32 %v3740, 16
        %v3881 = vor.u32 %v3878, %v3879
        %v3882 = vsel %vm341, %v3874, %v3881
        %v3884 = vshrl.u32 %v3741, 16
        %v3886 = vrot.slane %v3884, 7
        %v3888 = vshrl.u32 %v3742, 16
        %v3890 = vrot.slane %v3888, 7
        %v3891 = vshll.u32 %v3742, 16
        %v3893 = vor.u32 %v3890, %v3891
        %v3894 = vsel %vm341, %v3886, %v3893
        %v3896 = vshrl.u32 %v3743, 16
        %v3898 = vrot.slane %v3896, 7
        %v3900 = vshrl.u32 %v3744, 16
        %v3902 = vrot.slane %v3900, 7
        %v3903 = vshll.u32 %v3744, 16
        %v3905 = vor.u32 %v3902, %v3903
        %v3906 = vsel %vm341, %v3898, %v3905
        %v3908 = vshrl.u32 %v3745, 16
        %v3910 = vrot.slane %v3908, 7
        %v3912 = vshrl.u32 %v3746, 16
        %v3914 = vrot.slane %v3912, 7
        %v3915 = vshll.u32 %v3746, 16
        %v3917 = vor.u32 %v3914, %v3915
        %v3918 = vsel %vm341, %v3910, %v3917
        %v3920 = vshrl.u32 %v3747, 16
        %v3922 = vrot.slane %v3920, 7
        %v3924 = vshrl.u32 %v3748, 16
        %v3926 = vrot.slane %v3924, 7
        %v3927 = vshll.u32 %v3748, 16
        %v3929 = vor.u32 %v3926, %v3927
        %v3930 = vsel %vm341, %v3922, %v3929
        %v3932 = vshrl.u32 %v3749, 16
        %v3934 = vrot.slane %v3932, 7
        %v3936 = vshrl.u32 %v3750, 16
        %v3938 = vrot.slane %v3936, 7
        %v3939 = vshll.u32 %v3750, 16
        %v3941 = vor.u32 %v3938, %v3939
        %v3942 = vsel %vm341, %v3934, %v3941
        %3959 = vst.msk [vmem:[#allocation3] sm:$0xff] %vm338, %v3762
        %3960 = vst.msk [vmem:[#allocation3 + $0x28] sm:$0xff] %vm338, %v3774
        %3961 = vst.msk [vmem:[#allocation3 + $0x50] sm:$0xff] %vm338, %v3786
        %3962 = vst.msk [vmem:[#allocation3 + $0x78] sm:$0xff] %vm338, %v3798
        %3963 = vst.msk [vmem:[#allocation3 + $0xa0] sm:$0xff] %vm338, %v3810
        %3964 = vst.msk [vmem:[#allocation3 + $0xc8] sm:$0xff] %vm338, %v3822
        %3965 = vst.msk [vmem:[#allocation3 + $0xf0] sm:$0xff] %vm338, %v3834
        %3966 = vst.msk [vmem:[#allocation3 + $0x118] sm:$0xff] %vm338, %v3846
        %3967 = vst.msk [vmem:[#allocation3 + $0x140] sm:$0xff] %vm338, %v3858
        %3968 = vst.msk [vmem:[#allocation3 + $0x168] sm:$0xff] %vm338, %v3870
        %3969 = vst.msk [vmem:[#allocation3 + $0x190] sm:$0xff] %vm338, %v3882
        %3970 = vst.msk [vmem:[#allocation3 + $0x1b8] sm:$0xff] %vm338, %v3894
        %3971 = vst.msk [vmem:[#allocation3 + $0x1e0] sm:$0xff] %vm338, %v3906
        %3972 = vst.msk [vmem:[#allocation3 + $0x208] sm:$0xff] %vm338, %v3918
        %3973 = vst.msk [vmem:[#allocation3 + $0x230] sm:$0xff] %vm338, %v3930
        %3974 = vst.msk [vmem:[#allocation3 + $0x258] sm:$0xff] %vm338, %v3942
        %v3975 = vld [vmem:[#allocation2 + $0x8] sm:$0xff]
        %v3976 = vld [vmem:[#allocation2 + $0x20] sm:$0xff]
        %v3977 = vld [vmem:[#allocation2 + $0x38] sm:$0xff]
        %v3978 = vld [vmem:[#allocation2 + $0x50] sm:$0xff]
        %v3979 = vld [vmem:[#allocation2 + $0x68] sm:$0xff]
        %v3980 = vld [vmem:[#allocation2 + $0x80] sm:$0xff]
        %v3981 = vld [vmem:[#allocation2 + $0x98] sm:$0xff]
        %v3982 = vld [vmem:[#allocation2 + $0xb0] sm:$0xff]
        %v3983 = vld [vmem:[#allocation2 + $0xc8] sm:$0xff]
        %v3984 = vld [vmem:[#allocation2 + $0xe0] sm:$0xff]
        %v3985 = vld [vmem:[#allocation2 + $0xf8] sm:$0xff]
        %v3986 = vld [vmem:[#allocation2 + $0x110] sm:$0xff]
        %v3987 = vld [vmem:[#allocation2 + $0x128] sm:$0xff]
        %v3988 = vld [vmem:[#allocation2 + $0x140] sm:$0xff]
        %v3989 = vld [vmem:[#allocation2 + $0x158] sm:$0xff]
        %v3990 = vld [vmem:[#allocation2 + $0x170] sm:$0xff]
        %4007 = vrot.lane.b32.xlu0 %v3975, 64
        %v4008 = vpop.permute.xlu0 %4007
        %4009 = vrot.lane.b32.xlu0 %v3976, 64
        %v4010 = vpop.permute.xlu0 %4009
        %4011 = vrot.lane.b32.xlu0 %v3977, 64
        %v4012 = vpop.permute.xlu0 %4011
        %4013 = vrot.lane.b32.xlu0 %v3978, 64
        %v4014 = vpop.permute.xlu0 %4013
        %4015 = vrot.lane.b32.xlu0 %v3979, 64
        %v4016 = vpop.permute.xlu0 %4015
        %4017 = vrot.lane.b32.xlu0 %v3980, 64
        %v4018 = vpop.permute.xlu0 %4017
        %4019 = vrot.lane.b32.xlu0 %v3981, 64
        %v4020 = vpop.permute.xlu0 %4019
        %4021 = vrot.lane.b32.xlu0 %v3982, 64
        %v4022 = vpop.permute.xlu0 %4021
        %4023 = vrot.lane.b32.xlu0 %v3983, 64
        %v4024 = vpop.permute.xlu0 %4023
        %4025 = vrot.lane.b32.xlu0 %v3984, 64
        %v4026 = vpop.permute.xlu0 %4025
        %4027 = vrot.lane.b32.xlu0 %v3985, 64
        %v4028 = vpop.permute.xlu0 %4027
        %4029 = vrot.lane.b32.xlu0 %v3986, 64
        %v4030 = vpop.permute.xlu0 %4029
        %4031 = vrot.lane.b32.xlu0 %v3987, 64
        %v4032 = vpop.permute.xlu0 %4031
        %4033 = vrot.lane.b32.xlu0 %v3988, 64
        %v4034 = vpop.permute.xlu0 %4033
        %4035 = vrot.lane.b32.xlu0 %v3989, 64
        %v4036 = vpop.permute.xlu0 %4035
        %4037 = vrot.lane.b32.xlu0 %v3990, 64
        %v4038 = vpop.permute.xlu0 %4037
        %4055 = vst.msk [vmem:[#allocation3] sm:$0xff] %vm851, %v4008
        %4056 = vst.msk [vmem:[#allocation3 + $0x28] sm:$0xff] %vm851, %v4010
        %4057 = vst.msk [vmem:[#allocation3 + $0x50] sm:$0xff] %vm851, %v4012
        %4058 = vst.msk [vmem:[#allocation3 + $0x78] sm:$0xff] %vm851, %v4014
        %4059 = vst.msk [vmem:[#allocation3 + $0xa0] sm:$0xff] %vm851, %v4016
        %4060 = vst.msk [vmem:[#allocation3 + $0xc8] sm:$0xff] %vm851, %v4018
        %4061 = vst.msk [vmem:[#allocation3 + $0xf0] sm:$0xff] %vm851, %v4020
        %4062 = vst.msk [vmem:[#allocation3 + $0x118] sm:$0xff] %vm851, %v4022
        %4063 = vst.msk [vmem:[#allocation3 + $0x140] sm:$0xff] %vm851, %v4024
        %4064 = vst.msk [vmem:[#allocation3 + $0x168] sm:$0xff] %vm851, %v4026
        %4065 = vst.msk [vmem:[#allocation3 + $0x190] sm:$0xff] %vm851, %v4028
        %4066 = vst.msk [vmem:[#allocation3 + $0x1b8] sm:$0xff] %vm851, %v4030
        %4067 = vst.msk [vmem:[#allocation3 + $0x1e0] sm:$0xff] %vm851, %v4032
        %4068 = vst.msk [vmem:[#allocation3 + $0x208] sm:$0xff] %vm851, %v4034
        %4069 = vst.msk [vmem:[#allocation3 + $0x230] sm:$0xff] %vm851, %v4036
        %4070 = vst.msk [vmem:[#allocation3 + $0x258] sm:$0xff] %vm851, %v4038
        %v4071 = vld [vmem:[#allocation2 + $0x8] sm:$0xff]
        %v4072 = vld [vmem:[#allocation2 + $0x10] sm:$0x1]
        %v4073 = vld [vmem:[#allocation2 + $0x20] sm:$0xff]
        %v4074 = vld [vmem:[#allocation2 + $0x28] sm:$0x1]
        %v4075 = vld [vmem:[#allocation2 + $0x38] sm:$0xff]
        %v4076 = vld [vmem:[#allocation2 + $0x40] sm:$0x1]
        %v4077 = vld [vmem:[#allocation2 + $0x50] sm:$0xff]
        %v4078 = vld [vmem:[#allocation2 + $0x58] sm:$0x1]
        %v4079 = vld [vmem:[#allocation2 + $0x68] sm:$0xff]
        %v4080 = vld [vmem:[#allocation2 + $0x70] sm:$0x1]
        %v4081 = vld [vmem:[#allocation2 + $0x80] sm:$0xff]
        %v4082 = vld [vmem:[#allocation2 + $0x88] sm:$0x1]
        %v4083 = vld [vmem:[#allocation2 + $0x98] sm:$0xff]
        %v4084 = vld [vmem:[#allocation2 + $0xa0] sm:$0x1]
        %v4085 = vld [vmem:[#allocation2 + $0xb0] sm:$0xff]
        %v4086 = vld [vmem:[#allocation2 + $0xb8] sm:$0x1]
        %v4087 = vld [vmem:[#allocation2 + $0xc8] sm:$0xff]
        %v4088 = vld [vmem:[#allocation2 + $0xd0] sm:$0x1]
        %v4089 = vld [vmem:[#allocation2 + $0xe0] sm:$0xff]
        %v4090 = vld [vmem:[#allocation2 + $0xe8] sm:$0x1]
        %v4091 = vld [vmem:[#allocation2 + $0xf8] sm:$0xff]
        %v4092 = vld [vmem:[#allocation2 + $0x100] sm:$0x1]
        %v4093 = vld [vmem:[#allocation2 + $0x110] sm:$0xff]
        %v4094 = vld [vmem:[#allocation2 + $0x118] sm:$0x1]
        %v4095 = vld [vmem:[#allocation2 + $0x128] sm:$0xff]
        %v4096 = vld [vmem:[#allocation2 + $0x130] sm:$0x1]
        %v4097 = vld [vmem:[#allocation2 + $0x140] sm:$0xff]
        %v4098 = vld [vmem:[#allocation2 + $0x148] sm:$0x1]
        %v4099 = vld [vmem:[#allocation2 + $0x158] sm:$0xff]
        %v4100 = vld [vmem:[#allocation2 + $0x160] sm:$0x1]
        %v4101 = vld [vmem:[#allocation2 + $0x170] sm:$0xff]
        %v4102 = vld [vmem:[#allocation2 + $0x178] sm:$0x1]
        %v4104 = vshrl.u32 %v4071, 16
        %v4106 = vshll.u32 %v4071, 16
        %v4108 = vrot.slane %v4106, 1
        %v4109 = vor.u32 %v4104, %v4108
        %v4111 = vshll.u32 %v4072, 16
        %v4113 = vrot.slane %v4111, 1
        %v4114 = vsel %vm900, %v4109, %v4113
        %v4116 = vshrl.u32 %v4073, 16
        %v4118 = vshll.u32 %v4073, 16
        %v4120 = vrot.slane %v4118, 1
        %v4121 = vor.u32 %v4116, %v4120
        %v4123 = vshll.u32 %v4074, 16
        %v4125 = vrot.slane %v4123, 1
        %v4126 = vsel %vm900, %v4121, %v4125
        %v4128 = vshrl.u32 %v4075, 16
        %v4130 = vshll.u32 %v4075, 16
        %v4132 = vrot.slane %v4130, 1
        %v4133 = vor.u32 %v4128, %v4132
        %v4135 = vshll.u32 %v4076, 16
        %v4137 = vrot.slane %v4135, 1
        %v4138 = vsel %vm900, %v4133, %v4137
        %v4140 = vshrl.u32 %v4077, 16
        %v4142 = vshll.u32 %v4077, 16
        %v4144 = vrot.slane %v4142, 1
        %v4145 = vor.u32 %v4140, %v4144
        %v4147 = vshll.u32 %v4078, 16
        %v4149 = vrot.slane %v4147, 1
        %v4150 = vsel %vm900, %v4145, %v4149
        %v4152 = vshrl.u32 %v4079, 16
        %v4154 = vshll.u32 %v4079, 16
        %v4156 = vrot.slane %v4154, 1
        %v4157 = vor.u32 %v4152, %v4156
        %v4159 = vshll.u32 %v4080, 16
        %v4161 = vrot.slane %v4159, 1
        %v4162 = vsel %vm900, %v4157, %v4161
        %v4164 = vshrl.u32 %v4081, 16
        %v4166 = vshll.u32 %v4081, 16
        %v4168 = vrot.slane %v4166, 1
        %v4169 = vor.u32 %v4164, %v4168
        %v4171 = vshll.u32 %v4082, 16
        %v4173 = vrot.slane %v4171, 1
        %v4174 = vsel %vm900, %v4169, %v4173
        %v4176 = vshrl.u32 %v4083, 16
        %v4178 = vshll.u32 %v4083, 16
        %v4180 = vrot.slane %v4178, 1
        %v4181 = vor.u32 %v4176, %v4180
        %v4183 = vshll.u32 %v4084, 16
        %v4185 = vrot.slane %v4183, 1
        %v4186 = vsel %vm900, %v4181, %v4185
        %v4188 = vshrl.u32 %v4085, 16
        %v4190 = vshll.u32 %v4085, 16
        %v4192 = vrot.slane %v4190, 1
        %v4193 = vor.u32 %v4188, %v4192
        %v4195 = vshll.u32 %v4086, 16
        %v4197 = vrot.slane %v4195, 1
        %v4198 = vsel %vm900, %v4193, %v4197
        %v4200 = vshrl.u32 %v4087, 16
        %v4202 = vshll.u32 %v4087, 16
        %v4204 = vrot.slane %v4202, 1
        %v4205 = vor.u32 %v4200, %v4204
        %v4207 = vshll.u32 %v4088, 16
        %v4209 = vrot.slane %v4207, 1
        %v4210 = vsel %vm900, %v4205, %v4209
        %v4212 = vshrl.u32 %v4089, 16
        %v4214 = vshll.u32 %v4089, 16
        %v4216 = vrot.slane %v4214, 1
        %v4217 = vor.u32 %v4212, %v4216
        %v4219 = vshll.u32 %v4090, 16
        %v4221 = vrot.slane %v4219, 1
        %v4222 = vsel %vm900, %v4217, %v4221
        %v4224 = vshrl.u32 %v4091, 16
        %v4226 = vshll.u32 %v4091, 16
        %v4228 = vrot.slane %v4226, 1
        %v4229 = vor.u32 %v4224, %v4228
        %v4231 = vshll.u32 %v4092, 16
        %v4233 = vrot.slane %v4231, 1
        %v4234 = vsel %vm900, %v4229, %v4233
        %v4236 = vshrl.u32 %v4093, 16
        %v4238 = vshll.u32 %v4093, 16
        %v4240 = vrot.slane %v4238, 1
        %v4241 = vor.u32 %v4236, %v4240
        %v4243 = vshll.u32 %v4094, 16
        %v4245 = vrot.slane %v4243, 1
        %v4246 = vsel %vm900, %v4241, %v4245
        %v4248 = vshrl.u32 %v4095, 16
        %v4250 = vshll.u32 %v4095, 16
        %v4252 = vrot.slane %v4250, 1
        %v4253 = vor.u32 %v4248, %v4252
        %v4255 = vshll.u32 %v4096, 16
        %v4257 = vrot.slane %v4255, 1
        %v4258 = vsel %vm900, %v4253, %v4257
        %v4260 = vshrl.u32 %v4097, 16
        %v4262 = vshll.u32 %v4097, 16
        %v4264 = vrot.slane %v4262, 1
        %v4265 = vor.u32 %v4260, %v4264
        %v4267 = vshll.u32 %v4098, 16
        %v4269 = vrot.slane %v4267, 1
        %v4270 = vsel %vm900, %v4265, %v4269
        %v4272 = vshrl.u32 %v4099, 16
        %v4274 = vshll.u32 %v4099, 16
        %v4276 = vrot.slane %v4274, 1
        %v4277 = vor.u32 %v4272, %v4276
        %v4279 = vshll.u32 %v4100, 16
        %v4281 = vrot.slane %v4279, 1
        %v4282 = vsel %vm900, %v4277, %v4281
        %v4284 = vshrl.u32 %v4101, 16
        %v4286 = vshll.u32 %v4101, 16
        %v4288 = vrot.slane %v4286, 1
        %v4289 = vor.u32 %v4284, %v4288
        %v4291 = vshll.u32 %v4102, 16
        %v4293 = vrot.slane %v4291, 1
        %v4294 = vsel %vm900, %v4289, %v4293
        %4311 = vst.msk [vmem:[#allocation3 + $0x8] sm:$0xff] %vm338, %v4114
        %4312 = vst.msk [vmem:[#allocation3 + $0x30] sm:$0xff] %vm338, %v4126
        %4313 = vst.msk [vmem:[#allocation3 + $0x58] sm:$0xff] %vm338, %v4138
        %4314 = vst.msk [vmem:[#allocation3 + $0x80] sm:$0xff] %vm338, %v4150
        %4315 = vst.msk [vmem:[#allocation3 + $0xa8] sm:$0xff] %vm338, %v4162
        %4316 = vst.msk [vmem:[#allocation3 + $0xd0] sm:$0xff] %vm338, %v4174
        %4317 = vst.msk [vmem:[#allocation3 + $0xf8] sm:$0xff] %vm338, %v4186
        %4318 = vst.msk [vmem:[#allocation3 + $0x120] sm:$0xff] %vm338, %v4198
        %4319 = vst.msk [vmem:[#allocation3 + $0x148] sm:$0xff] %vm338, %v4210
        %4320 = vst.msk [vmem:[#allocation3 + $0x170] sm:$0xff] %vm338, %v4222
        %4321 = vst.msk [vmem:[#allocation3 + $0x198] sm:$0xff] %vm338, %v4234
        %4322 = vst.msk [vmem:[#allocation3 + $0x1c0] sm:$0xff] %vm338, %v4246
        %4323 = vst.msk [vmem:[#allocation3 + $0x1e8] sm:$0xff] %vm338, %v4258
        %4324 = vst.msk [vmem:[#allocation3 + $0x210] sm:$0xff] %vm338, %v4270
        %4325 = vst.msk [vmem:[#allocation3 + $0x238] sm:$0xff] %vm338, %v4282
        %4326 = vst.msk [vmem:[#allocation3 + $0x260] sm:$0xff] %vm338, %v4294
        %v4327 = vld [vmem:[%s354] sm:$0x80]
        %v4328 = vld [vmem:[%s354 + $0x8] sm:$0xff]
        %v4329 = vld [vmem:[%s354 + $0x18] sm:$0x80]
        %v4330 = vld [vmem:[%s354 + $0x20] sm:$0xff]
        %v4331 = vld [vmem:[%s354 + $0x30] sm:$0x80]
        %v4332 = vld [vmem:[%s354 + $0x38] sm:$0xff]
        %v4333 = vld [vmem:[%s354 + $0x48] sm:$0x80]
        %v4334 = vld [vmem:[%s354 + $0x50] sm:$0xff]
        %v4335 = vld [vmem:[%s354 + $0x60] sm:$0x80]
        %v4336 = vld [vmem:[%s354 + $0x68] sm:$0xff]
        %v4337 = vld [vmem:[%s354 + $0x78] sm:$0x80]
        %v4338 = vld [vmem:[%s354 + $0x80] sm:$0xff]
        %v4339 = vld [vmem:[%s354 + $0x90] sm:$0x80]
        %v4340 = vld [vmem:[%s354 + $0x98] sm:$0xff]
        %v4341 = vld [vmem:[%s354 + $0xa8] sm:$0x80]
        %v4342 = vld [vmem:[%s354 + $0xb0] sm:$0xff]
        %v4343 = vld [vmem:[%s354 + $0xc0] sm:$0x80]
        %v4344 = vld [vmem:[%s354 + $0xc8] sm:$0xff]
        %v4345 = vld [vmem:[%s354 + $0xd8] sm:$0x80]
        %v4346 = vld [vmem:[%s354 + $0xe0] sm:$0xff]
        %v4347 = vld [vmem:[%s354 + $0xf0] sm:$0x80]
        %v4348 = vld [vmem:[%s354 + $0xf8] sm:$0xff]
        %v4349 = vld [vmem:[%s354 + $0x108] sm:$0x80]
        %v4350 = vld [vmem:[%s354 + $0x110] sm:$0xff]
        %v4351 = vld [vmem:[%s354 + $0x120] sm:$0x80]
        %v4352 = vld [vmem:[%s354 + $0x128] sm:$0xff]
        %v4353 = vld [vmem:[%s354 + $0x138] sm:$0x80]
        %v4354 = vld [vmem:[%s354 + $0x140] sm:$0xff]
        %v4355 = vld [vmem:[%s354 + $0x150] sm:$0x80]
        %v4356 = vld [vmem:[%s354 + $0x158] sm:$0xff]
        %v4357 = vld [vmem:[%s354 + $0x168] sm:$0x80]
        %v4358 = vld [vmem:[%s354 + $0x170] sm:$0xff]
        %v4360 = vshrl.u32 %v4327, 16
        %v4362 = vrot.slane %v4360, 7
        %v4364 = vshrl.u32 %v4328, 16
        %v4366 = vrot.slane %v4364, 7
        %v4367 = vshll.u32 %v4328, 16
        %v4369 = vor.u32 %v4366, %v4367
        %v4370 = vsel %vm341, %v4362, %v4369
        %v4372 = vshrl.u32 %v4329, 16
        %v4374 = vrot.slane %v4372, 7
        %v4376 = vshrl.u32 %v4330, 16
        %v4378 = vrot.slane %v4376, 7
        %v4379 = vshll.u32 %v4330, 16
        %v4381 = vor.u32 %v4378, %v4379
        %v4382 = vsel %vm341, %v4374, %v4381
        %v4384 = vshrl.u32 %v4331, 16
        %v4386 = vrot.slane %v4384, 7
        %v4388 = vshrl.u32 %v4332, 16
        %v4390 = vrot.slane %v4388, 7
        %v4391 = vshll.u32 %v4332, 16
        %v4393 = vor.u32 %v4390, %v4391
        %v4394 = vsel %vm341, %v4386, %v4393
        %v4396 = vshrl.u32 %v4333, 16
        %v4398 = vrot.slane %v4396, 7
        %v4400 = vshrl.u32 %v4334, 16
        %v4402 = vrot.slane %v4400, 7
        %v4403 = vshll.u32 %v4334, 16
        %v4405 = vor.u32 %v4402, %v4403
        %v4406 = vsel %vm341, %v4398, %v4405
        %v4408 = vshrl.u32 %v4335, 16
        %v4410 = vrot.slane %v4408, 7
        %v4412 = vshrl.u32 %v4336, 16
        %v4414 = vrot.slane %v4412, 7
        %v4415 = vshll.u32 %v4336, 16
        %v4417 = vor.u32 %v4414, %v4415
        %v4418 = vsel %vm341, %v4410, %v4417
        %v4420 = vshrl.u32 %v4337, 16
        %v4422 = vrot.slane %v4420, 7
        %v4424 = vshrl.u32 %v4338, 16
        %v4426 = vrot.slane %v4424, 7
        %v4427 = vshll.u32 %v4338, 16
        %v4429 = vor.u32 %v4426, %v4427
        %v4430 = vsel %vm341, %v4422, %v4429
        %v4432 = vshrl.u32 %v4339, 16
        %v4434 = vrot.slane %v4432, 7
        %v4436 = vshrl.u32 %v4340, 16
        %v4438 = vrot.slane %v4436, 7
        %v4439 = vshll.u32 %v4340, 16
        %v4441 = vor.u32 %v4438, %v4439
        %v4442 = vsel %vm341, %v4434, %v4441
        %v4444 = vshrl.u32 %v4341, 16
        %v4446 = vrot.slane %v4444, 7
        %v4448 = vshrl.u32 %v4342, 16
        %v4450 = vrot.slane %v4448, 7
        %v4451 = vshll.u32 %v4342, 16
        %v4453 = vor.u32 %v4450, %v4451
        %v4454 = vsel %vm341, %v4446, %v4453
        %v4456 = vshrl.u32 %v4343, 16
        %v4458 = vrot.slane %v4456, 7
        %v4460 = vshrl.u32 %v4344, 16
        %v4462 = vrot.slane %v4460, 7
        %v4463 = vshll.u32 %v4344, 16
        %v4465 = vor.u32 %v4462, %v4463
        %v4466 = vsel %vm341, %v4458, %v4465
        %v4468 = vshrl.u32 %v4345, 16
        %v4470 = vrot.slane %v4468, 7
        %v4472 = vshrl.u32 %v4346, 16
        %v4474 = vrot.slane %v4472, 7
        %v4475 = vshll.u32 %v4346, 16
        %v4477 = vor.u32 %v4474, %v4475
        %v4478 = vsel %vm341, %v4470, %v4477
        %v4480 = vshrl.u32 %v4347, 16
        %v4482 = vrot.slane %v4480, 7
        %v4484 = vshrl.u32 %v4348, 16
        %v4486 = vrot.slane %v4484, 7
        %v4487 = vshll.u32 %v4348, 16
        %v4489 = vor.u32 %v4486, %v4487
        %v4490 = vsel %vm341, %v4482, %v4489
        %v4492 = vshrl.u32 %v4349, 16
        %v4494 = vrot.slane %v4492, 7
        %v4496 = vshrl.u32 %v4350, 16
        %v4498 = vrot.slane %v4496, 7
        %v4499 = vshll.u32 %v4350, 16
        %v4501 = vor.u32 %v4498, %v4499
        %v4502 = vsel %vm341, %v4494, %v4501
        %v4504 = vshrl.u32 %v4351, 16
        %v4506 = vrot.slane %v4504, 7
        %v4508 = vshrl.u32 %v4352, 16
        %v4510 = vrot.slane %v4508, 7
        %v4511 = vshll.u32 %v4352, 16
        %v4513 = vor.u32 %v4510, %v4511
        %v4514 = vsel %vm341, %v4506, %v4513
        %v4516 = vshrl.u32 %v4353, 16
        %v4518 = vrot.slane %v4516, 7
        %v4520 = vshrl.u32 %v4354, 16
        %v4522 = vrot.slane %v4520, 7
        %v4523 = vshll.u32 %v4354, 16
        %v4525 = vor.u32 %v4522, %v4523
        %v4526 = vsel %vm341, %v4518, %v4525
        %v4528 = vshrl.u32 %v4355, 16
        %v4530 = vrot.slane %v4528, 7
        %v4532 = vshrl.u32 %v4356, 16
        %v4534 = vrot.slane %v4532, 7
        %v4535 = vshll.u32 %v4356, 16
        %v4537 = vor.u32 %v4534, %v4535
        %v4538 = vsel %vm341, %v4530, %v4537
        %v4540 = vshrl.u32 %v4357, 16
        %v4542 = vrot.slane %v4540, 7
        %v4544 = vshrl.u32 %v4358, 16
        %v4546 = vrot.slane %v4544, 7
        %v4547 = vshll.u32 %v4358, 16
        %v4549 = vor.u32 %v4546, %v4547
        %v4550 = vsel %vm341, %v4542, %v4549
        %4551 = vrot.lane.b32.xlu0 %v4370, 64
        %v4552 = vpop.permute.xlu0 %4551
        %4553 = vrot.lane.b32.xlu0 %v4382, 64
        %v4554 = vpop.permute.xlu0 %4553
        %4555 = vrot.lane.b32.xlu0 %v4394, 64
        %v4556 = vpop.permute.xlu0 %4555
        %4557 = vrot.lane.b32.xlu0 %v4406, 64
        %v4558 = vpop.permute.xlu0 %4557
        %4559 = vrot.lane.b32.xlu0 %v4418, 64
        %v4560 = vpop.permute.xlu0 %4559
        %4561 = vrot.lane.b32.xlu0 %v4430, 64
        %v4562 = vpop.permute.xlu0 %4561
        %4563 = vrot.lane.b32.xlu0 %v4442, 64
        %v4564 = vpop.permute.xlu0 %4563
        %4565 = vrot.lane.b32.xlu0 %v4454, 64
        %v4566 = vpop.permute.xlu0 %4565
        %4567 = vrot.lane.b32.xlu0 %v4466, 64
        %v4568 = vpop.permute.xlu0 %4567
        %4569 = vrot.lane.b32.xlu0 %v4478, 64
        %v4570 = vpop.permute.xlu0 %4569
        %4571 = vrot.lane.b32.xlu0 %v4490, 64
        %v4572 = vpop.permute.xlu0 %4571
        %4573 = vrot.lane.b32.xlu0 %v4502, 64
        %v4574 = vpop.permute.xlu0 %4573
        %4575 = vrot.lane.b32.xlu0 %v4514, 64
        %v4576 = vpop.permute.xlu0 %4575
        %4577 = vrot.lane.b32.xlu0 %v4526, 64
        %v4578 = vpop.permute.xlu0 %4577
        %4579 = vrot.lane.b32.xlu0 %v4538, 64
        %v4580 = vpop.permute.xlu0 %4579
        %4581 = vrot.lane.b32.xlu0 %v4550, 64
        %v4582 = vpop.permute.xlu0 %4581
        %4599 = vst.msk [vmem:[#allocation3 + $0x8] sm:$0xff] %vm851, %v4552
        %4600 = vst.msk [vmem:[#allocation3 + $0x30] sm:$0xff] %vm851, %v4554
        %4601 = vst.msk [vmem:[#allocation3 + $0x58] sm:$0xff] %vm851, %v4556
        %4602 = vst.msk [vmem:[#allocation3 + $0x80] sm:$0xff] %vm851, %v4558
        %4603 = vst.msk [vmem:[#allocation3 + $0xa8] sm:$0xff] %vm851, %v4560
        %4604 = vst.msk [vmem:[#allocation3 + $0xd0] sm:$0xff] %vm851, %v4562
        %4605 = vst.msk [vmem:[#allocation3 + $0xf8] sm:$0xff] %vm851, %v4564
        %4606 = vst.msk [vmem:[#allocation3 + $0x120] sm:$0xff] %vm851, %v4566
        %4607 = vst.msk [vmem:[#allocation3 + $0x148] sm:$0xff] %vm851, %v4568
        %4608 = vst.msk [vmem:[#allocation3 + $0x170] sm:$0xff] %vm851, %v4570
        %4609 = vst.msk [vmem:[#allocation3 + $0x198] sm:$0xff] %vm851, %v4572
        %4610 = vst.msk [vmem:[#allocation3 + $0x1c0] sm:$0xff] %vm851, %v4574
        %4611 = vst.msk [vmem:[#allocation3 + $0x1e8] sm:$0xff] %vm851, %v4576
        %4612 = vst.msk [vmem:[#allocation3 + $0x210] sm:$0xff] %vm851, %v4578
        %4613 = vst.msk [vmem:[#allocation3 + $0x238] sm:$0xff] %vm851, %v4580
        %4614 = vst.msk [vmem:[#allocation3 + $0x260] sm:$0xff] %vm851, %v4582
        %v4615 = vld [vmem:[%s354 + $0x8] sm:$0xff]
        %v4616 = vld [vmem:[%s354 + $0x20] sm:$0xff]
        %v4617 = vld [vmem:[%s354 + $0x38] sm:$0xff]
        %v4618 = vld [vmem:[%s354 + $0x50] sm:$0xff]
        %v4619 = vld [vmem:[%s354 + $0x68] sm:$0xff]
        %v4620 = vld [vmem:[%s354 + $0x80] sm:$0xff]
        %v4621 = vld [vmem:[%s354 + $0x98] sm:$0xff]
        %v4622 = vld [vmem:[%s354 + $0xb0] sm:$0xff]
        %v4623 = vld [vmem:[%s354 + $0xc8] sm:$0xff]
        %v4624 = vld [vmem:[%s354 + $0xe0] sm:$0xff]
        %v4625 = vld [vmem:[%s354 + $0xf8] sm:$0xff]
        %v4626 = vld [vmem:[%s354 + $0x110] sm:$0xff]
        %v4627 = vld [vmem:[%s354 + $0x128] sm:$0xff]
        %v4628 = vld [vmem:[%s354 + $0x140] sm:$0xff]
        %v4629 = vld [vmem:[%s354 + $0x158] sm:$0xff]
        %v4630 = vld [vmem:[%s354 + $0x170] sm:$0xff]
        %4631 = vst.msk [vmem:[#allocation3 + $0x10] sm:$0xff] %vm338, %v4615
        %4632 = vst.msk [vmem:[#allocation3 + $0x38] sm:$0xff] %vm338, %v4616
        %4633 = vst.msk [vmem:[#allocation3 + $0x60] sm:$0xff] %vm338, %v4617
        %4634 = vst.msk [vmem:[#allocation3 + $0x88] sm:$0xff] %vm338, %v4618
        %4635 = vst.msk [vmem:[#allocation3 + $0xb0] sm:$0xff] %vm338, %v4619
        %4636 = vst.msk [vmem:[#allocation3 + $0xd8] sm:$0xff] %vm338, %v4620
        %4637 = vst.msk [vmem:[#allocation3 + $0x100] sm:$0xff] %vm338, %v4621
        %4638 = vst.msk [vmem:[#allocation3 + $0x128] sm:$0xff] %vm338, %v4622
        %4639 = vst.msk [vmem:[#allocation3 + $0x150] sm:$0xff] %vm338, %v4623
        %4640 = vst.msk [vmem:[#allocation3 + $0x178] sm:$0xff] %vm338, %v4624
        %4641 = vst.msk [vmem:[#allocation3 + $0x1a0] sm:$0xff] %vm338, %v4625
        %4642 = vst.msk [vmem:[#allocation3 + $0x1c8] sm:$0xff] %vm338, %v4626
        %4643 = vst.msk [vmem:[#allocation3 + $0x1f0] sm:$0xff] %vm338, %v4627
        %4644 = vst.msk [vmem:[#allocation3 + $0x218] sm:$0xff] %vm338, %v4628
        %4645 = vst.msk [vmem:[#allocation3 + $0x240] sm:$0xff] %vm338, %v4629
        %4646 = vst.msk [vmem:[#allocation3 + $0x268] sm:$0xff] %vm338, %v4630
        %v4647 = vld [vmem:[%s354 + $0x8] sm:$0xff]
        %v4648 = vld [vmem:[%s354 + $0x10] sm:$0x1]
        %v4649 = vld [vmem:[%s354 + $0x20] sm:$0xff]
        %v4650 = vld [vmem:[%s354 + $0x28] sm:$0x1]
        %v4651 = vld [vmem:[%s354 + $0x38] sm:$0xff]
        %v4652 = vld [vmem:[%s354 + $0x40] sm:$0x1]
        %v4653 = vld [vmem:[%s354 + $0x50] sm:$0xff]
        %v4654 = vld [vmem:[%s354 + $0x58] sm:$0x1]
        %v4655 = vld [vmem:[%s354 + $0x68] sm:$0xff]
        %v4656 = vld [vmem:[%s354 + $0x70] sm:$0x1]
        %v4657 = vld [vmem:[%s354 + $0x80] sm:$0xff]
        %v4658 = vld [vmem:[%s354 + $0x88] sm:$0x1]
        %v4659 = vld [vmem:[%s354 + $0x98] sm:$0xff]
        %v4660 = vld [vmem:[%s354 + $0xa0] sm:$0x1]
        %v4661 = vld [vmem:[%s354 + $0xb0] sm:$0xff]
        %v4662 = vld [vmem:[%s354 + $0xb8] sm:$0x1]
        %v4663 = vld [vmem:[%s354 + $0xc8] sm:$0xff]
        %v4664 = vld [vmem:[%s354 + $0xd0] sm:$0x1]
        %v4665 = vld [vmem:[%s354 + $0xe0] sm:$0xff]
        %v4666 = vld [vmem:[%s354 + $0xe8] sm:$0x1]
        %v4667 = vld [vmem:[%s354 + $0xf8] sm:$0xff]
        %v4668 = vld [vmem:[%s354 + $0x100] sm:$0x1]
        %v4669 = vld [vmem:[%s354 + $0x110] sm:$0xff]
        %v4670 = vld [vmem:[%s354 + $0x118] sm:$0x1]
        %v4671 = vld [vmem:[%s354 + $0x128] sm:$0xff]
        %v4672 = vld [vmem:[%s354 + $0x130] sm:$0x1]
        %v4673 = vld [vmem:[%s354 + $0x140] sm:$0xff]
        %v4674 = vld [vmem:[%s354 + $0x148] sm:$0x1]
        %v4675 = vld [vmem:[%s354 + $0x158] sm:$0xff]
        %v4676 = vld [vmem:[%s354 + $0x160] sm:$0x1]
        %v4677 = vld [vmem:[%s354 + $0x170] sm:$0xff]
        %v4678 = vld [vmem:[%s354 + $0x178] sm:$0x1]
        %v4680 = vshrl.u32 %v4647, 16
        %v4682 = vshll.u32 %v4647, 16
        %v4684 = vrot.slane %v4682, 1
        %v4685 = vor.u32 %v4680, %v4684
        %v4687 = vshll.u32 %v4648, 16
        %v4689 = vrot.slane %v4687, 1
        %v4690 = vsel %vm900, %v4685, %v4689
        %v4692 = vshrl.u32 %v4649, 16
        %v4694 = vshll.u32 %v4649, 16
        %v4696 = vrot.slane %v4694, 1
        %v4697 = vor.u32 %v4692, %v4696
        %v4699 = vshll.u32 %v4650, 16
        %v4701 = vrot.slane %v4699, 1
        %v4702 = vsel %vm900, %v4697, %v4701
        %v4704 = vshrl.u32 %v4651, 16
        %v4706 = vshll.u32 %v4651, 16
        %v4708 = vrot.slane %v4706, 1
        %v4709 = vor.u32 %v4704, %v4708
        %v4711 = vshll.u32 %v4652, 16
        %v4713 = vrot.slane %v4711, 1
        %v4714 = vsel %vm900, %v4709, %v4713
        %v4716 = vshrl.u32 %v4653, 16
        %v4718 = vshll.u32 %v4653, 16
        %v4720 = vrot.slane %v4718, 1
        %v4721 = vor.u32 %v4716, %v4720
        %v4723 = vshll.u32 %v4654, 16
        %v4725 = vrot.slane %v4723, 1
        %v4726 = vsel %vm900, %v4721, %v4725
        %v4728 = vshrl.u32 %v4655, 16
        %v4730 = vshll.u32 %v4655, 16
        %v4732 = vrot.slane %v4730, 1
        %v4733 = vor.u32 %v4728, %v4732
        %v4735 = vshll.u32 %v4656, 16
        %v4737 = vrot.slane %v4735, 1
        %v4738 = vsel %vm900, %v4733, %v4737
        %v4740 = vshrl.u32 %v4657, 16
        %v4742 = vshll.u32 %v4657, 16
        %v4744 = vrot.slane %v4742, 1
        %v4745 = vor.u32 %v4740, %v4744
        %v4747 = vshll.u32 %v4658, 16
        %v4749 = vrot.slane %v4747, 1
        %v4750 = vsel %vm900, %v4745, %v4749
        %v4752 = vshrl.u32 %v4659, 16
        %v4754 = vshll.u32 %v4659, 16
        %v4756 = vrot.slane %v4754, 1
        %v4757 = vor.u32 %v4752, %v4756
        %v4759 = vshll.u32 %v4660, 16
        %v4761 = vrot.slane %v4759, 1
        %v4762 = vsel %vm900, %v4757, %v4761
        %v4764 = vshrl.u32 %v4661, 16
        %v4766 = vshll.u32 %v4661, 16
        %v4768 = vrot.slane %v4766, 1
        %v4769 = vor.u32 %v4764, %v4768
        %v4771 = vshll.u32 %v4662, 16
        %v4773 = vrot.slane %v4771, 1
        %v4774 = vsel %vm900, %v4769, %v4773
        %v4776 = vshrl.u32 %v4663, 16
        %v4778 = vshll.u32 %v4663, 16
        %v4780 = vrot.slane %v4778, 1
        %v4781 = vor.u32 %v4776, %v4780
        %v4783 = vshll.u32 %v4664, 16
        %v4785 = vrot.slane %v4783, 1
        %v4786 = vsel %vm900, %v4781, %v4785
        %v4788 = vshrl.u32 %v4665, 16
        %v4790 = vshll.u32 %v4665, 16
        %v4792 = vrot.slane %v4790, 1
        %v4793 = vor.u32 %v4788, %v4792
        %v4795 = vshll.u32 %v4666, 16
        %v4797 = vrot.slane %v4795, 1
        %v4798 = vsel %vm900, %v4793, %v4797
        %v4800 = vshrl.u32 %v4667, 16
        %v4802 = vshll.u32 %v4667, 16
        %v4804 = vrot.slane %v4802, 1
        %v4805 = vor.u32 %v4800, %v4804
        %v4807 = vshll.u32 %v4668, 16
        %v4809 = vrot.slane %v4807, 1
        %v4810 = vsel %vm900, %v4805, %v4809
        %v4812 = vshrl.u32 %v4669, 16
        %v4814 = vshll.u32 %v4669, 16
        %v4816 = vrot.slane %v4814, 1
        %v4817 = vor.u32 %v4812, %v4816
        %v4819 = vshll.u32 %v4670, 16
        %v4821 = vrot.slane %v4819, 1
        %v4822 = vsel %vm900, %v4817, %v4821
        %v4824 = vshrl.u32 %v4671, 16
        %v4826 = vshll.u32 %v4671, 16
        %v4828 = vrot.slane %v4826, 1
        %v4829 = vor.u32 %v4824, %v4828
        %v4831 = vshll.u32 %v4672, 16
        %v4833 = vrot.slane %v4831, 1
        %v4834 = vsel %vm900, %v4829, %v4833
        %v4836 = vshrl.u32 %v4673, 16
        %v4838 = vshll.u32 %v4673, 16
        %v4840 = vrot.slane %v4838, 1
        %v4841 = vor.u32 %v4836, %v4840
        %v4843 = vshll.u32 %v4674, 16
        %v4845 = vrot.slane %v4843, 1
        %v4846 = vsel %vm900, %v4841, %v4845
        %v4848 = vshrl.u32 %v4675, 16
        %v4850 = vshll.u32 %v4675, 16
        %v4852 = vrot.slane %v4850, 1
        %v4853 = vor.u32 %v4848, %v4852
        %v4855 = vshll.u32 %v4676, 16
        %v4857 = vrot.slane %v4855, 1
        %v4858 = vsel %vm900, %v4853, %v4857
        %v4860 = vshrl.u32 %v4677, 16
        %v4862 = vshll.u32 %v4677, 16
        %v4864 = vrot.slane %v4862, 1
        %v4865 = vor.u32 %v4860, %v4864
        %v4867 = vshll.u32 %v4678, 16
        %v4869 = vrot.slane %v4867, 1
        %v4870 = vsel %vm900, %v4865, %v4869
        %4871 = vrot.lane.b32.xlu0 %v4690, 64
        %v4872 = vpop.permute.xlu0 %4871
        %4873 = vrot.lane.b32.xlu0 %v4702, 64
        %v4874 = vpop.permute.xlu0 %4873
        %4875 = vrot.lane.b32.xlu0 %v4714, 64
        %v4876 = vpop.permute.xlu0 %4875
        %4877 = vrot.lane.b32.xlu0 %v4726, 64
        %v4878 = vpop.permute.xlu0 %4877
        %4879 = vrot.lane.b32.xlu0 %v4738, 64
        %v4880 = vpop.permute.xlu0 %4879
        %4881 = vrot.lane.b32.xlu0 %v4750, 64
        %v4882 = vpop.permute.xlu0 %4881
        %4883 = vrot.lane.b32.xlu0 %v4762, 64
        %v4884 = vpop.permute.xlu0 %4883
        %4885 = vrot.lane.b32.xlu0 %v4774, 64
        %v4886 = vpop.permute.xlu0 %4885
        %4887 = vrot.lane.b32.xlu0 %v4786, 64
        %v4888 = vpop.permute.xlu0 %4887
        %4889 = vrot.lane.b32.xlu0 %v4798, 64
        %v4890 = vpop.permute.xlu0 %4889
        %4891 = vrot.lane.b32.xlu0 %v4810, 64
        %v4892 = vpop.permute.xlu0 %4891
        %4893 = vrot.lane.b32.xlu0 %v4822, 64
        %v4894 = vpop.permute.xlu0 %4893
        %4895 = vrot.lane.b32.xlu0 %v4834, 64
        %v4896 = vpop.permute.xlu0 %4895
        %4897 = vrot.lane.b32.xlu0 %v4846, 64
        %v4898 = vpop.permute.xlu0 %4897
        %4899 = vrot.lane.b32.xlu0 %v4858, 64
        %v4900 = vpop.permute.xlu0 %4899
        %4901 = vrot.lane.b32.xlu0 %v4870, 64
        %v4902 = vpop.permute.xlu0 %4901
        %4919 = vst.msk [vmem:[#allocation3 + $0x10] sm:$0xff] %vm851, %v4872
        %4920 = vst.msk [vmem:[#allocation3 + $0x38] sm:$0xff] %vm851, %v4874
        %4921 = vst.msk [vmem:[#allocation3 + $0x60] sm:$0xff] %vm851, %v4876
        %4922 = vst.msk [vmem:[#allocation3 + $0x88] sm:$0xff] %vm851, %v4878
        %4923 = vst.msk [vmem:[#allocation3 + $0xb0] sm:$0xff] %vm851, %v4880
        %4924 = vst.msk [vmem:[#allocation3 + $0xd8] sm:$0xff] %vm851, %v4882
        %4925 = vst.msk [vmem:[#allocation3 + $0x100] sm:$0xff] %vm851, %v4884
        %4926 = vst.msk [vmem:[#allocation3 + $0x128] sm:$0xff] %vm851, %v4886
        %4927 = vst.msk [vmem:[#allocation3 + $0x150] sm:$0xff] %vm851, %v4888
        %4928 = vst.msk [vmem:[#allocation3 + $0x178] sm:$0xff] %vm851, %v4890
        %4929 = vst.msk [vmem:[#allocation3 + $0x1a0] sm:$0xff] %vm851, %v4892
        %4930 = vst.msk [vmem:[#allocation3 + $0x1c8] sm:$0xff] %vm851, %v4894
        %4931 = vst.msk [vmem:[#allocation3 + $0x1f0] sm:$0xff] %vm851, %v4896
        %4932 = vst.msk [vmem:[#allocation3 + $0x218] sm:$0xff] %vm851, %v4898
        %4933 = vst.msk [vmem:[#allocation3 + $0x240] sm:$0xff] %vm851, %v4900
        %4934 = vst.msk [vmem:[#allocation3 + $0x268] sm:$0xff] %vm851, %v4902
        %v4935 = vld [vmem:[%s1733] sm:$0x80]
        %v4936 = vld [vmem:[%s1733 + $0x8] sm:$0xff]
        %v4937 = vld [vmem:[%s1733 + $0x18] sm:$0x80]
        %v4938 = vld [vmem:[%s1733 + $0x20] sm:$0xff]
        %v4939 = vld [vmem:[%s1733 + $0x30] sm:$0x80]
        %v4940 = vld [vmem:[%s1733 + $0x38] sm:$0xff]
        %v4941 = vld [vmem:[%s1733 + $0x48] sm:$0x80]
        %v4942 = vld [vmem:[%s1733 + $0x50] sm:$0xff]
        %v4943 = vld [vmem:[%s1733 + $0x60] sm:$0x80]
        %v4944 = vld [vmem:[%s1733 + $0x68] sm:$0xff]
        %v4945 = vld [vmem:[%s1733 + $0x78] sm:$0x80]
        %v4946 = vld [vmem:[%s1733 + $0x80] sm:$0xff]
        %v4947 = vld [vmem:[%s1733 + $0x90] sm:$0x80]
        %v4948 = vld [vmem:[%s1733 + $0x98] sm:$0xff]
        %v4949 = vld [vmem:[%s1733 + $0xa8] sm:$0x80]
        %v4950 = vld [vmem:[%s1733 + $0xb0] sm:$0xff]
        %v4951 = vld [vmem:[%s1733 + $0xc0] sm:$0x80]
        %v4952 = vld [vmem:[%s1733 + $0xc8] sm:$0xff]
        %v4953 = vld [vmem:[%s1733 + $0xd8] sm:$0x80]
        %v4954 = vld [vmem:[%s1733 + $0xe0] sm:$0xff]
        %v4955 = vld [vmem:[%s1733 + $0xf0] sm:$0x80]
        %v4956 = vld [vmem:[%s1733 + $0xf8] sm:$0xff]
        %v4957 = vld [vmem:[%s1733 + $0x108] sm:$0x80]
        %v4958 = vld [vmem:[%s1733 + $0x110] sm:$0xff]
        %v4959 = vld [vmem:[%s1733 + $0x120] sm:$0x80]
        %v4960 = vld [vmem:[%s1733 + $0x128] sm:$0xff]
        %v4961 = vld [vmem:[%s1733 + $0x138] sm:$0x80]
        %v4962 = vld [vmem:[%s1733 + $0x140] sm:$0xff]
        %v4963 = vld [vmem:[%s1733 + $0x150] sm:$0x80]
        %v4964 = vld [vmem:[%s1733 + $0x158] sm:$0xff]
        %v4965 = vld [vmem:[%s1733 + $0x168] sm:$0x80]
        %v4966 = vld [vmem:[%s1733 + $0x170] sm:$0xff]
        %v4968 = vshrl.u32 %v4935, 16
        %v4970 = vrot.slane %v4968, 7
        %v4972 = vshrl.u32 %v4936, 16
        %v4974 = vrot.slane %v4972, 7
        %v4975 = vshll.u32 %v4936, 16
        %v4977 = vor.u32 %v4974, %v4975
        %v4978 = vsel %vm341, %v4970, %v4977
        %v4980 = vshrl.u32 %v4937, 16
        %v4982 = vrot.slane %v4980, 7
        %v4984 = vshrl.u32 %v4938, 16
        %v4986 = vrot.slane %v4984, 7
        %v4987 = vshll.u32 %v4938, 16
        %v4989 = vor.u32 %v4986, %v4987
        %v4990 = vsel %vm341, %v4982, %v4989
        %v4992 = vshrl.u32 %v4939, 16
        %v4994 = vrot.slane %v4992, 7
        %v4996 = vshrl.u32 %v4940, 16
        %v4998 = vrot.slane %v4996, 7
        %v4999 = vshll.u32 %v4940, 16
        %v5001 = vor.u32 %v4998, %v4999
        %v5002 = vsel %vm341, %v4994, %v5001
        %v5004 = vshrl.u32 %v4941, 16
        %v5006 = vrot.slane %v5004, 7
        %v5008 = vshrl.u32 %v4942, 16
        %v5010 = vrot.slane %v5008, 7
        %v5011 = vshll.u32 %v4942, 16
        %v5013 = vor.u32 %v5010, %v5011
        %v5014 = vsel %vm341, %v5006, %v5013
        %v5016 = vshrl.u32 %v4943, 16
        %v5018 = vrot.slane %v5016, 7
        %v5020 = vshrl.u32 %v4944, 16
        %v5022 = vrot.slane %v5020, 7
        %v5023 = vshll.u32 %v4944, 16
        %v5025 = vor.u32 %v5022, %v5023
        %v5026 = vsel %vm341, %v5018, %v5025
        %v5028 = vshrl.u32 %v4945, 16
        %v5030 = vrot.slane %v5028, 7
        %v5032 = vshrl.u32 %v4946, 16
        %v5034 = vrot.slane %v5032, 7
        %v5035 = vshll.u32 %v4946, 16
        %v5037 = vor.u32 %v5034, %v5035
        %v5038 = vsel %vm341, %v5030, %v5037
        %v5040 = vshrl.u32 %v4947, 16
        %v5042 = vrot.slane %v5040, 7
        %v5044 = vshrl.u32 %v4948, 16
        %v5046 = vrot.slane %v5044, 7
        %v5047 = vshll.u32 %v4948, 16
        %v5049 = vor.u32 %v5046, %v5047
        %v5050 = vsel %vm341, %v5042, %v5049
        %v5052 = vshrl.u32 %v4949, 16
        %v5054 = vrot.slane %v5052, 7
        %v5056 = vshrl.u32 %v4950, 16
        %v5058 = vrot.slane %v5056, 7
        %v5059 = vshll.u32 %v4950, 16
        %v5061 = vor.u32 %v5058, %v5059
        %v5062 = vsel %vm341, %v5054, %v5061
        %v5064 = vshrl.u32 %v4951, 16
        %v5066 = vrot.slane %v5064, 7
        %v5068 = vshrl.u32 %v4952, 16
        %v5070 = vrot.slane %v5068, 7
        %v5071 = vshll.u32 %v4952, 16
        %v5073 = vor.u32 %v5070, %v5071
        %v5074 = vsel %vm341, %v5066, %v5073
        %v5076 = vshrl.u32 %v4953, 16
        %v5078 = vrot.slane %v5076, 7
        %v5080 = vshrl.u32 %v4954, 16
        %v5082 = vrot.slane %v5080, 7
        %v5083 = vshll.u32 %v4954, 16
        %v5085 = vor.u32 %v5082, %v5083
        %v5086 = vsel %vm341, %v5078, %v5085
        %v5088 = vshrl.u32 %v4955, 16
        %v5090 = vrot.slane %v5088, 7
        %v5092 = vshrl.u32 %v4956, 16
        %v5094 = vrot.slane %v5092, 7
        %v5095 = vshll.u32 %v4956, 16
        %v5097 = vor.u32 %v5094, %v5095
        %v5098 = vsel %vm341, %v5090, %v5097
        %v5100 = vshrl.u32 %v4957, 16
        %v5102 = vrot.slane %v5100, 7
        %v5104 = vshrl.u32 %v4958, 16
        %v5106 = vrot.slane %v5104, 7
        %v5107 = vshll.u32 %v4958, 16
        %v5109 = vor.u32 %v5106, %v5107
        %v5110 = vsel %vm341, %v5102, %v5109
        %v5112 = vshrl.u32 %v4959, 16
        %v5114 = vrot.slane %v5112, 7
        %v5116 = vshrl.u32 %v4960, 16
        %v5118 = vrot.slane %v5116, 7
        %v5119 = vshll.u32 %v4960, 16
        %v5121 = vor.u32 %v5118, %v5119
        %v5122 = vsel %vm341, %v5114, %v5121
        %v5124 = vshrl.u32 %v4961, 16
        %v5126 = vrot.slane %v5124, 7
        %v5128 = vshrl.u32 %v4962, 16
        %v5130 = vrot.slane %v5128, 7
        %v5131 = vshll.u32 %v4962, 16
        %v5133 = vor.u32 %v5130, %v5131
        %v5134 = vsel %vm341, %v5126, %v5133
        %v5136 = vshrl.u32 %v4963, 16
        %v5138 = vrot.slane %v5136, 7
        %v5140 = vshrl.u32 %v4964, 16
        %v5142 = vrot.slane %v5140, 7
        %v5143 = vshll.u32 %v4964, 16
        %v5145 = vor.u32 %v5142, %v5143
        %v5146 = vsel %vm341, %v5138, %v5145
        %v5148 = vshrl.u32 %v4965, 16
        %v5150 = vrot.slane %v5148, 7
        %v5152 = vshrl.u32 %v4966, 16
        %v5154 = vrot.slane %v5152, 7
        %v5155 = vshll.u32 %v4966, 16
        %v5157 = vor.u32 %v5154, %v5155
        %v5158 = vsel %vm341, %v5150, %v5157
        %5175 = vst.msk [vmem:[#allocation3 + $0x18] sm:$0xff] %vm338, %v4978
        %5176 = vst.msk [vmem:[#allocation3 + $0x40] sm:$0xff] %vm338, %v4990
        %5177 = vst.msk [vmem:[#allocation3 + $0x68] sm:$0xff] %vm338, %v5002
        %5178 = vst.msk [vmem:[#allocation3 + $0x90] sm:$0xff] %vm338, %v5014
        %5179 = vst.msk [vmem:[#allocation3 + $0xb8] sm:$0xff] %vm338, %v5026
        %5180 = vst.msk [vmem:[#allocation3 + $0xe0] sm:$0xff] %vm338, %v5038
        %5181 = vst.msk [vmem:[#allocation3 + $0x108] sm:$0xff] %vm338, %v5050
        %5182 = vst.msk [vmem:[#allocation3 + $0x130] sm:$0xff] %vm338, %v5062
        %5183 = vst.msk [vmem:[#allocation3 + $0x158] sm:$0xff] %vm338, %v5074
        %5184 = vst.msk [vmem:[#allocation3 + $0x180] sm:$0xff] %vm338, %v5086
        %5185 = vst.msk [vmem:[#allocation3 + $0x1a8] sm:$0xff] %vm338, %v5098
        %5186 = vst.msk [vmem:[#allocation3 + $0x1d0] sm:$0xff] %vm338, %v5110
        %5187 = vst.msk [vmem:[#allocation3 + $0x1f8] sm:$0xff] %vm338, %v5122
        %5188 = vst.msk [vmem:[#allocation3 + $0x220] sm:$0xff] %vm338, %v5134
        %5189 = vst.msk [vmem:[#allocation3 + $0x248] sm:$0xff] %vm338, %v5146
        %5190 = vst.msk [vmem:[#allocation3 + $0x270] sm:$0xff] %vm338, %v5158
        %v5191 = vld [vmem:[%s1733 + $0x8] sm:$0xff]
        %v5192 = vld [vmem:[%s1733 + $0x20] sm:$0xff]
        %v5193 = vld [vmem:[%s1733 + $0x38] sm:$0xff]
        %v5194 = vld [vmem:[%s1733 + $0x50] sm:$0xff]
        %v5195 = vld [vmem:[%s1733 + $0x68] sm:$0xff]
        %v5196 = vld [vmem:[%s1733 + $0x80] sm:$0xff]
        %v5197 = vld [vmem:[%s1733 + $0x98] sm:$0xff]
        %v5198 = vld [vmem:[%s1733 + $0xb0] sm:$0xff]
        %v5199 = vld [vmem:[%s1733 + $0xc8] sm:$0xff]
        %v5200 = vld [vmem:[%s1733 + $0xe0] sm:$0xff]
        %v5201 = vld [vmem:[%s1733 + $0xf8] sm:$0xff]
        %v5202 = vld [vmem:[%s1733 + $0x110] sm:$0xff]
        %v5203 = vld [vmem:[%s1733 + $0x128] sm:$0xff]
        %v5204 = vld [vmem:[%s1733 + $0x140] sm:$0xff]
        %v5205 = vld [vmem:[%s1733 + $0x158] sm:$0xff]
        %v5206 = vld [vmem:[%s1733 + $0x170] sm:$0xff]
        %5223 = vrot.lane.b32.xlu0 %v5191, 64
        %v5224 = vpop.permute.xlu0 %5223
        %5225 = vrot.lane.b32.xlu0 %v5192, 64
        %v5226 = vpop.permute.xlu0 %5225
        %5227 = vrot.lane.b32.xlu0 %v5193, 64
        %v5228 = vpop.permute.xlu0 %5227
        %5229 = vrot.lane.b32.xlu0 %v5194, 64
        %v5230 = vpop.permute.xlu0 %5229
        %5231 = vrot.lane.b32.xlu0 %v5195, 64
        %v5232 = vpop.permute.xlu0 %5231
        %5233 = vrot.lane.b32.xlu0 %v5196, 64
        %v5234 = vpop.permute.xlu0 %5233
        %5235 = vrot.lane.b32.xlu0 %v5197, 64
        %v5236 = vpop.permute.xlu0 %5235
        %5237 = vrot.lane.b32.xlu0 %v5198, 64
        %v5238 = vpop.permute.xlu0 %5237
        %5239 = vrot.lane.b32.xlu0 %v5199, 64
        %v5240 = vpop.permute.xlu0 %5239
        %5241 = vrot.lane.b32.xlu0 %v5200, 64
        %v5242 = vpop.permute.xlu0 %5241
        %5243 = vrot.lane.b32.xlu0 %v5201, 64
        %v5244 = vpop.permute.xlu0 %5243
        %5245 = vrot.lane.b32.xlu0 %v5202, 64
        %v5246 = vpop.permute.xlu0 %5245
        %5247 = vrot.lane.b32.xlu0 %v5203, 64
        %v5248 = vpop.permute.xlu0 %5247
        %5249 = vrot.lane.b32.xlu0 %v5204, 64
        %v5250 = vpop.permute.xlu0 %5249
        %5251 = vrot.lane.b32.xlu0 %v5205, 64
        %v5252 = vpop.permute.xlu0 %5251
        %5253 = vrot.lane.b32.xlu0 %v5206, 64
        %v5254 = vpop.permute.xlu0 %5253
        %5271 = vst.msk [vmem:[#allocation3 + $0x18] sm:$0xff] %vm851, %v5224
        %5272 = vst.msk [vmem:[#allocation3 + $0x40] sm:$0xff] %vm851, %v5226
        %5273 = vst.msk [vmem:[#allocation3 + $0x68] sm:$0xff] %vm851, %v5228
        %5274 = vst.msk [vmem:[#allocation3 + $0x90] sm:$0xff] %vm851, %v5230
        %5275 = vst.msk [vmem:[#allocation3 + $0xb8] sm:$0xff] %vm851, %v5232
        %5276 = vst.msk [vmem:[#allocation3 + $0xe0] sm:$0xff] %vm851, %v5234
        %5277 = vst.msk [vmem:[#allocation3 + $0x108] sm:$0xff] %vm851, %v5236
        %5278 = vst.msk [vmem:[#allocation3 + $0x130] sm:$0xff] %vm851, %v5238
        %5279 = vst.msk [vmem:[#allocation3 + $0x158] sm:$0xff] %vm851, %v5240
        %5280 = vst.msk [vmem:[#allocation3 + $0x180] sm:$0xff] %vm851, %v5242
        %5281 = vst.msk [vmem:[#allocation3 + $0x1a8] sm:$0xff] %vm851, %v5244
        %5282 = vst.msk [vmem:[#allocation3 + $0x1d0] sm:$0xff] %vm851, %v5246
        %5283 = vst.msk [vmem:[#allocation3 + $0x1f8] sm:$0xff] %vm851, %v5248
        %5284 = vst.msk [vmem:[#allocation3 + $0x220] sm:$0xff] %vm851, %v5250
        %5285 = vst.msk [vmem:[#allocation3 + $0x248] sm:$0xff] %vm851, %v5252
        %5286 = vst.msk [vmem:[#allocation3 + $0x270] sm:$0xff] %vm851, %v5254
        %v5287 = vld [vmem:[%s1733 + $0x8] sm:$0xff]
        %v5288 = vld [vmem:[%s1733 + $0x10] sm:$0x1]
        %v5289 = vld [vmem:[%s1733 + $0x20] sm:$0xff]
        %v5290 = vld [vmem:[%s1733 + $0x28] sm:$0x1]
        %v5291 = vld [vmem:[%s1733 + $0x38] sm:$0xff]
        %v5292 = vld [vmem:[%s1733 + $0x40] sm:$0x1]
        %v5293 = vld [vmem:[%s1733 + $0x50] sm:$0xff]
        %v5294 = vld [vmem:[%s1733 + $0x58] sm:$0x1]
        %v5295 = vld [vmem:[%s1733 + $0x68] sm:$0xff]
        %v5296 = vld [vmem:[%s1733 + $0x70] sm:$0x1]
        %v5297 = vld [vmem:[%s1733 + $0x80] sm:$0xff]
        %v5298 = vld [vmem:[%s1733 + $0x88] sm:$0x1]
        %v5299 = vld [vmem:[%s1733 + $0x98] sm:$0xff]
        %v5300 = vld [vmem:[%s1733 + $0xa0] sm:$0x1]
        %v5301 = vld [vmem:[%s1733 + $0xb0] sm:$0xff]
        %v5302 = vld [vmem:[%s1733 + $0xb8] sm:$0x1]
        %v5303 = vld [vmem:[%s1733 + $0xc8] sm:$0xff]
        %v5304 = vld [vmem:[%s1733 + $0xd0] sm:$0x1]
        %v5305 = vld [vmem:[%s1733 + $0xe0] sm:$0xff]
        %v5306 = vld [vmem:[%s1733 + $0xe8] sm:$0x1]
        %v5307 = vld [vmem:[%s1733 + $0xf8] sm:$0xff]
        %v5308 = vld [vmem:[%s1733 + $0x100] sm:$0x1]
        %v5309 = vld [vmem:[%s1733 + $0x110] sm:$0xff]
        %v5310 = vld [vmem:[%s1733 + $0x118] sm:$0x1]
        %v5311 = vld [vmem:[%s1733 + $0x128] sm:$0xff]
        %v5312 = vld [vmem:[%s1733 + $0x130] sm:$0x1]
        %v5313 = vld [vmem:[%s1733 + $0x140] sm:$0xff]
        %v5314 = vld [vmem:[%s1733 + $0x148] sm:$0x1]
        %v5315 = vld [vmem:[%s1733 + $0x158] sm:$0xff]
        %v5316 = vld [vmem:[%s1733 + $0x160] sm:$0x1]
        %v5317 = vld [vmem:[%s1733 + $0x170] sm:$0xff]
        %v5318 = vld [vmem:[%s1733 + $0x178] sm:$0x1]
        %v5320 = vshrl.u32 %v5287, 16
        %v5322 = vshll.u32 %v5287, 16
        %v5324 = vrot.slane %v5322, 1
        %v5325 = vor.u32 %v5320, %v5324
        %v5327 = vshll.u32 %v5288, 16
        %v5329 = vrot.slane %v5327, 1
        %v5330 = vsel %vm900, %v5325, %v5329
        %v5332 = vshrl.u32 %v5289, 16
        %v5334 = vshll.u32 %v5289, 16
        %v5336 = vrot.slane %v5334, 1
        %v5337 = vor.u32 %v5332, %v5336
        %v5339 = vshll.u32 %v5290, 16
        %v5341 = vrot.slane %v5339, 1
        %v5342 = vsel %vm900, %v5337, %v5341
        %v5344 = vshrl.u32 %v5291, 16
        %v5346 = vshll.u32 %v5291, 16
        %v5348 = vrot.slane %v5346, 1
        %v5349 = vor.u32 %v5344, %v5348
        %v5351 = vshll.u32 %v5292, 16
        %v5353 = vrot.slane %v5351, 1
        %v5354 = vsel %vm900, %v5349, %v5353
        %v5356 = vshrl.u32 %v5293, 16
        %v5358 = vshll.u32 %v5293, 16
        %v5360 = vrot.slane %v5358, 1
        %v5361 = vor.u32 %v5356, %v5360
        %v5363 = vshll.u32 %v5294, 16
        %v5365 = vrot.slane %v5363, 1
        %v5366 = vsel %vm900, %v5361, %v5365
        %v5368 = vshrl.u32 %v5295, 16
        %v5370 = vshll.u32 %v5295, 16
        %v5372 = vrot.slane %v5370, 1
        %v5373 = vor.u32 %v5368, %v5372
        %v5375 = vshll.u32 %v5296, 16
        %v5377 = vrot.slane %v5375, 1
        %v5378 = vsel %vm900, %v5373, %v5377
        %v5380 = vshrl.u32 %v5297, 16
        %v5382 = vshll.u32 %v5297, 16
        %v5384 = vrot.slane %v5382, 1
        %v5385 = vor.u32 %v5380, %v5384
        %v5387 = vshll.u32 %v5298, 16
        %v5389 = vrot.slane %v5387, 1
        %v5390 = vsel %vm900, %v5385, %v5389
        %v5392 = vshrl.u32 %v5299, 16
        %v5394 = vshll.u32 %v5299, 16
        %v5396 = vrot.slane %v5394, 1
        %v5397 = vor.u32 %v5392, %v5396
        %v5399 = vshll.u32 %v5300, 16
        %v5401 = vrot.slane %v5399, 1
        %v5402 = vsel %vm900, %v5397, %v5401
        %v5404 = vshrl.u32 %v5301, 16
        %v5406 = vshll.u32 %v5301, 16
        %v5408 = vrot.slane %v5406, 1
        %v5409 = vor.u32 %v5404, %v5408
        %v5411 = vshll.u32 %v5302, 16
        %v5413 = vrot.slane %v5411, 1
        %v5414 = vsel %vm900, %v5409, %v5413
        %v5416 = vshrl.u32 %v5303, 16
        %v5418 = vshll.u32 %v5303, 16
        %v5420 = vrot.slane %v5418, 1
        %v5421 = vor.u32 %v5416, %v5420
        %v5423 = vshll.u32 %v5304, 16
        %v5425 = vrot.slane %v5423, 1
        %v5426 = vsel %vm900, %v5421, %v5425
        %v5428 = vshrl.u32 %v5305, 16
        %v5430 = vshll.u32 %v5305, 16
        %v5432 = vrot.slane %v5430, 1
        %v5433 = vor.u32 %v5428, %v5432
        %v5435 = vshll.u32 %v5306, 16
        %v5437 = vrot.slane %v5435, 1
        %v5438 = vsel %vm900, %v5433, %v5437
        %v5440 = vshrl.u32 %v5307, 16
        %v5442 = vshll.u32 %v5307, 16
        %v5444 = vrot.slane %v5442, 1
        %v5445 = vor.u32 %v5440, %v5444
        %v5447 = vshll.u32 %v5308, 16
        %v5449 = vrot.slane %v5447, 1
        %v5450 = vsel %vm900, %v5445, %v5449
        %v5452 = vshrl.u32 %v5309, 16
        %v5454 = vshll.u32 %v5309, 16
        %v5456 = vrot.slane %v5454, 1
        %v5457 = vor.u32 %v5452, %v5456
        %v5459 = vshll.u32 %v5310, 16
        %v5461 = vrot.slane %v5459, 1
        %v5462 = vsel %vm900, %v5457, %v5461
        %v5464 = vshrl.u32 %v5311, 16
        %v5466 = vshll.u32 %v5311, 16
        %v5468 = vrot.slane %v5466, 1
        %v5469 = vor.u32 %v5464, %v5468
        %v5471 = vshll.u32 %v5312, 16
        %v5473 = vrot.slane %v5471, 1
        %v5474 = vsel %vm900, %v5469, %v5473
        %v5476 = vshrl.u32 %v5313, 16
        %v5478 = vshll.u32 %v5313, 16
        %v5480 = vrot.slane %v5478, 1
        %v5481 = vor.u32 %v5476, %v5480
        %v5483 = vshll.u32 %v5314, 16
        %v5485 = vrot.slane %v5483, 1
        %v5486 = vsel %vm900, %v5481, %v5485
        %v5488 = vshrl.u32 %v5315, 16
        %v5490 = vshll.u32 %v5315, 16
        %v5492 = vrot.slane %v5490, 1
        %v5493 = vor.u32 %v5488, %v5492
        %v5495 = vshll.u32 %v5316, 16
        %v5497 = vrot.slane %v5495, 1
        %v5498 = vsel %vm900, %v5493, %v5497
        %v5500 = vshrl.u32 %v5317, 16
        %v5502 = vshll.u32 %v5317, 16
        %v5504 = vrot.slane %v5502, 1
        %v5505 = vor.u32 %v5500, %v5504
        %v5507 = vshll.u32 %v5318, 16
        %v5509 = vrot.slane %v5507, 1
        %v5510 = vsel %vm900, %v5505, %v5509
        %5527 = vst.msk [vmem:[#allocation3 + $0x20] sm:$0xff] %vm338, %v5330
        %5528 = vst.msk [vmem:[#allocation3 + $0x48] sm:$0xff] %vm338, %v5342
        %5529 = vst.msk [vmem:[#allocation3 + $0x70] sm:$0xff] %vm338, %v5354
        %5530 = vst.msk [vmem:[#allocation3 + $0x98] sm:$0xff] %vm338, %v5366
        %5531 = vst.msk [vmem:[#allocation3 + $0xc0] sm:$0xff] %vm338, %v5378
        %5532 = vst.msk [vmem:[#allocation3 + $0xe8] sm:$0xff] %vm338, %v5390
        %5533 = vst.msk [vmem:[#allocation3 + $0x110] sm:$0xff] %vm338, %v5402
        %5534 = vst.msk [vmem:[#allocation3 + $0x138] sm:$0xff] %vm338, %v5414
        %5535 = vst.msk [vmem:[#allocation3 + $0x160] sm:$0xff] %vm338, %v5426
        %5536 = vst.msk [vmem:[#allocation3 + $0x188] sm:$0xff] %vm338, %v5438
        %5537 = vst.msk [vmem:[#allocation3 + $0x1b0] sm:$0xff] %vm338, %v5450
        %5538 = vst.msk [vmem:[#allocation3 + $0x1d8] sm:$0xff] %vm338, %v5462
        %5539 = vst.msk [vmem:[#allocation3 + $0x200] sm:$0xff] %vm338, %v5474
        %5540 = vst.msk [vmem:[#allocation3 + $0x228] sm:$0xff] %vm338, %v5486
        %5541 = vst.msk [vmem:[#allocation3 + $0x250] sm:$0xff] %vm338, %v5498
        %5542 = vst.msk [vmem:[#allocation3 + $0x278] sm:$0xff] %vm338, %v5510
        %v5543 = vld [vmem:[#allocation3] sm:$0xff]
        %v5544 = vld [vmem:[#allocation3 + $0x8] sm:$0xff]
        %v5545 = vld [vmem:[#allocation3 + $0x10] sm:$0xff]
        %v5546 = vld [vmem:[#allocation3 + $0x18] sm:$0xff]
        %v5547 = vld [vmem:[#allocation3 + $0x20] sm:$0xff]
        %v5548 = vld [vmem:[#allocation3 + $0x28] sm:$0xff]
        %v5549 = vld [vmem:[#allocation3 + $0x30] sm:$0xff]
        %v5550 = vld [vmem:[#allocation3 + $0x38] sm:$0xff]
        %v5551 = vld [vmem:[#allocation3 + $0x40] sm:$0xff]
        %v5552 = vld [vmem:[#allocation3 + $0x48] sm:$0xff]
        %v5553 = vld [vmem:[#allocation3 + $0x50] sm:$0xff]
        %v5554 = vld [vmem:[#allocation3 + $0x58] sm:$0xff]
        %v5555 = vld [vmem:[#allocation3 + $0x60] sm:$0xff]
        %v5556 = vld [vmem:[#allocation3 + $0x68] sm:$0xff]
        %v5557 = vld [vmem:[#allocation3 + $0x70] sm:$0xff]
        %v5558 = vld [vmem:[#allocation3 + $0x78] sm:$0xff]
        %v5559 = vld [vmem:[#allocation3 + $0x80] sm:$0xff]
        %v5560 = vld [vmem:[#allocation3 + $0x88] sm:$0xff]
        %v5561 = vld [vmem:[#allocation3 + $0x90] sm:$0xff]
        %v5562 = vld [vmem:[#allocation3 + $0x98] sm:$0xff]
        %v5563 = vld [vmem:[#allocation3 + $0xa0] sm:$0xff]
        %v5564 = vld [vmem:[#allocation3 + $0xa8] sm:$0xff]
        %v5565 = vld [vmem:[#allocation3 + $0xb0] sm:$0xff]
        %v5566 = vld [vmem:[#allocation3 + $0xb8] sm:$0xff]
        %v5567 = vld [vmem:[#allocation3 + $0xc0] sm:$0xff]
        %v5568 = vld [vmem:[#allocation3 + $0xc8] sm:$0xff]
        %v5569 = vld [vmem:[#allocation3 + $0xd0] sm:$0xff]
        %v5570 = vld [vmem:[#allocation3 + $0xd8] sm:$0xff]
        %v5571 = vld [vmem:[#allocation3 + $0xe0] sm:$0xff]
        %v5572 = vld [vmem:[#allocation3 + $0xe8] sm:$0xff]
        %v5573 = vld [vmem:[#allocation3 + $0xf0] sm:$0xff]
        %v5574 = vld [vmem:[#allocation3 + $0xf8] sm:$0xff]
        %v5575 = vld [vmem:[#allocation3 + $0x100] sm:$0xff]
        %v5576 = vld [vmem:[#allocation3 + $0x108] sm:$0xff]
        %v5577 = vld [vmem:[#allocation3 + $0x110] sm:$0xff]
        %v5578 = vld [vmem:[#allocation3 + $0x118] sm:$0xff]
        %v5579 = vld [vmem:[#allocation3 + $0x120] sm:$0xff]
        %v5580 = vld [vmem:[#allocation3 + $0x128] sm:$0xff]
        %v5581 = vld [vmem:[#allocation3 + $0x130] sm:$0xff]
        %v5582 = vld [vmem:[#allocation3 + $0x138] sm:$0xff]
        %v5583 = vld [vmem:[#allocation3 + $0x140] sm:$0xff]
        %v5584 = vld [vmem:[#allocation3 + $0x148] sm:$0xff]
        %v5585 = vld [vmem:[#allocation3 + $0x150] sm:$0xff]
        %v5586 = vld [vmem:[#allocation3 + $0x158] sm:$0xff]
        %v5587 = vld [vmem:[#allocation3 + $0x160] sm:$0xff]
        %v5588 = vld [vmem:[#allocation3 + $0x168] sm:$0xff]
        %v5589 = vld [vmem:[#allocation3 + $0x170] sm:$0xff]
        %v5590 = vld [vmem:[#allocation3 + $0x178] sm:$0xff]
        %v5591 = vld [vmem:[#allocation3 + $0x180] sm:$0xff]
        %v5592 = vld [vmem:[#allocation3 + $0x188] sm:$0xff]
        %v5593 = vld [vmem:[#allocation3 + $0x190] sm:$0xff]
        %v5594 = vld [vmem:[#allocation3 + $0x198] sm:$0xff]
        %v5595 = vld [vmem:[#allocation3 + $0x1a0] sm:$0xff]
        %v5596 = vld [vmem:[#allocation3 + $0x1a8] sm:$0xff]
        %v5597 = vld [vmem:[#allocation3 + $0x1b0] sm:$0xff]
        %v5598 = vld [vmem:[#allocation3 + $0x1b8] sm:$0xff]
        %v5599 = vld [vmem:[#allocation3 + $0x1c0] sm:$0xff]
        %v5600 = vld [vmem:[#allocation3 + $0x1c8] sm:$0xff]
        %v5601 = vld [vmem:[#allocation3 + $0x1d0] sm:$0xff]
        %v5602 = vld [vmem:[#allocation3 + $0x1d8] sm:$0xff]
        %v5603 = vld [vmem:[#allocation3 + $0x1e0] sm:$0xff]
        %v5604 = vld [vmem:[#allocation3 + $0x1e8] sm:$0xff]
        %v5605 = vld [vmem:[#allocation3 + $0x1f0] sm:$0xff]
        %v5606 = vld [vmem:[#allocation3 + $0x1f8] sm:$0xff]
        %v5607 = vld [vmem:[#allocation3 + $0x200] sm:$0xff]
        %v5608 = vld [vmem:[#allocation3 + $0x208] sm:$0xff]
        %v5609 = vld [vmem:[#allocation3 + $0x210] sm:$0xff]
        %v5610 = vld [vmem:[#allocation3 + $0x218] sm:$0xff]
        %v5611 = vld [vmem:[#allocation3 + $0x220] sm:$0xff]
        %v5612 = vld [vmem:[#allocation3 + $0x228] sm:$0xff]
        %v5613 = vld [vmem:[#allocation3 + $0x230] sm:$0xff]
        %v5614 = vld [vmem:[#allocation3 + $0x238] sm:$0xff]
        %v5615 = vld [vmem:[#allocation3 + $0x240] sm:$0xff]
        %v5616 = vld [vmem:[#allocation3 + $0x248] sm:$0xff]
        %v5617 = vld [vmem:[#allocation3 + $0x250] sm:$0xff]
        %v5618 = vld [vmem:[#allocation3 + $0x258] sm:$0xff]
        %v5619 = vld [vmem:[#allocation3 + $0x260] sm:$0xff]
        %v5620 = vld [vmem:[#allocation3 + $0x268] sm:$0xff]
        %v5621 = vld [vmem:[#allocation3 + $0x270] sm:$0xff]
        %v5622 = vld [vmem:[#allocation3 + $0x278] sm:$0xff]
        %v5623 = vld [vmem:[%s6] sm:$0xff]
        %v5624 = vld [vmem:[%s6 + $0x8] sm:$0xff]
        %v5625 = vld [vmem:[%s6 + $0x10] sm:$0xff]
        %v5626 = vld [vmem:[%s6 + $0x18] sm:$0xff]
        %v5627 = vld [vmem:[%s6 + $0x20] sm:$0xff]
        %v5628 = vld [vmem:[%s6 + $0x28] sm:$0xff]
        %v5629 = vld [vmem:[%s6 + $0x30] sm:$0xff]
        %v5630 = vld [vmem:[%s6 + $0x38] sm:$0xff]
        %v5631 = vld [vmem:[%s6 + $0x40] sm:$0xff]
        %v5632 = vld [vmem:[%s6 + $0x48] sm:$0xff]
        %v5633 = vld [vmem:[%s6 + $0x50] sm:$0xff]
        %v5634 = vld [vmem:[%s6 + $0x58] sm:$0xff]
        %v5635 = vld [vmem:[%s6 + $0x60] sm:$0xff]
        %v5636 = vld [vmem:[%s6 + $0x68] sm:$0xff]
        %v5637 = vld [vmem:[%s6 + $0x70] sm:$0xff]
        %v5638 = vld [vmem:[%s6 + $0x78] sm:$0xff]
        %v5639 = vld [vmem:[%s6 + $0x80] sm:$0xff]
        %v5640 = vld [vmem:[%s6 + $0x88] sm:$0xff]
        %v5641 = vld [vmem:[%s6 + $0x90] sm:$0xff]
        %v5642 = vld [vmem:[%s6 + $0x98] sm:$0xff]
        %v5643 = vld [vmem:[%s6 + $0xa0] sm:$0xff]
        %v5644 = vld [vmem:[%s6 + $0xa8] sm:$0xff]
        %v5645 = vld [vmem:[%s6 + $0xb0] sm:$0xff]
        %v5646 = vld [vmem:[%s6 + $0xb8] sm:$0xff]
        %v5647 = vld [vmem:[%s6 + $0xc0] sm:$0xff]
        %v5648 = vld [vmem:[%s6 + $0xc8] sm:$0xff]
        %v5649 = vld [vmem:[%s6 + $0xd0] sm:$0xff]
        %v5650 = vld [vmem:[%s6 + $0xd8] sm:$0xff]
        %v5651 = vld [vmem:[%s6 + $0xe0] sm:$0xff]
        %v5652 = vld [vmem:[%s6 + $0xe8] sm:$0xff]
        %v5653 = vld [vmem:[%s6 + $0xf0] sm:$0xff]
        %v5654 = vld [vmem:[%s6 + $0xf8] sm:$0xff]
        %v5655 = vld [vmem:[%s5] sm:$0xf]
        %v5656 = vld [vmem:[%s5 + $0x4] sm:$0xf]
        %v5657 = vld [vmem:[%s5 + $0x8] sm:$0xf]
        %v5658 = vld [vmem:[%s5 + $0xc] sm:$0xf]
        %v5659 = vld [vmem:[%s5 + $0x10] sm:$0xf]
        %v5660 = vld [vmem:[%s5 + $0x14] sm:$0xf]
        %v5661 = vld [vmem:[%s5 + $0x18] sm:$0xf]
        %v5662 = vld [vmem:[%s5 + $0x1c] sm:$0xf]
        %v5663 = vld [vmem:[%s5 + $0x20] sm:$0xf]
        %v5664 = vld [vmem:[%s5 + $0x24] sm:$0xf]
        %v5665 = vld [vmem:[%s5 + $0x28] sm:$0xf]
        %v5666 = vld [vmem:[%s5 + $0x2c] sm:$0xf]
        %v5667 = vld [vmem:[%s5 + $0x30] sm:$0xf]
        %v5668 = vld [vmem:[%s5 + $0x34] sm:$0xf]
        %v5669 = vld [vmem:[%s5 + $0x38] sm:$0xf]
        %v5670 = vld [vmem:[%s5 + $0x3c] sm:$0xf]
        %v5671 = vld [vmem:[%s5 + $0x40] sm:$0xf]
        %v5672 = vld [vmem:[%s5 + $0x44] sm:$0xf]
        %v5673 = vld [vmem:[%s5 + $0x48] sm:$0xf]
        %v5674 = vld [vmem:[%s5 + $0x4c] sm:$0xf]
        %v5675 = vld [vmem:[%s5 + $0x50] sm:$0xf]
        %v5676 = vld [vmem:[%s5 + $0x54] sm:$0xf]
        %v5677 = vld [vmem:[%s5 + $0x58] sm:$0xf]
        %v5678 = vld [vmem:[%s5 + $0x5c] sm:$0xf]
        %v5679 = vld [vmem:[%s5 + $0x60] sm:$0xf]
        %v5680 = vld [vmem:[%s5 + $0x64] sm:$0xf]
        %v5681 = vld [vmem:[%s5 + $0x68] sm:$0xf]
        %v5682 = vld [vmem:[%s5 + $0x6c] sm:$0xf]
        %v5683 = vld [vmem:[%s5 + $0x70] sm:$0xf]
        %v5684 = vld [vmem:[%s5 + $0x74] sm:$0xf]
        %v5685 = vld [vmem:[%s5 + $0x78] sm:$0xf]
        %v5686 = vld [vmem:[%s5 + $0x7c] sm:$0xf]
        %v5687 = vld [vmem:[%s5 + $0x80] sm:$0xf]
        %v5688 = vld [vmem:[%s5 + $0x84] sm:$0xf]
        %v5689 = vld [vmem:[%s5 + $0x88] sm:$0xf]
        %v5690 = vld [vmem:[%s5 + $0x8c] sm:$0xf]
        %v5691 = vld [vmem:[%s5 + $0x90] sm:$0xf]
        %v5692 = vld [vmem:[%s5 + $0x94] sm:$0xf]
        %v5693 = vld [vmem:[%s5 + $0x98] sm:$0xf]
        %v5694 = vld [vmem:[%s5 + $0x9c] sm:$0xf]
        %v5695 = vld [vmem:[%s5 + $0xa0] sm:$0xf]
        %v5696 = vld [vmem:[%s5 + $0xa4] sm:$0xf]
        %v5697 = vld [vmem:[%s5 + $0xa8] sm:$0xf]
        %v5698 = vld [vmem:[%s5 + $0xac] sm:$0xf]
        %v5699 = vld [vmem:[%s5 + $0xb0] sm:$0xf]
        %v5700 = vld [vmem:[%s5 + $0xb4] sm:$0xf]
        %v5701 = vld [vmem:[%s5 + $0xb8] sm:$0xf]
        %v5702 = vld [vmem:[%s5 + $0xbc] sm:$0xf]
        %v5703 = vld [vmem:[%s5 + $0xc0] sm:$0xf]
        %v5704 = vld [vmem:[%s5 + $0xc4] sm:$0xf]
        %v5705 = vld [vmem:[%s5 + $0xc8] sm:$0xf]
        %v5706 = vld [vmem:[%s5 + $0xcc] sm:$0xf]
        %v5707 = vld [vmem:[%s5 + $0xd0] sm:$0xf]
        %v5708 = vld [vmem:[%s5 + $0xd4] sm:$0xf]
        %v5709 = vld [vmem:[%s5 + $0xd8] sm:$0xf]
        %v5710 = vld [vmem:[%s5 + $0xdc] sm:$0xf]
        %v5711 = vld [vmem:[%s5 + $0xe0] sm:$0xf]
        %v5712 = vld [vmem:[%s5 + $0xe4] sm:$0xf]
        %v5713 = vld [vmem:[%s5 + $0xe8] sm:$0xf]
        %v5714 = vld [vmem:[%s5 + $0xec] sm:$0xf]
        %v5715 = vld [vmem:[%s5 + $0xf0] sm:$0xf]
        %v5716 = vld [vmem:[%s5 + $0xf4] sm:$0xf]
        %v5717 = vld [vmem:[%s5 + $0xf8] sm:$0xf]
        %v5718 = vld [vmem:[%s5 + $0xfc] sm:$0xf]
        %v5719 = vld [vmem:[%s5 + $0x100] sm:$0xf]
        %v5720 = vld [vmem:[%s5 + $0x104] sm:$0xf]
        %v5721 = vld [vmem:[%s5 + $0x108] sm:$0xf]
        %v5722 = vld [vmem:[%s5 + $0x10c] sm:$0xf]
        %v5723 = vld [vmem:[%s5 + $0x110] sm:$0xf]
        %v5724 = vld [vmem:[%s5 + $0x114] sm:$0xf]
        %v5725 = vld [vmem:[%s5 + $0x118] sm:$0xf]
        %v5726 = vld [vmem:[%s5 + $0x11c] sm:$0xf]
        %v5799 = vunpack.c.l.b16 %v5655
        %v5800 = vunpack.c.l.b16 %v5656
        %v5801 = vunpack.c.l.b16 %v5657
        %v5802 = vunpack.c.l.b16 %v5658
        %v5803 = vunpack.c.l.b16 %v5659
        %v5804 = vunpack.c.l.b16 %v5660
        %v5805 = vunpack.c.l.b16 %v5661
        %v5806 = vunpack.c.l.b16 %v5662
        %v5807 = vunpack.c.l.b16 %v5663
        %v5808 = vunpack.c.l.b16 %v5664
        %v5809 = vunpack.c.l.b16 %v5665
        %v5810 = vunpack.c.l.b16 %v5666
        %v5811 = vunpack.c.l.b16 %v5667
        %v5812 = vunpack.c.l.b16 %v5668
        %v5813 = vunpack.c.l.b16 %v5669
        %v5814 = vunpack.c.l.b16 %v5670
        %v5815 = vunpack.c.l.b16 %v5671
        %v5816 = vunpack.c.l.b16 %v5672
        %v5817 = vunpack.c.l.b16 %v5673
        %v5818 = vunpack.c.l.b16 %v5674
        %v5819 = vunpack.c.l.b16 %v5675
        %v5820 = vunpack.c.l.b16 %v5676
        %v5821 = vunpack.c.l.b16 %v5677
        %v5822 = vunpack.c.l.b16 %v5678
        %v5823 = vunpack.c.l.b16 %v5679
        %v5824 = vunpack.c.l.b16 %v5680
        %v5825 = vunpack.c.l.b16 %v5681
        %v5826 = vunpack.c.l.b16 %v5682
        %v5827 = vunpack.c.l.b16 %v5683
        %v5828 = vunpack.c.l.b16 %v5684
        %v5829 = vunpack.c.l.b16 %v5685
        %v5830 = vunpack.c.l.b16 %v5686
        %v5831 = vunpack.c.l.b16 %v5687
        %v5832 = vunpack.c.l.b16 %v5688
        %v5833 = vunpack.c.l.b16 %v5689
        %v5834 = vunpack.c.l.b16 %v5690
        %v5835 = vunpack.c.l.b16 %v5691
        %v5836 = vunpack.c.l.b16 %v5692
        %v5837 = vunpack.c.l.b16 %v5693
        %v5838 = vunpack.c.l.b16 %v5694
        %v5839 = vunpack.c.l.b16 %v5695
        %v5840 = vunpack.c.l.b16 %v5696
        %v5841 = vunpack.c.l.b16 %v5697
        %v5842 = vunpack.c.l.b16 %v5698
        %v5843 = vunpack.c.l.b16 %v5699
        %v5844 = vunpack.c.l.b16 %v5700
        %v5845 = vunpack.c.l.b16 %v5701
        %v5846 = vunpack.c.l.b16 %v5702
        %v5847 = vunpack.c.l.b16 %v5703
        %v5848 = vunpack.c.l.b16 %v5704
        %v5849 = vunpack.c.l.b16 %v5705
        %v5850 = vunpack.c.l.b16 %v5706
        %v5851 = vunpack.c.l.b16 %v5707
        %v5852 = vunpack.c.l.b16 %v5708
        %v5853 = vunpack.c.l.b16 %v5709
        %v5854 = vunpack.c.l.b16 %v5710
        %v5855 = vunpack.c.l.b16 %v5711
        %v5856 = vunpack.c.l.b16 %v5712
        %v5857 = vunpack.c.l.b16 %v5713
        %v5858 = vunpack.c.l.b16 %v5714
        %v5859 = vunpack.c.l.b16 %v5715
        %v5860 = vunpack.c.l.b16 %v5716
        %v5861 = vunpack.c.l.b16 %v5717
        %v5862 = vunpack.c.l.b16 %v5718
        %v5863 = vunpack.c.l.b16 %v5719
        %v5864 = vunpack.c.l.b16 %v5720
        %v5865 = vunpack.c.l.b16 %v5721
        %v5866 = vunpack.c.l.b16 %v5722
        %v5867 = vunpack.c.l.b16 %v5723
        %v5868 = vunpack.c.l.b16 %v5724
        %v5869 = vunpack.c.l.b16 %v5725
        %v5870 = vunpack.c.l.b16 %v5726
        %v5871 = vpack.c.b16 %v5800, %v5799
        %v5872 = vpack.c.b16 %v5802, %v5801
        %v5873 = vpack.c.b16 %v5804, %v5803
        %v5874 = vpack.c.b16 %v5806, %v5805
        %v5875 = vpack.c.b16 %v5808, %v5807
        %v5876 = vpack.c.b16 %v5810, %v5809
        %v5877 = vpack.c.b16 %v5812, %v5811
        %v5878 = vpack.c.b16 %v5814, %v5813
        %v5879 = vpack.c.b16 %v5816, %v5815
        %v5880 = vpack.c.b16 %v5818, %v5817
        %v5881 = vpack.c.b16 %v5820, %v5819
        %v5882 = vpack.c.b16 %v5822, %v5821
        %v5883 = vpack.c.b16 %v5824, %v5823
        %v5884 = vpack.c.b16 %v5826, %v5825
        %v5885 = vpack.c.b16 %v5828, %v5827
        %v5886 = vpack.c.b16 %v5830, %v5829
        %v5887 = vpack.c.b16 %v5832, %v5831
        %v5888 = vpack.c.b16 %v5834, %v5833
        %v5889 = vpack.c.b16 %v5836, %v5835
        %v5890 = vpack.c.b16 %v5838, %v5837
        %v5891 = vpack.c.b16 %v5840, %v5839
        %v5892 = vpack.c.b16 %v5842, %v5841
        %v5893 = vpack.c.b16 %v5844, %v5843
        %v5894 = vpack.c.b16 %v5846, %v5845
        %v5895 = vpack.c.b16 %v5848, %v5847
        %v5896 = vpack.c.b16 %v5850, %v5849
        %v5897 = vpack.c.b16 %v5852, %v5851
        %v5898 = vpack.c.b16 %v5854, %v5853
        %v5899 = vpack.c.b16 %v5856, %v5855
        %v5900 = vpack.c.b16 %v5858, %v5857
        %v5901 = vpack.c.b16 %v5860, %v5859
        %v5902 = vpack.c.b16 %v5862, %v5861
        %v5903 = vpack.c.b16 %v5864, %v5863
        %v5904 = vpack.c.b16 %v5866, %v5865
        %v5905 = vpack.c.b16 %v5868, %v5867
        %v5906 = vpack.c.b16 %v5870, %v5869
        %v5944 = vsel %vm338, %v5547, 0
        %v5947 = vsel %vm338, %v5552, 0
        %v5950 = vsel %vm338, %v5557, 0
        %v5953 = vsel %vm338, %v5562, 0
        %v5956 = vsel %vm338, %v5567, 0
        %v5959 = vsel %vm338, %v5572, 0
        %v5962 = vsel %vm338, %v5577, 0
        %v5965 = vsel %vm338, %v5582, 0
        %v5968 = vsel %vm338, %v5587, 0
        %v5971 = vsel %vm338, %v5592, 0
        %v5974 = vsel %vm338, %v5597, 0
        %v5977 = vsel %vm338, %v5602, 0
        %v5980 = vsel %vm338, %v5607, 0
        %v5983 = vsel %vm338, %v5612, 0
        %v5986 = vsel %vm338, %v5617, 0
        %v5989 = vsel %vm338, %v5622, 0
        %5991 = vmatprep.subr.bf16.mxu0 0
        %5992 = vmatpush1.bf16.msra.mxu0 %v5871
        %5993 = vmatprep.subr.bf16.mxu0 0
        %5994 = vmatpush1.bf16.msra.mxu0 %v5872
        %5995 = vmatprep.subr.bf16.mxu0 0
        %5996 = vmatpush1.bf16.msra.mxu0 %v5873
        %5997 = vmatprep.subr.bf16.mxu0 0
        %5998 = vmatpush1.bf16.msra.mxu0 %v5874
        %5999 = vmatprep.subr.bf16.mxu0 0
        %6000 = vmatpush1.bf16.msra.mxu0 %v5875
        %6001 = vmatprep.subr.bf16.mxu0 0
        %6002 = vmatpush1.bf16.msra.mxu0 %v5876
        %6003 = vmatprep.subr.bf16.mxu0 0
        %6004 = vmatpush1.bf16.msra.mxu0 %v5877
        %6005 = vmatprep.subr.bf16.mxu0 0
        %6006 = vmatpush1.bf16.msra.mxu0 %v5878
        %6007 = vmatprep.subr.bf16.mxu0 0
        %6008 = vmatpush1.bf16.msra.mxu0 %v5879
        %6009 = vmatprep.subr.bf16.mxu0 0
        %6010 = vmatpush1.bf16.msra.mxu0 %v5880
        %6011 = vmatprep.subr.bf16.mxu0 0
        %6012 = vmatpush1.bf16.msra.mxu0 %v5881
        %6013 = vmatprep.subr.bf16.mxu0 0
        %6014 = vmatpush1.bf16.msra.mxu0 %v5882
        %6015 = vmatprep.subr.bf16.mxu0 0
        %6016 = vmatpush1.bf16.msra.mxu0 %v5883
        %6017 = vmatprep.subr.bf16.mxu0 0
        %6018 = vmatpush1.bf16.msra.mxu0 %v5884
        %6019 = vmatprep.subr.bf16.mxu0 0
        %6020 = vmatpush1.bf16.msra.mxu0 %v5885
        %6021 = vmatprep.subr.bf16.mxu0 0
        %6022 = vmatpush1.bf16.msra.mxu0 %v5886
        %6023 = vmatprep.mubr.bf16.mxu0 %v5544
        %6024 = vmatmul.mubr.bf16.gmra.mrb[0].mxu0 %v5543
        %v6025 = vpop.f32.mrb[0].mxu0
        %v6026 = vadd.f32 0.0, %v6025
        %v6027 = vpop.f32.mrb[0].mxu0
        %v6028 = vpop.f32.mrb[0].mxu0
        %v6029 = vadd.f32 0.0, %v6028
        %v6030 = vpop.f32.mrb[0].mxu0
        %6031 = vmatprep.mubr.bf16.mxu0 %v5549
        %6032 = vmatmul.mubr.bf16.gmra.mrb[0].mxu0 %v5548
        %v6033 = vpop.f32.mrb[0].mxu0
        %v6034 = vadd.f32 0.0, %v6033
        %v6035 = vpop.f32.mrb[0].mxu0
        %v6036 = vpop.f32.mrb[0].mxu0
        %v6037 = vadd.f32 0.0, %v6036
        %v6038 = vpop.f32.mrb[0].mxu0
        %6039 = vmatprep.mubr.bf16.mxu0 %v5554
        %6040 = vmatmul.mubr.bf16.gmra.mrb[0].mxu0 %v5553
        %v6041 = vpop.f32.mrb[0].mxu0
        %v6042 = vadd.f32 0.0, %v6041
        %v6043 = vpop.f32.mrb[0].mxu0
        %v6044 = vpop.f32.mrb[0].mxu0
        %v6045 = vadd.f32 0.0, %v6044
        %v6046 = vpop.f32.mrb[0].mxu0
        %6047 = vmatprep.mubr.bf16.mxu0 %v5559
        %6048 = vmatmul.mubr.bf16.gmra.mrb[0].mxu0 %v5558
        %v6049 = vpop.f32.mrb[0].mxu0
        %v6050 = vadd.f32 0.0, %v6049
        %v6051 = vpop.f32.mrb[0].mxu0
        %v6052 = vpop.f32.mrb[0].mxu0
        %v6053 = vadd.f32 0.0, %v6052
        %v6054 = vpop.f32.mrb[0].mxu0
        %6055 = vmatprep.mubr.bf16.mxu0 %v5564
        %6056 = vmatmul.mubr.bf16.gmra.mrb[0].mxu0 %v5563
        %v6057 = vpop.f32.mrb[0].mxu0
        %v6058 = vadd.f32 0.0, %v6057
        %v6059 = vpop.f32.mrb[0].mxu0
        %v6060 = vpop.f32.mrb[0].mxu0
        %v6061 = vadd.f32 0.0, %v6060
        %v6062 = vpop.f32.mrb[0].mxu0
        %6063 = vmatprep.mubr.bf16.mxu0 %v5569
        %6064 = vmatmul.mubr.bf16.gmra.mrb[0].mxu0 %v5568
        %v6065 = vpop.f32.mrb[0].mxu0
        %v6066 = vadd.f32 0.0, %v6065
        %v6067 = vpop.f32.mrb[0].mxu0
        %v6068 = vpop.f32.mrb[0].mxu0
        %v6069 = vadd.f32 0.0, %v6068
        %v6070 = vpop.f32.mrb[0].mxu0
        %6071 = vmatprep.mubr.bf16.mxu0 %v5574
        %6072 = vmatmul.mubr.bf16.gmra.mrb[0].mxu0 %v5573
        %v6073 = vpop.f32.mrb[0].mxu0
        %v6074 = vadd.f32 0.0, %v6073
        %v6075 = vpop.f32.mrb[0].mxu0
        %v6076 = vpop.f32.mrb[0].mxu0
        %v6077 = vadd.f32 0.0, %v6076
        %v6078 = vpop.f32.mrb[0].mxu0
        %6079 = vmatprep.mubr.bf16.mxu0 %v5579
        %6080 = vmatmul.mubr.bf16.gmra.mrb[0].mxu0 %v5578
        %v6081 = vpop.f32.mrb[0].mxu0
        %v6082 = vadd.f32 0.0, %v6081
        %v6083 = vpop.f32.mrb[0].mxu0
        %v6084 = vpop.f32.mrb[0].mxu0
        %v6085 = vadd.f32 0.0, %v6084
        %v6086 = vpop.f32.mrb[0].mxu0
        %6087 = vmatprep.mubr.bf16.mxu0 %v5584
        %6088 = vmatmul.mubr.bf16.gmra.mrb[0].mxu0 %v5583
        %v6089 = vpop.f32.mrb[0].mxu0
        %v6090 = vadd.f32 0.0, %v6089
        %v6091 = vpop.f32.mrb[0].mxu0
        %v6092 = vpop.f32.mrb[0].mxu0
        %v6093 = vadd.f32 0.0, %v6092
        %v6094 = vpop.f32.mrb[0].mxu0
        %6095 = vmatprep.mubr.bf16.mxu0 %v5589
        %6096 = vmatmul.mubr.bf16.gmra.mrb[0].mxu0 %v5588
        %v6097 = vpop.f32.mrb[0].mxu0
        %v6098 = vadd.f32 0.0, %v6097
        %v6099 = vpop.f32.mrb[0].mxu0
        %v6100 = vpop.f32.mrb[0].mxu0
        %v6101 = vadd.f32 0.0, %v6100
        %v6102 = vpop.f32.mrb[0].mxu0
        %6103 = vmatprep.mubr.bf16.mxu0 %v5594
        %6104 = vmatmul.mubr.bf16.gmra.mrb[0].mxu0 %v5593
        %v6105 = vpop.f32.mrb[0].mxu0
        %v6106 = vadd.f32 0.0, %v6105
        %v6107 = vpop.f32.mrb[0].mxu0
        %v6108 = vpop.f32.mrb[0].mxu0
        %v6109 = vadd.f32 0.0, %v6108
        %v6110 = vpop.f32.mrb[0].mxu0
        %6111 = vmatprep.mubr.bf16.mxu0 %v5599
        %6112 = vmatmul.mubr.bf16.gmra.mrb[0].mxu0 %v5598
        %v6113 = vpop.f32.mrb[0].mxu0
        %v6114 = vadd.f32 0.0, %v6113
        %v6115 = vpop.f32.mrb[0].mxu0
        %v6116 = vpop.f32.mrb[0].mxu0
        %v6117 = vadd.f32 0.0, %v6116
        %v6118 = vpop.f32.mrb[0].mxu0
        %6119 = vmatprep.mubr.bf16.mxu0 %v5604
        %6120 = vmatmul.mubr.bf16.gmra.mrb[0].mxu0 %v5603
        %v6121 = vpop.f32.mrb[0].mxu0
        %v6122 = vadd.f32 0.0, %v6121
        %v6123 = vpop.f32.mrb[0].mxu0
        %v6124 = vpop.f32.mrb[0].mxu0
        %v6125 = vadd.f32 0.0, %v6124
        %v6126 = vpop.f32.mrb[0].mxu0
        %6127 = vmatprep.mubr.bf16.mxu0 %v5609
        %6128 = vmatmul.mubr.bf16.gmra.mrb[0].mxu0 %v5608
        %v6129 = vpop.f32.mrb[0].mxu0
        %v6130 = vadd.f32 0.0, %v6129
        %v6131 = vpop.f32.mrb[0].mxu0
        %v6132 = vpop.f32.mrb[0].mxu0
        %v6133 = vadd.f32 0.0, %v6132
        %v6134 = vpop.f32.mrb[0].mxu0
        %6135 = vmatprep.mubr.bf16.mxu0 %v5614
        %6136 = vmatmul.mubr.bf16.gmra.mrb[0].mxu0 %v5613
        %v6137 = vpop.f32.mrb[0].mxu0
        %v6138 = vadd.f32 0.0, %v6137
        %v6139 = vpop.f32.mrb[0].mxu0
        %v6140 = vpop.f32.mrb[0].mxu0
        %v6141 = vadd.f32 0.0, %v6140
        %v6142 = vpop.f32.mrb[0].mxu0
        %6143 = vmatprep.mubr.bf16.mxu0 %v5619
        %6144 = vmatmul.mubr.bf16.gmra.mrb[0].mxu0 %v5618
        %v6145 = vpop.f32.mrb[0].mxu0
        %v6146 = vadd.f32 0.0, %v6145
        %v6147 = vpop.f32.mrb[0].mxu0
        %v6148 = vpop.f32.mrb[0].mxu0
        %v6149 = vadd.f32 0.0, %v6148
        %v6150 = vpop.f32.mrb[0].mxu0
        %6151 = vdwg.mxu0
        %6152 = vmatprep.subr.bf16.mxu0 0
        %6153 = vmatpush1.bf16.msra.mxu0 %v5887
        %6154 = vmatprep.subr.bf16.mxu0 0
        %6155 = vmatpush1.bf16.msra.mxu0 %v5888
        %6156 = vmatprep.subr.bf16.mxu0 0
        %6157 = vmatpush1.bf16.msra.mxu0 %v5889
        %6158 = vmatprep.subr.bf16.mxu0 0
        %6159 = vmatpush1.bf16.msra.mxu0 %v5890
        %6160 = vmatprep.subr.bf16.mxu0 0
        %6161 = vmatpush1.bf16.msra.mxu0 %v5891
        %6162 = vmatprep.subr.bf16.mxu0 0
        %6163 = vmatpush1.bf16.msra.mxu0 %v5892
        %6164 = vmatprep.subr.bf16.mxu0 0
        %6165 = vmatpush1.bf16.msra.mxu0 %v5893
        %6166 = vmatprep.subr.bf16.mxu0 0
        %6167 = vmatpush1.bf16.msra.mxu0 %v5894
        %6168 = vmatprep.subr.bf16.mxu0 0
        %6169 = vmatpush1.bf16.msra.mxu0 %v5895
        %6170 = vmatprep.subr.bf16.mxu0 0
        %6171 = vmatpush1.bf16.msra.mxu0 %v5896
        %6172 = vmatprep.subr.bf16.mxu0 0
        %6173 = vmatpush1.bf16.msra.mxu0 %v5897
        %6174 = vmatprep.subr.bf16.mxu0 0
        %6175 = vmatpush1.bf16.msra.mxu0 %v5898
        %6176 = vmatprep.subr.bf16.mxu0 0
        %6177 = vmatpush1.bf16.msra.mxu0 %v5899
        %6178 = vmatprep.subr.bf16.mxu0 0
        %6179 = vmatpush1.bf16.msra.mxu0 %v5900
        %6180 = vmatprep.subr.bf16.mxu0 0
        %6181 = vmatpush1.bf16.msra.mxu0 %v5901
        %6182 = vmatprep.subr.bf16.mxu0 0
        %6183 = vmatpush1.bf16.msra.mxu0 %v5902
        %6184 = vmatprep.mubr.bf16.mxu0 %v5546
        %6185 = vmatmul.mubr.bf16.gmra.mrb[0].mxu0 %v5545
        %v6186 = vpop.f32.mrb[0].mxu0
        %v6187 = vadd.f32 %v6026, %v6186
        %v6188 = vpop.f32.mrb[0].mxu0
        %v6189 = vpop.f32.mrb[0].mxu0
        %v6190 = vadd.f32 %v6029, %v6189
        %v6191 = vpop.f32.mrb[0].mxu0
        %6192 = vmatprep.mubr.bf16.mxu0 %v5551
        %6193 = vmatmul.mubr.bf16.gmra.mrb[0].mxu0 %v5550
        %v6194 = vpop.f32.mrb[0].mxu0
        %v6195 = vadd.f32 %v6034, %v6194
        %v6196 = vpop.f32.mrb[0].mxu0
        %v6197 = vpop.f32.mrb[0].mxu0
        %v6198 = vadd.f32 %v6037, %v6197
        %v6199 = vpop.f32.mrb[0].mxu0
        %6200 = vmatprep.mubr.bf16.mxu0 %v5556
        %6201 = vmatmul.mubr.bf16.gmra.mrb[0].mxu0 %v5555
        %v6202 = vpop.f32.mrb[0].mxu0
        %v6203 = vadd.f32 %v6042, %v6202
        %v6204 = vpop.f32.mrb[0].mxu0
        %v6205 = vpop.f32.mrb[0].mxu0
        %v6206 = vadd.f32 %v6045, %v6205
        %v6207 = vpop.f32.mrb[0].mxu0
        %6208 = vmatprep.mubr.bf16.mxu0 %v5561
        %6209 = vmatmul.mubr.bf16.gmra.mrb[0].mxu0 %v5560
        %v6210 = vpop.f32.mrb[0].mxu0
        %v6211 = vadd.f32 %v6050, %v6210
        %v6212 = vpop.f32.mrb[0].mxu0
        %v6213 = vpop.f32.mrb[0].mxu0
        %v6214 = vadd.f32 %v6053, %v6213
        %v6215 = vpop.f32.mrb[0].mxu0
        %6216 = vmatprep.mubr.bf16.mxu0 %v5566
        %6217 = vmatmul.mubr.bf16.gmra.mrb[0].mxu0 %v5565
        %v6218 = vpop.f32.mrb[0].mxu0
        %v6219 = vadd.f32 %v6058, %v6218
        %v6220 = vpop.f32.mrb[0].mxu0
        %v6221 = vpop.f32.mrb[0].mxu0
        %v6222 = vadd.f32 %v6061, %v6221
        %v6223 = vpop.f32.mrb[0].mxu0
        %6224 = vmatprep.mubr.bf16.mxu0 %v5571
        %6225 = vmatmul.mubr.bf16.gmra.mrb[0].mxu0 %v5570
        %v6226 = vpop.f32.mrb[0].mxu0
        %v6227 = vadd.f32 %v6066, %v6226
        %v6228 = vpop.f32.mrb[0].mxu0
        %v6229 = vpop.f32.mrb[0].mxu0
        %v6230 = vadd.f32 %v6069, %v6229
        %v6231 = vpop.f32.mrb[0].mxu0
        %6232 = vmatprep.mubr.bf16.mxu0 %v5576
        %6233 = vmatmul.mubr.bf16.gmra.mrb[0].mxu0 %v5575
        %v6234 = vpop.f32.mrb[0].mxu0
        %v6235 = vadd.f32 %v6074, %v6234
        %v6236 = vpop.f32.mrb[0].mxu0
        %v6237 = vpop.f32.mrb[0].mxu0
        %v6238 = vadd.f32 %v6077, %v6237
        %v6239 = vpop.f32.mrb[0].mxu0
        %6240 = vmatprep.mubr.bf16.mxu0 %v5581
        %6241 = vmatmul.mubr.bf16.gmra.mrb[0].mxu0 %v5580
        %v6242 = vpop.f32.mrb[0].mxu0
        %v6243 = vadd.f32 %v6082, %v6242
        %v6244 = vpop.f32.mrb[0].mxu0
        %v6245 = vpop.f32.mrb[0].mxu0
        %v6246 = vadd.f32 %v6085, %v6245
        %v6247 = vpop.f32.mrb[0].mxu0
        %6248 = vmatprep.mubr.bf16.mxu0 %v5586
        %6249 = vmatmul.mubr.bf16.gmra.mrb[0].mxu0 %v5585
        %v6250 = vpop.f32.mrb[0].mxu0
        %v6251 = vadd.f32 %v6090, %v6250
        %v6252 = vpop.f32.mrb[0].mxu0
        %v6253 = vpop.f32.mrb[0].mxu0
        %v6254 = vadd.f32 %v6093, %v6253
        %v6255 = vpop.f32.mrb[0].mxu0
        %6256 = vmatprep.mubr.bf16.mxu0 %v5591
        %6257 = vmatmul.mubr.bf16.gmra.mrb[0].mxu0 %v5590
        %v6258 = vpop.f32.mrb[0].mxu0
        %v6259 = vadd.f32 %v6098, %v6258
        %v6260 = vpop.f32.mrb[0].mxu0
        %v6261 = vpop.f32.mrb[0].mxu0
        %v6262 = vadd.f32 %v6101, %v6261
        %v6263 = vpop.f32.mrb[0].mxu0
        %6264 = vmatprep.mubr.bf16.mxu0 %v5596
        %6265 = vmatmul.mubr.bf16.gmra.mrb[0].mxu0 %v5595
        %v6266 = vpop.f32.mrb[0].mxu0
        %v6267 = vadd.f32 %v6106, %v6266
        %v6268 = vpop.f32.mrb[0].mxu0
        %v6269 = vpop.f32.mrb[0].mxu0
        %v6270 = vadd.f32 %v6109, %v6269
        %v6271 = vpop.f32.mrb[0].mxu0
        %6272 = vmatprep.mubr.bf16.mxu0 %v5601
        %6273 = vmatmul.mubr.bf16.gmra.mrb[0].mxu0 %v5600
        %v6274 = vpop.f32.mrb[0].mxu0
        %v6275 = vadd.f32 %v6114, %v6274
        %v6276 = vpop.f32.mrb[0].mxu0
        %v6277 = vpop.f32.mrb[0].mxu0
        %v6278 = vadd.f32 %v6117, %v6277
        %v6279 = vpop.f32.mrb[0].mxu0
        %6280 = vmatprep.mubr.bf16.mxu0 %v5606
        %6281 = vmatmul.mubr.bf16.gmra.mrb[0].mxu0 %v5605
        %v6282 = vpop.f32.mrb[0].mxu0
        %v6283 = vadd.f32 %v6122, %v6282
        %v6284 = vpop.f32.mrb[0].mxu0
        %v6285 = vpop.f32.mrb[0].mxu0
        %v6286 = vadd.f32 %v6125, %v6285
        %v6287 = vpop.f32.mrb[0].mxu0
        %6288 = vmatprep.mubr.bf16.mxu0 %v5611
        %6289 = vmatmul.mubr.bf16.gmra.mrb[0].mxu0 %v5610
        %v6290 = vpop.f32.mrb[0].mxu0
        %v6291 = vadd.f32 %v6130, %v6290
        %v6292 = vpop.f32.mrb[0].mxu0
        %v6293 = vpop.f32.mrb[0].mxu0
        %v6294 = vadd.f32 %v6133, %v6293
        %v6295 = vpop.f32.mrb[0].mxu0
        %6296 = vmatprep.mubr.bf16.mxu0 %v5616
        %6297 = vmatmul.mubr.bf16.gmra.mrb[0].mxu0 %v5615
        %v6298 = vpop.f32.mrb[0].mxu0
        %v6299 = vadd.f32 %v6138, %v6298
        %v6300 = vpop.f32.mrb[0].mxu0
        %v6301 = vpop.f32.mrb[0].mxu0
        %v6302 = vadd.f32 %v6141, %v6301
        %v6303 = vpop.f32.mrb[0].mxu0
        %6304 = vmatprep.mubr.bf16.mxu0 %v5621
        %6305 = vmatmul.mubr.bf16.gmra.mrb[0].mxu0 %v5620
        %v6306 = vpop.f32.mrb[0].mxu0
        %v6307 = vadd.f32 %v6146, %v6306
        %v6308 = vpop.f32.mrb[0].mxu0
        %v6309 = vpop.f32.mrb[0].mxu0
        %v6310 = vadd.f32 %v6149, %v6309
        %v6311 = vpop.f32.mrb[0].mxu0
        %6312 = vdwg.mxu0
        %6313 = vmatprep.subr.bf16.mxu0 0
        %6314 = vmatpush1.bf16.msra.mxu0 %v5903
        %6315 = vmatprep.subr.bf16.mxu0 0
        %6316 = vmatpush1.bf16.msra.mxu0 %v5904
        %6317 = vmatprep.subr.bf16.mxu0 0
        %6318 = vmatpush1.bf16.msra.mxu0 %v5905
        %6319 = vmatprep.subr.bf16.mxu0 0
        %6320 = vmatpush1.bf16.msra.mxu0 %v5906
        %6321 = vmatprep.subr.bf16.mxu0 0
        %6322 = vmatpush1.bf16.msra.mxu0 0
        %6323 = vmatprep.subr.bf16.mxu0 0
        %6324 = vmatpush1.bf16.msra.mxu0 0
        %6325 = vmatprep.subr.bf16.mxu0 0
        %6326 = vmatpush1.bf16.msra.mxu0 0
        %6327 = vmatprep.subr.bf16.mxu0 0
        %6328 = vmatpush1.bf16.msra.mxu0 0
        %6329 = vmatprep.subr.bf16.mxu0 0
        %6330 = vmatpush1.bf16.msra.mxu0 0
        %6331 = vmatprep.subr.bf16.mxu0 0
        %6332 = vmatpush1.bf16.msra.mxu0 0
        %6333 = vmatprep.subr.bf16.mxu0 0
        %6334 = vmatpush1.bf16.msra.mxu0 0
        %6335 = vmatprep.subr.bf16.mxu0 0
        %6336 = vmatpush1.bf16.msra.mxu0 0
        %6337 = vmatprep.subr.bf16.mxu0 0
        %6338 = vmatpush1.bf16.msra.mxu0 0
        %6339 = vmatprep.subr.bf16.mxu0 0
        %6340 = vmatpush1.bf16.msra.mxu0 0
        %6341 = vmatprep.subr.bf16.mxu0 0
        %6342 = vmatpush1.bf16.msra.mxu0 0
        %6343 = vmatprep.subr.bf16.mxu0 0
        %6344 = vmatpush1.bf16.msra.mxu0 0
        %6345 = vmatprep.mubr.bf16.mxu0 0
        %6346 = vmatmul.mubr.bf16.gmra.mrb[0].mxu0 %v5944
        %v6347 = vpop.f32.mrb[0].mxu0
        %v6348 = vadd.f32 %v6187, %v6347
        %v6349 = vpop.f32.mrb[0].mxu0
        %v6350 = vpop.f32.mrb[0].mxu0
        %v6351 = vadd.f32 %v6190, %v6350
        %v6352 = vpop.f32.mrb[0].mxu0
        %6353 = vmatprep.mubr.bf16.mxu0 0
        %6354 = vmatmul.mubr.bf16.gmra.mrb[0].mxu0 %v5947
        %v6355 = vpop.f32.mrb[0].mxu0
        %v6356 = vadd.f32 %v6195, %v6355
        %v6357 = vpop.f32.mrb[0].mxu0
        %v6358 = vpop.f32.mrb[0].mxu0
        %v6359 = vadd.f32 %v6198, %v6358
        %v6360 = vpop.f32.mrb[0].mxu0
        %6361 = vmatprep.mubr.bf16.mxu0 0
        %6362 = vmatmul.mubr.bf16.gmra.mrb[0].mxu0 %v5950
        %v6363 = vpop.f32.mrb[0].mxu0
        %v6364 = vadd.f32 %v6203, %v6363
        %v6365 = vpop.f32.mrb[0].mxu0
        %v6366 = vpop.f32.mrb[0].mxu0
        %v6367 = vadd.f32 %v6206, %v6366
        %v6368 = vpop.f32.mrb[0].mxu0
        %6369 = vmatprep.mubr.bf16.mxu0 0
        %6370 = vmatmul.mubr.bf16.gmra.mrb[0].mxu0 %v5953
        %v6371 = vpop.f32.mrb[0].mxu0
        %v6372 = vadd.f32 %v6211, %v6371
        %v6373 = vpop.f32.mrb[0].mxu0
        %v6374 = vpop.f32.mrb[0].mxu0
        %v6375 = vadd.f32 %v6214, %v6374
        %v6376 = vpop.f32.mrb[0].mxu0
        %6377 = vmatprep.mubr.bf16.mxu0 0
        %6378 = vmatmul.mubr.bf16.gmra.mrb[0].mxu0 %v5956
        %v6379 = vpop.f32.mrb[0].mxu0
        %v6380 = vadd.f32 %v6219, %v6379
        %v6381 = vpop.f32.mrb[0].mxu0
        %v6382 = vpop.f32.mrb[0].mxu0
        %v6383 = vadd.f32 %v6222, %v6382
        %v6384 = vpop.f32.mrb[0].mxu0
        %6385 = vmatprep.mubr.bf16.mxu0 0
        %6386 = vmatmul.mubr.bf16.gmra.mrb[0].mxu0 %v5959
        %v6387 = vpop.f32.mrb[0].mxu0
        %v6388 = vadd.f32 %v6227, %v6387
        %v6389 = vpop.f32.mrb[0].mxu0
        %v6390 = vpop.f32.mrb[0].mxu0
        %v6391 = vadd.f32 %v6230, %v6390
        %v6392 = vpop.f32.mrb[0].mxu0
        %6393 = vmatprep.mubr.bf16.mxu0 0
        %6394 = vmatmul.mubr.bf16.gmra.mrb[0].mxu0 %v5962
        %v6395 = vpop.f32.mrb[0].mxu0
        %v6396 = vadd.f32 %v6235, %v6395
        %v6397 = vpop.f32.mrb[0].mxu0
        %v6398 = vpop.f32.mrb[0].mxu0
        %v6399 = vadd.f32 %v6238, %v6398
        %v6400 = vpop.f32.mrb[0].mxu0
        %6401 = vmatprep.mubr.bf16.mxu0 0
        %6402 = vmatmul.mubr.bf16.gmra.mrb[0].mxu0 %v5965
        %v6403 = vpop.f32.mrb[0].mxu0
        %v6404 = vadd.f32 %v6243, %v6403
        %v6405 = vpop.f32.mrb[0].mxu0
        %v6406 = vpop.f32.mrb[0].mxu0
        %v6407 = vadd.f32 %v6246, %v6406
        %v6408 = vpop.f32.mrb[0].mxu0
        %6409 = vmatprep.mubr.bf16.mxu0 0
        %6410 = vmatmul.mubr.bf16.gmra.mrb[0].mxu0 %v5968
        %v6411 = vpop.f32.mrb[0].mxu0
        %v6412 = vadd.f32 %v6251, %v6411
        %v6413 = vpop.f32.mrb[0].mxu0
        %v6414 = vpop.f32.mrb[0].mxu0
        %v6415 = vadd.f32 %v6254, %v6414
        %v6416 = vpop.f32.mrb[0].mxu0
        %6417 = vmatprep.mubr.bf16.mxu0 0
        %6418 = vmatmul.mubr.bf16.gmra.mrb[0].mxu0 %v5971
        %v6419 = vpop.f32.mrb[0].mxu0
        %v6420 = vadd.f32 %v6259, %v6419
        %v6421 = vpop.f32.mrb[0].mxu0
        %v6422 = vpop.f32.mrb[0].mxu0
        %v6423 = vadd.f32 %v6262, %v6422
        %v6424 = vpop.f32.mrb[0].mxu0
        %6425 = vmatprep.mubr.bf16.mxu0 0
        %6426 = vmatmul.mubr.bf16.gmra.mrb[0].mxu0 %v5974
        %v6427 = vpop.f32.mrb[0].mxu0
        %v6428 = vadd.f32 %v6267, %v6427
        %v6429 = vpop.f32.mrb[0].mxu0
        %v6430 = vpop.f32.mrb[0].mxu0
        %v6431 = vadd.f32 %v6270, %v6430
        %v6432 = vpop.f32.mrb[0].mxu0
        %6433 = vmatprep.mubr.bf16.mxu0 0
        %6434 = vmatmul.mubr.bf16.gmra.mrb[0].mxu0 %v5977
        %v6435 = vpop.f32.mrb[0].mxu0
        %v6436 = vadd.f32 %v6275, %v6435
        %v6437 = vpop.f32.mrb[0].mxu0
        %v6438 = vpop.f32.mrb[0].mxu0
        %v6439 = vadd.f32 %v6278, %v6438
        %v6440 = vpop.f32.mrb[0].mxu0
        %6441 = vmatprep.mubr.bf16.mxu0 0
        %6442 = vmatmul.mubr.bf16.gmra.mrb[0].mxu0 %v5980
        %v6443 = vpop.f32.mrb[0].mxu0
        %v6444 = vadd.f32 %v6283, %v6443
        %v6445 = vpop.f32.mrb[0].mxu0
        %v6446 = vpop.f32.mrb[0].mxu0
        %v6447 = vadd.f32 %v6286, %v6446
        %v6448 = vpop.f32.mrb[0].mxu0
        %6449 = vmatprep.mubr.bf16.mxu0 0
        %6450 = vmatmul.mubr.bf16.gmra.mrb[0].mxu0 %v5983
        %v6451 = vpop.f32.mrb[0].mxu0
        %v6452 = vadd.f32 %v6291, %v6451
        %v6453 = vpop.f32.mrb[0].mxu0
        %v6454 = vpop.f32.mrb[0].mxu0
        %v6455 = vadd.f32 %v6294, %v6454
        %v6456 = vpop.f32.mrb[0].mxu0
        %6457 = vmatprep.mubr.bf16.mxu0 0
        %6458 = vmatmul.mubr.bf16.gmra.mrb[0].mxu0 %v5986
        %v6459 = vpop.f32.mrb[0].mxu0
        %v6460 = vadd.f32 %v6299, %v6459
        %v6461 = vpop.f32.mrb[0].mxu0
        %v6462 = vpop.f32.mrb[0].mxu0
        %v6463 = vadd.f32 %v6302, %v6462
        %v6464 = vpop.f32.mrb[0].mxu0
        %6465 = vmatprep.mubr.bf16.mxu0 0
        %6466 = vmatmul.mubr.bf16.gmra.mrb[0].mxu0 %v5989
        %v6467 = vpop.f32.mrb[0].mxu0
        %v6468 = vadd.f32 %v6307, %v6467
        %v6469 = vpop.f32.mrb[0].mxu0
        %v6470 = vpop.f32.mrb[0].mxu0
        %v6471 = vadd.f32 %v6310, %v6470
        %v6472 = vpop.f32.mrb[0].mxu0
        %6473 = vdwg.mxu0
        %v6474 = vadd.f32 %v5623, %v6348
        %v6475 = vadd.f32 %v5624, %v6351
        %v6476 = vadd.f32 %v5625, %v6356
        %v6477 = vadd.f32 %v5626, %v6359
        %v6478 = vadd.f32 %v5627, %v6364
        %v6479 = vadd.f32 %v5628, %v6367
        %v6480 = vadd.f32 %v5629, %v6372
        %v6481 = vadd.f32 %v5630, %v6375
        %v6482 = vadd.f32 %v5631, %v6380
        %v6483 = vadd.f32 %v5632, %v6383
        %v6484 = vadd.f32 %v5633, %v6388
        %v6485 = vadd.f32 %v5634, %v6391
        %v6486 = vadd.f32 %v5635, %v6396
        %v6487 = vadd.f32 %v5636, %v6399
        %v6488 = vadd.f32 %v5637, %v6404
        %v6489 = vadd.f32 %v5638, %v6407
        %v6490 = vadd.f32 %v5639, %v6412
        %v6491 = vadd.f32 %v5640, %v6415
        %v6492 = vadd.f32 %v5641, %v6420
        %v6493 = vadd.f32 %v5642, %v6423
        %v6494 = vadd.f32 %v5643, %v6428
        %v6495 = vadd.f32 %v5644, %v6431
        %v6496 = vadd.f32 %v5645, %v6436
        %v6497 = vadd.f32 %v5646, %v6439
        %v6498 = vadd.f32 %v5647, %v6444
        %v6499 = vadd.f32 %v5648, %v6447
        %v6500 = vadd.f32 %v5649, %v6452
        %v6501 = vadd.f32 %v5650, %v6455
        %v6502 = vadd.f32 %v5651, %v6460
        %v6503 = vadd.f32 %v5652, %v6463
        %v6504 = vadd.f32 %v5653, %v6468
        %v6505 = vadd.f32 %v5654, %v6471
        %v6506 = vsel %vm338, %v6474, 0.0
        %v6507 = vsel %vm338, %v6475, 0.0
        %v6508 = vadd.f32 %v6506, %v6507
        %v6509 = vsel %vm338, %v6476, 0.0
        %v6510 = vadd.f32 %v6508, %v6509
        %v6511 = vsel %vm338, %v6477, 0.0
        %v6512 = vadd.f32 %v6510, %v6511
        %v6513 = vsel %vm338, %v6478, 0.0
        %v6514 = vadd.f32 %v6512, %v6513
        %v6515 = vsel %vm338, %v6479, 0.0
        %v6516 = vadd.f32 %v6514, %v6515
        %v6517 = vsel %vm338, %v6480, 0.0
        %v6518 = vadd.f32 %v6516, %v6517
        %v6519 = vsel %vm338, %v6481, 0.0
        %v6520 = vadd.f32 %v6518, %v6519
        %v6521 = vsel %vm338, %v6482, 0.0
        %v6522 = vadd.f32 %v6520, %v6521
        %v6523 = vsel %vm338, %v6483, 0.0
        %v6524 = vadd.f32 %v6522, %v6523
        %v6525 = vsel %vm338, %v6484, 0.0
        %v6526 = vadd.f32 %v6524, %v6525
        %v6527 = vsel %vm338, %v6485, 0.0
        %v6528 = vadd.f32 %v6526, %v6527
        %v6529 = vsel %vm338, %v6486, 0.0
        %v6530 = vadd.f32 %v6528, %v6529
        %v6531 = vsel %vm338, %v6487, 0.0
        %v6532 = vadd.f32 %v6530, %v6531
        %v6533 = vsel %vm338, %v6488, 0.0
        %v6534 = vadd.f32 %v6532, %v6533
        %v6535 = vsel %vm338, %v6489, 0.0
        %v6536 = vadd.f32 %v6534, %v6535
        %v6537 = vsel %vm338, %v6490, 0.0
        %v6538 = vadd.f32 %v6536, %v6537
        %v6539 = vsel %vm338, %v6491, 0.0
        %v6540 = vadd.f32 %v6538, %v6539
        %v6541 = vsel %vm338, %v6492, 0.0
        %v6542 = vadd.f32 %v6540, %v6541
        %v6543 = vsel %vm338, %v6493, 0.0
        %v6544 = vadd.f32 %v6542, %v6543
        %v6545 = vsel %vm338, %v6494, 0.0
        %v6546 = vadd.f32 %v6544, %v6545
        %v6547 = vsel %vm338, %v6495, 0.0
        %v6548 = vadd.f32 %v6546, %v6547
        %v6549 = vsel %vm338, %v6496, 0.0
        %v6550 = vadd.f32 %v6548, %v6549
        %v6551 = vsel %vm338, %v6497, 0.0
        %v6552 = vadd.f32 %v6550, %v6551
        %v6553 = vsel %vm338, %v6498, 0.0
        %v6554 = vadd.f32 %v6552, %v6553
        %v6555 = vsel %vm338, %v6499, 0.0
        %v6556 = vadd.f32 %v6554, %v6555
        %v6557 = vsel %vm338, %v6500, 0.0
        %v6558 = vadd.f32 %v6556, %v6557
        %v6559 = vsel %vm338, %v6501, 0.0
        %v6560 = vadd.f32 %v6558, %v6559
        %v6561 = vsel %vm338, %v6502, 0.0
        %v6562 = vadd.f32 %v6560, %v6561
        %v6563 = vsel %vm338, %v6503, 0.0
        %v6564 = vadd.f32 %v6562, %v6563
        %v6565 = vsel %vm338, %v6504, 0.0
        %v6566 = vadd.f32 %v6564, %v6565
        %v6567 = vsel %vm338, %v6505, 0.0
        %v6568 = vadd.f32 %v6566, %v6567
        %v6569 = vrot.slane %v6568, 4
        %v6570 = vadd.f32 %v6568, %v6569
        %v6571 = vrot.slane %v6570, 2
        %v6572 = vadd.f32 %v6570, %v6571
        %v6573 = vrot.slane %v6572, 1
        %v6574 = vadd.f32 %v6572, %v6573
        %v6575 = vmul.f32 %v6474, %v6474
        %v6576 = vmul.f32 %v6475, %v6475
        %v6577 = vmul.f32 %v6476, %v6476
        %v6578 = vmul.f32 %v6477, %v6477
        %v6579 = vmul.f32 %v6478, %v6478
        %v6580 = vmul.f32 %v6479, %v6479
        %v6581 = vmul.f32 %v6480, %v6480
        %v6582 = vmul.f32 %v6481, %v6481
        %v6583 = vmul.f32 %v6482, %v6482
        %v6584 = vmul.f32 %v6483, %v6483
        %v6585 = vmul.f32 %v6484, %v6484
        %v6586 = vmul.f32 %v6485, %v6485
        %v6587 = vmul.f32 %v6486, %v6486
        %v6588 = vmul.f32 %v6487, %v6487
        %v6589 = vmul.f32 %v6488, %v6488
        %v6590 = vmul.f32 %v6489, %v6489
        %v6591 = vmul.f32 %v6490, %v6490
        %v6592 = vmul.f32 %v6491, %v6491
        %v6593 = vmul.f32 %v6492, %v6492
        %v6594 = vmul.f32 %v6493, %v6493
        %v6595 = vmul.f32 %v6494, %v6494
        %v6596 = vmul.f32 %v6495, %v6495
        %v6597 = vmul.f32 %v6496, %v6496
        %v6598 = vmul.f32 %v6497, %v6497
        %v6599 = vmul.f32 %v6498, %v6498
        %v6600 = vmul.f32 %v6499, %v6499
        %v6601 = vmul.f32 %v6500, %v6500
        %v6602 = vmul.f32 %v6501, %v6501
        %v6603 = vmul.f32 %v6502, %v6502
        %v6604 = vmul.f32 %v6503, %v6503
        %v6605 = vmul.f32 %v6504, %v6504
        %v6606 = vmul.f32 %v6505, %v6505
        %v6607 = vsel %vm338, %v6575, 0.0
        %v6608 = vsel %vm338, %v6576, 0.0
        %v6609 = vadd.f32 %v6607, %v6608
        %v6610 = vsel %vm338, %v6577, 0.0
        %v6611 = vadd.f32 %v6609, %v6610
        %v6612 = vsel %vm338, %v6578, 0.0
        %v6613 = vadd.f32 %v6611, %v6612
        %v6614 = vsel %vm338, %v6579, 0.0
        %v6615 = vadd.f32 %v6613, %v6614
        %v6616 = vsel %vm338, %v6580, 0.0
        %v6617 = vadd.f32 %v6615, %v6616
        %v6618 = vsel %vm338, %v6581, 0.0
        %v6619 = vadd.f32 %v6617, %v6618
        %v6620 = vsel %vm338, %v6582, 0.0
        %v6621 = vadd.f32 %v6619, %v6620
        %v6622 = vsel %vm338, %v6583, 0.0
        %v6623 = vadd.f32 %v6621, %v6622
        %v6624 = vsel %vm338, %v6584, 0.0
        %v6625 = vadd.f32 %v6623, %v6624
        %v6626 = vsel %vm338, %v6585, 0.0
        %v6627 = vadd.f32 %v6625, %v6626
        %v6628 = vsel %vm338, %v6586, 0.0
        %v6629 = vadd.f32 %v6627, %v6628
        %v6630 = vsel %vm338, %v6587, 0.0
        %v6631 = vadd.f32 %v6629, %v6630
        %v6632 = vsel %vm338, %v6588, 0.0
        %v6633 = vadd.f32 %v6631, %v6632
        %v6634 = vsel %vm338, %v6589, 0.0
        %v6635 = vadd.f32 %v6633, %v6634
        %v6636 = vsel %vm338, %v6590, 0.0
        %v6637 = vadd.f32 %v6635, %v6636
        %v6638 = vsel %vm338, %v6591, 0.0
        %v6639 = vadd.f32 %v6637, %v6638
        %v6640 = vsel %vm338, %v6592, 0.0
        %v6641 = vadd.f32 %v6639, %v6640
        %v6642 = vsel %vm338, %v6593, 0.0
        %v6643 = vadd.f32 %v6641, %v6642
        %v6644 = vsel %vm338, %v6594, 0.0
        %v6645 = vadd.f32 %v6643, %v6644
        %v6646 = vsel %vm338, %v6595, 0.0
        %v6647 = vadd.f32 %v6645, %v6646
        %v6648 = vsel %vm338, %v6596, 0.0
        %v6649 = vadd.f32 %v6647, %v6648
        %v6650 = vsel %vm338, %v6597, 0.0
        %v6651 = vadd.f32 %v6649, %v6650
        %v6652 = vsel %vm338, %v6598, 0.0
        %v6653 = vadd.f32 %v6651, %v6652
        %v6654 = vsel %vm338, %v6599, 0.0
        %v6655 = vadd.f32 %v6653, %v6654
        %v6656 = vsel %vm338, %v6600, 0.0
        %v6657 = vadd.f32 %v6655, %v6656
        %v6658 = vsel %vm338, %v6601, 0.0
        %v6659 = vadd.f32 %v6657, %v6658
        %v6660 = vsel %vm338, %v6602, 0.0
        %v6661 = vadd.f32 %v6659, %v6660
        %v6662 = vsel %vm338, %v6603, 0.0
        %v6663 = vadd.f32 %v6661, %v6662
        %v6664 = vsel %vm338, %v6604, 0.0
        %v6665 = vadd.f32 %v6663, %v6664
        %v6666 = vsel %vm338, %v6605, 0.0
        %v6667 = vadd.f32 %v6665, %v6666
        %v6668 = vsel %vm338, %v6606, 0.0
        %v6669 = vadd.f32 %v6667, %v6668
        %v6670 = vrot.slane %v6669, 4
        %v6671 = vadd.f32 %v6669, %v6670
        %v6672 = vrot.slane %v6671, 2
        %v6673 = vadd.f32 %v6671, %v6672
        %v6674 = vrot.slane %v6673, 1
        %v6675 = vadd.f32 %v6673, %v6674
        %v6676 = vmul.f32 %v6574, 0.00390625
        %v6677 = vmul.f32 %v6675, 0.00390625
        %v6678 = vmul.f32 %v6676, %v6676
        %v6679 = vsub.f32 %v6677, %v6678
        %v6680 = vsub.f32 %v6474, %v6676
        %v6681 = vsub.f32 %v6475, %v6676
        %v6682 = vsub.f32 %v6476, %v6676
        %v6683 = vsub.f32 %v6477, %v6676
        %v6684 = vsub.f32 %v6478, %v6676
        %v6685 = vsub.f32 %v6479, %v6676
        %v6686 = vsub.f32 %v6480, %v6676
        %v6687 = vsub.f32 %v6481, %v6676
        %v6688 = vsub.f32 %v6482, %v6676
        %v6689 = vsub.f32 %v6483, %v6676
        %v6690 = vsub.f32 %v6484, %v6676
        %v6691 = vsub.f32 %v6485, %v6676
        %v6692 = vsub.f32 %v6486, %v6676
        %v6693 = vsub.f32 %v6487, %v6676
        %v6694 = vsub.f32 %v6488, %v6676
        %v6695 = vsub.f32 %v6489, %v6676
        %v6696 = vsub.f32 %v6490, %v6676
        %v6697 = vsub.f32 %v6491, %v6676
        %v6698 = vsub.f32 %v6492, %v6676
        %v6699 = vsub.f32 %v6493, %v6676
        %v6700 = vsub.f32 %v6494, %v6676
        %v6701 = vsub.f32 %v6495, %v6676
        %v6702 = vsub.f32 %v6496, %v6676
        %v6703 = vsub.f32 %v6497, %v6676
        %v6704 = vsub.f32 %v6498, %v6676
        %v6705 = vsub.f32 %v6499, %v6676
        %v6706 = vsub.f32 %v6500, %v6676
        %v6707 = vsub.f32 %v6501, %v6676
        %v6708 = vsub.f32 %v6502, %v6676
        %v6709 = vsub.f32 %v6503, %v6676
        %v6710 = vsub.f32 %v6504, %v6676
        %v6711 = vsub.f32 %v6505, %v6676
        %v6712 = vadd.f32 %v6679, 1e-05
        %v6713 = vrsqrt.pop %v6712
        %v6714 = vmul.f32 %v6680, %v6713
        %v6715 = vmul.f32 %v6681, %v6713
        %v6716 = vmul.f32 %v6682, %v6713
        %v6717 = vmul.f32 %v6683, %v6713
        %v6718 = vmul.f32 %v6684, %v6713
        %v6719 = vmul.f32 %v6685, %v6713
        %v6720 = vmul.f32 %v6686, %v6713
        %v6721 = vmul.f32 %v6687, %v6713
        %v6722 = vmul.f32 %v6688, %v6713
        %v6723 = vmul.f32 %v6689, %v6713
        %v6724 = vmul.f32 %v6690, %v6713
        %v6725 = vmul.f32 %v6691, %v6713
        %v6726 = vmul.f32 %v6692, %v6713
        %v6727 = vmul.f32 %v6693, %v6713
        %v6728 = vmul.f32 %v6694, %v6713
        %v6729 = vmul.f32 %v6695, %v6713
        %v6730 = vmul.f32 %v6696, %v6713
        %v6731 = vmul.f32 %v6697, %v6713
        %v6732 = vmul.f32 %v6698, %v6713
        %v6733 = vmul.f32 %v6699, %v6713
        %v6734 = vmul.f32 %v6700, %v6713
        %v6735 = vmul.f32 %v6701, %v6713
        %v6736 = vmul.f32 %v6702, %v6713
        %v6737 = vmul.f32 %v6703, %v6713
        %v6738 = vmul.f32 %v6704, %v6713
        %v6739 = vmul.f32 %v6705, %v6713
        %v6740 = vmul.f32 %v6706, %v6713
        %v6741 = vmul.f32 %v6707, %v6713
        %v6742 = vmul.f32 %v6708, %v6713
        %v6743 = vmul.f32 %v6709, %v6713
        %v6744 = vmul.f32 %v6710, %v6713
        %v6745 = vmul.f32 %v6711, %v6713
        %v6746 = vld [vmem:[%s7] sm:$0x1]
        %v6748 = vlaneseq
        %v6749 = vshrl.u32 %v6748, 7
        %v6750 = vsub.s32 0, %v6749
        %v6751 = vrot.slane %v6746, %v6750
        %v6753 = vmul.f32 %v6714, %v6751
        %v6754 = vmul.f32 %v6715, %v6751
        %v6755 = vmul.f32 %v6716, %v6751
        %v6756 = vmul.f32 %v6717, %v6751
        %v6757 = vmul.f32 %v6718, %v6751
        %v6758 = vmul.f32 %v6719, %v6751
        %v6759 = vmul.f32 %v6720, %v6751
        %v6760 = vmul.f32 %v6721, %v6751
        %v6761 = vmul.f32 %v6722, %v6751
        %v6762 = vmul.f32 %v6723, %v6751
        %v6763 = vmul.f32 %v6724, %v6751
        %v6764 = vmul.f32 %v6725, %v6751
        %v6765 = vmul.f32 %v6726, %v6751
        %v6766 = vmul.f32 %v6727, %v6751
        %v6767 = vmul.f32 %v6728, %v6751
        %v6768 = vmul.f32 %v6729, %v6751
        %v6769 = vmul.f32 %v6730, %v6751
        %v6770 = vmul.f32 %v6731, %v6751
        %v6771 = vmul.f32 %v6732, %v6751
        %v6772 = vmul.f32 %v6733, %v6751
        %v6773 = vmul.f32 %v6734, %v6751
        %v6774 = vmul.f32 %v6735, %v6751
        %v6775 = vmul.f32 %v6736, %v6751
        %v6776 = vmul.f32 %v6737, %v6751
        %v6777 = vmul.f32 %v6738, %v6751
        %v6778 = vmul.f32 %v6739, %v6751
        %v6779 = vmul.f32 %v6740, %v6751
        %v6780 = vmul.f32 %v6741, %v6751
        %v6781 = vmul.f32 %v6742, %v6751
        %v6782 = vmul.f32 %v6743, %v6751
        %v6783 = vmul.f32 %v6744, %v6751
        %v6784 = vmul.f32 %v6745, %v6751
        %v6785 = vld [vmem:[%s8] sm:$0x1]
        %v6787 = vlaneseq
        %v6788 = vshrl.u32 %v6787, 7
        %v6789 = vsub.s32 0, %v6788
        %v6790 = vrot.slane %v6785, %v6789
        %v6792 = vadd.f32 %v6753, %v6790
        %v6793 = vadd.f32 %v6754, %v6790
        %v6794 = vadd.f32 %v6755, %v6790
        %v6795 = vadd.f32 %v6756, %v6790
        %v6796 = vadd.f32 %v6757, %v6790
        %v6797 = vadd.f32 %v6758, %v6790
        %v6798 = vadd.f32 %v6759, %v6790
        %v6799 = vadd.f32 %v6760, %v6790
        %v6800 = vadd.f32 %v6761, %v6790
        %v6801 = vadd.f32 %v6762, %v6790
        %v6802 = vadd.f32 %v6763, %v6790
        %v6803 = vadd.f32 %v6764, %v6790
        %v6804 = vadd.f32 %v6765, %v6790
        %v6805 = vadd.f32 %v6766, %v6790
        %v6806 = vadd.f32 %v6767, %v6790
        %v6807 = vadd.f32 %v6768, %v6790
        %v6808 = vadd.f32 %v6769, %v6790
        %v6809 = vadd.f32 %v6770, %v6790
        %v6810 = vadd.f32 %v6771, %v6790
        %v6811 = vadd.f32 %v6772, %v6790
        %v6812 = vadd.f32 %v6773, %v6790
        %v6813 = vadd.f32 %v6774, %v6790
        %v6814 = vadd.f32 %v6775, %v6790
        %v6815 = vadd.f32 %v6776, %v6790
        %v6816 = vadd.f32 %v6777, %v6790
        %v6817 = vadd.f32 %v6778, %v6790
        %v6818 = vadd.f32 %v6779, %v6790
        %v6819 = vadd.f32 %v6780, %v6790
        %v6820 = vadd.f32 %v6781, %v6790
        %v6821 = vadd.f32 %v6782, %v6790
        %v6822 = vadd.f32 %v6783, %v6790
        %v6823 = vadd.f32 %v6784, %v6790
        %v6824 = vadd.f32 %v6792, %v451
        %v6825 = vadd.f32 %v6793, %v452
        %v6826 = vadd.f32 %v6794, %v453
        %v6827 = vadd.f32 %v6795, %v454
        %v6828 = vadd.f32 %v6796, %v455
        %v6829 = vadd.f32 %v6797, %v456
        %v6830 = vadd.f32 %v6798, %v457
        %v6831 = vadd.f32 %v6799, %v458
        %v6832 = vadd.f32 %v6800, %v459
        %v6833 = vadd.f32 %v6801, %v460
        %v6834 = vadd.f32 %v6802, %v461
        %v6835 = vadd.f32 %v6803, %v462
        %v6836 = vadd.f32 %v6804, %v463
        %v6837 = vadd.f32 %v6805, %v464
        %v6838 = vadd.f32 %v6806, %v465
        %v6839 = vadd.f32 %v6807, %v466
        %v6840 = vadd.f32 %v6808, %v467
        %v6841 = vadd.f32 %v6809, %v468
        %v6842 = vadd.f32 %v6810, %v469
        %v6843 = vadd.f32 %v6811, %v470
        %v6844 = vadd.f32 %v6812, %v471
        %v6845 = vadd.f32 %v6813, %v472
        %v6846 = vadd.f32 %v6814, %v473
        %v6847 = vadd.f32 %v6815, %v474
        %v6848 = vadd.f32 %v6816, %v475
        %v6849 = vadd.f32 %v6817, %v476
        %v6850 = vadd.f32 %v6818, %v477
        %v6851 = vadd.f32 %v6819, %v478
        %v6852 = vadd.f32 %v6820, %v479
        %v6853 = vadd.f32 %v6821, %v480
        %v6854 = vadd.f32 %v6822, %v481
        %v6855 = vadd.f32 %v6823, %v482
        %6856 = vst.msk [vmem:[%s325] sm:$0xff] %vm338, %v6824
        %6857 = vst.msk [vmem:[%s325 + $0x8] sm:$0xff] %vm338, %v6825
        %6858 = vst.msk [vmem:[%s325 + $0x10] sm:$0xff] %vm338, %v6826
        %6859 = vst.msk [vmem:[%s325 + $0x18] sm:$0xff] %vm338, %v6827
        %6860 = vst.msk [vmem:[%s325 + $0x20] sm:$0xff] %vm338, %v6828
        %6861 = vst.msk [vmem:[%s325 + $0x28] sm:$0xff] %vm338, %v6829
        %6862 = vst.msk [vmem:[%s325 + $0x30] sm:$0xff] %vm338, %v6830
        %6863 = vst.msk [vmem:[%s325 + $0x38] sm:$0xff] %vm338, %v6831
        %6864 = vst.msk [vmem:[%s325 + $0x40] sm:$0xff] %vm338, %v6832
        %6865 = vst.msk [vmem:[%s325 + $0x48] sm:$0xff] %vm338, %v6833
        %6866 = vst.msk [vmem:[%s325 + $0x50] sm:$0xff] %vm338, %v6834
        %6867 = vst.msk [vmem:[%s325 + $0x58] sm:$0xff] %vm338, %v6835
        %6868 = vst.msk [vmem:[%s325 + $0x60] sm:$0xff] %vm338, %v6836
        %6869 = vst.msk [vmem:[%s325 + $0x68] sm:$0xff] %vm338, %v6837
        %6870 = vst.msk [vmem:[%s325 + $0x70] sm:$0xff] %vm338, %v6838
        %6871 = vst.msk [vmem:[%s325 + $0x78] sm:$0xff] %vm338, %v6839
        %6872 = vst.msk [vmem:[%s325 + $0x80] sm:$0xff] %vm338, %v6840
        %6873 = vst.msk [vmem:[%s325 + $0x88] sm:$0xff] %vm338, %v6841
        %6874 = vst.msk [vmem:[%s325 + $0x90] sm:$0xff] %vm338, %v6842
        %6875 = vst.msk [vmem:[%s325 + $0x98] sm:$0xff] %vm338, %v6843
        %6876 = vst.msk [vmem:[%s325 + $0xa0] sm:$0xff] %vm338, %v6844
        %6877 = vst.msk [vmem:[%s325 + $0xa8] sm:$0xff] %vm338, %v6845
        %6878 = vst.msk [vmem:[%s325 + $0xb0] sm:$0xff] %vm338, %v6846
        %6879 = vst.msk [vmem:[%s325 + $0xb8] sm:$0xff] %vm338, %v6847
        %6880 = vst.msk [vmem:[%s325 + $0xc0] sm:$0xff] %vm338, %v6848
        %6881 = vst.msk [vmem:[%s325 + $0xc8] sm:$0xff] %vm338, %v6849
        %6882 = vst.msk [vmem:[%s325 + $0xd0] sm:$0xff] %vm338, %v6850
        %6883 = vst.msk [vmem:[%s325 + $0xd8] sm:$0xff] %vm338, %v6851
        %6884 = vst.msk [vmem:[%s325 + $0xe0] sm:$0xff] %vm338, %v6852
        %6885 = vst.msk [vmem:[%s325 + $0xe8] sm:$0xff] %vm338, %v6853
        %6886 = vst.msk [vmem:[%s325 + $0xf0] sm:$0xff] %vm338, %v6854
        %6887 = vst.msk [vmem:[%s325 + $0xf8] sm:$0xff] %vm338, %v6855
        %s6888 = sand.u32 %s225, 1
        %s6889 = scalar_lea.sflag [#allocation5], %s6888
        %s6890 = sand.u32 %s225, 1
        %s6891 = smul.addr %s6890, 256
        %s6892 = scalar_lea.vmem [#allocation4], %s6891
        // Predicated region
        $region57: #{residual_block_forward.1} parent=55 // pred_check
          %p6893 = pneg %p235
        $region58: #{residual_block_forward.1} parent=55 // pred_check_branch
          %6895 = sbr.rel (%p6893) target = $region60
        $region59: #{residual_block_forward.1} parent=55 // pred_region
          %s6897 = ssub.s32 4096, 4096
          %6898 = vsyncadd %s6889, %s6897
          %s6899 = smul.addr %s23, 32
          %s6900 = smul.addr %s6899, 128
          %s6901 = scalar_lea.hbm %s9, %s6900
          %s6902 = sshll.u32 %s6892, 4
          %s6903 = int_to_ptr.vmem [resolvable:$true] %s6902
          %6908 = dma.vmem_to_hbm [thread:$0]  %s6903, 4096, %s6901, %s6889, 128, 128, 8
        $region60: #{residual_block_forward.1} parent=55 // pred_fallthru
          _
      $region56: #{residual_block_forward.1} parent=5 // pred_fallthru
        _
      %p6909 = scmp.le.s32.totalorder 2, %s18
      // Predicated region
      $region61: #{residual_block_forward.1} parent=5 // pred_check
        %p6910 = pneg %p6909
      $region62: #{residual_block_forward.1} parent=5 // pred_check_branch
        %6912 = sbr.rel (%p6910) target = $region64
      $region63: #{residual_block_forward.1} parent=5 // pred_region
        %s6913 = ssub.s32 %s18, 2
        // Predicated region
        $region65: #{residual_block_forward.1} parent=63 // pred_check
          %p6914 = pneg %p241
        $region66: #{residual_block_forward.1} parent=63 // pred_check_branch
          %6916 = sbr.rel (%p6914) target = $region68
        $region67: #{residual_block_forward.1} parent=63 // pred_region
          %s6917 = sand.u32 %s226, 1
          %s6918 = scalar_lea.sflag [#allocation5], %s6917
          %s6919 = sand.u32 %s226, 1
          %s6920 = smul.addr %s6919, 256
          %s6921 = scalar_lea.vmem [#allocation4], %s6920
          %6922 = dma.done %s6918, 4096
        $region68: #{residual_block_forward.1} parent=63 // pred_fallthru
          _
      $region64: #{residual_block_forward.1} parent=5 // pred_fallthru
        _
    $region6: #{residual_block_forward.1} parent=1 // loop_footer
      %s22 = sadd.s32 1, %s18
    $region7: #{residual_block_forward.1} parent=1 // loop_footer_branch
      %17 = sbr.rel target = $region3
    $region8: #{residual_block_forward.1} parent=1 // loop_exit
      _
    %6923 = vsyncpa [#allocation5], 1
    %s6924 = scalar_lea.sflag [#allocation5], 1
    %6925 = vsyncpa %s6924, 1

</llo_original>
